<compile_context>
chip_gen: v5e
topology: v5e:2x2
jax: 0.10.0
libtpu: 0.0.40
codegen_flags: <defaults>
</compile_context>

<pallas_src>
import functools

import jax
import jax.numpy as jnp
from jax.experimental import pallas as pl
from jax.experimental.pallas import tpu as pltpu


_OFF = 8  # sublane-aligned row offset of the real data inside the padded conv buffers


# -----------------------------------------------------------------------------
# Fused kernel.  grid = (n_chunks,) over fc1 weight chunks ("arbitrary" axis):
#   step 0      : conv1/bn1/relu -> conv2/bn2/relu -> conv3/bn3/relu into
#                 persistent VMEM scratch, zero the fc1 accumulator.
#   every step  : accumulate one streamed fc1 weight chunk.
#   last step   : +bias, ReLU, fc2, write logits.
# -----------------------------------------------------------------------------
def _fused_kernel(x_ref,
                  wc1_ref, s1_ref, t1_ref,
                  wc2_ref, s2_ref, t2_ref,
                  wc3_ref, s3_ref, t3_ref,
                  w1c_ref, b1_ref, w2_ref, b2_ref,
                  out_ref,
                  buf0, buf1, buf2, h3f, acc,
                  *, B, L, F, n_chunks, chunk_k):
    i = pl.program_id(0)

    def conv_mxu(buf, w_ref, s_ref, t_ref):
        """Conv1d(k=3, pad=1) as three per-tap bf16 MXU dots + folded BN + ReLU."""
        c_in = buf.shape[2]

        def tap(k, lo):
            win = buf[:, lo:lo + L, :].reshape(B * L, c_in).astype(jnp.bfloat16)
            return jnp.dot(win, w_ref[k], preferred_element_type=jnp.float32)

        y = tap(0, _OFF - 1) + tap(1, _OFF) + tap(2, _OFF + 1)     # (B*L, cout) f32
        return jnp.maximum(y * s_ref[...] + t_ref[...], 0.0)

    # ---------------- step 0: the whole conv stack (stays VMEM-resident) -----
    @pl.when(i == 0)
    def _():
        # Stage the input with in-kernel zero length padding ("same" conv).
        buf0[...] = jnp.zeros(buf0.shape, buf0.dtype)
        buf0[:, _OFF:_OFF + L, :] = x_ref[...]

        # conv1 on the VPU: Cin is tiny, a K-padded MXU dot would be >97% zeros.
        wk1 = wc1_ref[...]                                          # (3, F, c1)
        c1 = wk1.shape[2]
        y1 = jnp.zeros((B, L, c1), jnp.float32)
        for k, lo in ((0, _OFF - 1), (1, _OFF), (2, _OFF + 1)):
            win = buf0[:, lo:lo + L, :]                             # (B, L, F)
            for ci in range(F):
                y1 = y1 + win[:, :, ci:ci + 1] * wk1[k, ci:ci + 1]  # (B,L,1)*(1,c1)
        y1 = jnp.maximum(y1 * s1_ref[...] + t1_ref[...], 0.0)       # (B, L, c1)

        buf1[...] = jnp.zeros(buf1.shape, buf1.dtype)
        buf1[:, _OFF:_OFF + L, :] = y1

        # conv2 + bn2 + relu (MXU, bf16).
        y2 = conv_mxu(buf1, wc2_ref, s2_ref, t2_ref)                # (B*L, c2)
        buf2[...] = jnp.zeros(buf2.shape, buf2.dtype)
        buf2[:, _OFF:_OFF + L, :] = y2.reshape(B, L, buf2.shape[2])

        # conv3 + bn3 + relu (MXU, bf16).
        y3 = conv_mxu(buf2, wc3_ref, s3_ref, t3_ref)                # (B*L, 256)
        c3 = y3.shape[1]
        y3 = y3.reshape(B, L, c3).astype(jnp.bfloat16)              # (B, L, 256)

        # Scatter into the fc1 activation scratch laid out as (chunk, B, chunk_k)
        # with flat K index l*256 + c.  Together with the fc1 weight permutation
        # done in prepare_params this matches PyTorch's channel-major flatten.
        lpc = L // n_chunks                    # l-positions per fc1 chunk
        for l in range(L):
            n, off = l // lpc, (l % lpc) * c3
            h3f[n, :, off:off + c3] = y3[:, l, :]

        acc[...] = jnp.zeros(acc.shape, acc.dtype)

    # -------- every step: one streamed fc1 weight chunk, single contraction ---
    acc[...] = acc[...] + jnp.dot(h3f[i], w1c_ref[...],
                                  preferred_element_type=jnp.float32)

    # -------- last step: bias + ReLU + fc2 (Dropout is identity at inference) --
    @pl.when(i == n_chunks - 1)
    def _():
        h = jnp.maximum(acc[...] + b1_ref[...], 0.0).astype(jnp.bfloat16)
        out_ref[...] = (jnp.dot(h, w2_ref[...], preferred_element_type=jnp.float32)
                        + b2_ref[...])


def _fused_forward(x, kp, n_chunks):
    B, L, F = x.shape
    c1p = kp["s1"].shape[1]
    c2p = kp["s2"].shape[1]
    ncp = kp["b2"].shape[1]
    lp = L + 2 * _OFF
    k_total, n1 = kp["w1"].shape
    chunk_k = k_total // n_chunks

    c3d = lambda i: (0, 0, 0)
    c2d = lambda i: (0, 0)

    kernel = functools.partial(_fused_kernel, B=B, L=L, F=F,
                               n_chunks=n_chunks, chunk_k=chunk_k)

    grid_spec = pltpu.PrefetchScalarGridSpec(
        num_scalar_prefetch=0,
        grid=(n_chunks,),
        in_specs=[
            pl.BlockSpec(x.shape, c3d),                 # input (B, L, F)
            pl.BlockSpec(kp["wc1"].shape, c3d),         # conv1 taps (f32, tiny)
            pl.BlockSpec(kp["s1"].shape, c2d),
            pl.BlockSpec(kp["t1"].shape, c2d),
            pl.BlockSpec(kp["wc2"].shape, c3d),         # conv2 taps (bf16)
            pl.BlockSpec(kp["s2"].shape, c2d),
            pl.BlockSpec(kp["t2"].shape, c2d),
            pl.BlockSpec(kp["wc3"].shape, c3d),         # conv3 taps (bf16)
            pl.BlockSpec(kp["s3"].shape, c2d),
            pl.BlockSpec(kp["t3"].shape, c2d),
            pl.BlockSpec((chunk_k, n1), lambda i: (i, 0)),  # streamed fc1 chunk
            pl.BlockSpec(kp["b1"].shape, c2d),
            pl.BlockSpec(kp["w2"].shape, c2d),          # fc2 weight (bf16)
            pl.BlockSpec(kp["b2"].shape, c2d),
        ],
        out_specs=pl.BlockSpec((B, ncp), c2d),
        scratch_shapes=[
            pltpu.VMEM((B, lp, F), jnp.float32),                # padded input
            pltpu.VMEM((B, lp, c1p), jnp.float32),              # padded conv1 out
            pltpu.VMEM((B, lp, c2p), jnp.float32),              # padded conv2 out
            pltpu.VMEM((n_chunks, B, chunk_k), jnp.bfloat16),   # fc1 activation
            pltpu.VMEM((B, n1), jnp.float32),                   # fc1 accumulator
        ],
    )
    return pl.pallas_call(
        kernel,
        out_shape=jax.ShapeDtypeStruct((B, ncp), jnp.float32),
        grid_spec=grid_spec,
        compiler_params=pltpu.CompilerParams(
            dimension_semantics=("arbitrary",),
            vmem_limit_bytes=32 * 1024 * 1024),
    )(x, kp["wc1"], kp["s1"], kp["t1"],
      kp["wc2"], kp["s2"], kp["t2"],
      kp["wc3"], kp["s3"], kp["t3"],
      kp["w1"], kp["b1"], kp["w2"], kp["b2"])


@functools.partial(jax.jit, static_argnames=("num_classes",))
def deep_wifi_cnn_forward(x, kparams, num_classes):
    """x: (B, num_ap, num_features) — same input convention as the PyTorch module."""
    L = x.shape[1]
    k_total = kparams["w1"].shape[0]            # 256 * num_ap
    n_chunks = 1
    for n in (4, 2):                            # chunk the fc1 weight stream
        if L % n == 0 and (k_total // n) % 128 == 0:
            n_chunks = n
            break
    out = _fused_forward(x.astype(jnp.float32), kparams, n_chunks)
    return out[:, :num_classes]


# -----------------------------------------------------------------------------
# Parameters: PyTorch-layout synthetic params + one-time conversion to the
# folded / permuted / bf16 layout the kernel consumes.
# -----------------------------------------------------------------------------
def init_params(num_ap, num_features, num_classes, key):
    """Synthetic parameters in PyTorch layouts (BatchNorm in eval mode)."""
    ks = jax.random.split(key, 10)

    def conv(kw, kb, cin, cout):
        return {
            "w": 0.05 * jax.random.normal(kw, (cout, cin, 3), jnp.float32),
            "b": 0.05 * jax.random.normal(kb, (cout,), jnp.float32),
            "gamma": jnp.ones((cout,), jnp.float32),
            "beta": jnp.zeros((cout,), jnp.float32),
            "mean": jnp.zeros((cout,), jnp.float32),
            "var": jnp.ones((cout,), jnp.float32),
        }

    return {
        "conv1": conv(ks[0], ks[1], num_features, 64),
        "conv2": conv(ks[2], ks[3], 64, 128),
        "conv3": conv(ks[4], ks[5], 128, 256),
        "fc1_w": 0.02 * jax.random.normal(ks[6], (512, 256 * num_ap), jnp.float32),
        "fc1_b": 0.02 * jax.random.normal(ks[7], (512,), jnp.float32),
        "fc2_w": 0.02 * jax.random.normal(ks[8], (num_classes, 512), jnp.float32),
        "fc2_b": 0.02 * jax.random.normal(ks[9], (num_classes,), jnp.float32),
    }


def _round_up(v, m):
    return (v + m - 1) // m * m


def prepare_params(p, num_ap, num_features, num_classes, eps=1e-5):
    """Fold BN (eval mode), pad channels/classes, pre-permute fc1, cast to bf16."""
    def conv(cp, cin_pad, cout_pad, dtype):
        w, b = cp["w"], cp["b"]                      # torch layout (cout, cin, 3)
        cout, cin, _ = w.shape
        scale = cp["gamma"] / jnp.sqrt(cp["var"] + eps)
        shift = scale * (b - cp["mean"]) + cp["beta"]
        wk = jnp.transpose(w, (2, 1, 0))             # (3, cin, cout) per-tap weights
        wk = jnp.pad(wk, ((0, 0), (0, cin_pad - cin), (0, cout_pad - cout)))
        return (wk.astype(dtype),
                jnp.pad(scale, (0, cout_pad - cout)).reshape(1, cout_pad),
                jnp.pad(shift, (0, cout_pad - cout)).reshape(1, cout_pad))

    c1p, c2p, c3 = 128, 128, 256
    ncp = _round_up(num_classes, 128)

    kp = {}
    # conv1 runs on the VPU (tiny Cin): no input-channel padding, keep f32.
    kp["wc1"], kp["s1"], kp["t1"] = conv(p["conv1"], num_features, c1p, jnp.float32)
    # conv2 / conv3 run on the MXU in bf16 (native dtype, f32 accumulate).
    kp["wc2"], kp["s2"], kp["t2"] = conv(p["conv2"], c1p, c2p, jnp.bfloat16)
    kp["wc3"], kp["s3"], kp["t3"] = conv(p["conv3"], c2p, c3, jnp.bfloat16)

    # fc1: torch weight is (512, 256*L) with input index c*L + l (channel-major
    # flatten of the (256, L) activation).  Re-order ONCE to flat K index
    # l*256 + c so the kernel's channels-last conv3 activation contracts
    # directly; store bf16 (this is the dominant HBM weight stream).
    L = num_ap
    w1 = p["fc1_w"].reshape(512, c3, L)                       # [f, c, l]
    w1 = jnp.transpose(w1, (2, 1, 0)).reshape(L * c3, 512)    # row index = l*256 + c
    kp["w1"] = w1.astype(jnp.bfloat16)
    kp["b1"] = p["fc1_b"].reshape(1, 512).astype(jnp.float32)

    # fc2: pad classes to a lane-dense 128 (zero cols / zero bias); bf16 weight.
    w2 = jnp.transpose(p["fc2_w"], (1, 0))                    # (512, ncls)
    kp["w2"] = jnp.pad(w2, ((0, 0), (0, ncp - num_classes))).astype(jnp.bfloat16)
    kp["b2"] = jnp.pad(p["fc2_b"], (0, ncp - num_classes)).reshape(1, ncp)
    return kp


# -----------------------------------------------------------------------------
# Pure-JAX (XLA) reference of the PyTorch module, for a runtime cross-check.
# -----------------------------------------------------------------------------
def reference_forward(x, p, eps=1e-5):
    h = jnp.transpose(x, (0, 2, 1))                  # x.permute(0, 2, 1) -> (B, C, L)
    for name in ("conv1", "conv2", "conv3"):
        cp = p[name]
        h = jax.lax.conv_general_dilated(
            h, cp["w"], window_strides=(1,), padding=((1, 1),),
            dimension_numbers=("NCH", "OIH", "NCH"))
        h = h + cp["b"][None, :, None]
        scale = cp["gamma"] / jnp.sqrt(cp["var"] + eps)
        h = scale[None, :, None] * (h - cp["mean"][None, :, None]) + cp["beta"][None, :, None]
        h = jnp.maximum(h, 0.0)
    h = h.reshape(h.shape[0], -1)                    # channel-major flatten, like x.view(B, -1)
    h = jnp.maximum(h @ p["fc1_w"].T + p["fc1_b"], 0.0)
    return h @ p["fc2_w"].T + p["fc2_b"]             # Dropout is identity in eval mode


if __name__ == "__main__":
    B, num_ap, num_features, num_classes = 2, 16, 4, 5

    key = jax.random.PRNGKey(0)
    k_x, k_p = jax.random.split(key)
    x = jax.random.normal(k_x, (B, num_ap, num_features), jnp.float32)

    torch_params = init_params(num_ap, num_features, num_classes, k_p)
    kparams = prepare_params(torch_params, num_ap, num_features, num_classes)

    logits = deep_wifi_cnn_forward(x, kparams, num_classes=num_classes)
    logits = jax.block_until_ready(logits)
    assert logits.shape == (B, num_classes)
    assert logits.dtype == jnp.float32

    # Cross-check against the pure-XLA reference (bf16 weights/activations -> loose tol).
    ref = jax.block_until_ready(reference_forward(x, torch_params))
    rel_err = float(jnp.max(jnp.abs(logits - ref)) / (jnp.max(jnp.abs(ref)) + 1e-12))
    assert rel_err < 0.05, f"kernel/reference mismatch: rel_err={rel_err}"
    print("KERNEL_OK")
</pallas_src>

<mosaic_0001>
module attributes {stable_mosaic.version = 11 : i64} {
  func.func @_fused_kernel(%arg0: i32, %arg1: memref<2x16x4xf32, #tpu.memory_space<vmem>>, %arg2: memref<3x4x128xf32, #tpu.memory_space<vmem>>, %arg3: memref<1x128xf32, #tpu.memory_space<vmem>>, %arg4: memref<1x128xf32, #tpu.memory_space<vmem>>, %arg5: memref<3x128x128xbf16, #tpu.memory_space<vmem>>, %arg6: memref<1x128xf32, #tpu.memory_space<vmem>>, %arg7: memref<1x128xf32, #tpu.memory_space<vmem>>, %arg8: memref<3x128x256xbf16, #tpu.memory_space<vmem>>, %arg9: memref<1x256xf32, #tpu.memory_space<vmem>>, %arg10: memref<1x256xf32, #tpu.memory_space<vmem>>, %arg11: memref<1024x512xbf16, #tpu.memory_space<vmem>>, %arg12: memref<1x512xf32, #tpu.memory_space<vmem>>, %arg13: memref<512x128xbf16, #tpu.memory_space<vmem>>, %arg14: memref<1x128xf32, #tpu.memory_space<vmem>>, %arg15: memref<2x128xf32, #tpu.memory_space<vmem>>, %arg16: memref<2x32x4xf32, #tpu.memory_space<vmem>>, %arg17: memref<2x32x128xf32, #tpu.memory_space<vmem>>, %arg18: memref<2x32x128xf32, #tpu.memory_space<vmem>>, %arg19: memref<4x2x1024xbf16, #tpu.memory_space<vmem>>, %arg20: memref<2x512xf32, #tpu.memory_space<vmem>>) attributes {dimension_semantics = [#tpu.dimension_semantics<arbitrary>], iteration_bounds = array<i64: 4>, scalar_prefetch = 0 : i64, scratch_operands = 5 : i64, tpu.core_type = #tpu.core_type<tc>, window_params = [{pipeline_mode = #tpu.pipeline_mode<synchronous>, transform_indices = @transform_0, window_bounds = array<i64: 2, 16, 4>}, {pipeline_mode = #tpu.pipeline_mode<synchronous>, transform_indices = @transform_1, window_bounds = array<i64: 3, 4, 128>}, {pipeline_mode = #tpu.pipeline_mode<synchronous>, transform_indices = @transform_2, window_bounds = array<i64: 1, 128>}, {pipeline_mode = #tpu.pipeline_mode<synchronous>, transform_indices = @transform_3, window_bounds = array<i64: 1, 128>}, {pipeline_mode = #tpu.pipeline_mode<synchronous>, transform_indices = @transform_4, window_bounds = array<i64: 3, 128, 128>}, {pipeline_mode = #tpu.pipeline_mode<synchronous>, transform_indices = @transform_5, window_bounds = array<i64: 1, 128>}, {pipeline_mode = #tpu.pipeline_mode<synchronous>, transform_indices = @transform_6, window_bounds = array<i64: 1, 128>}, {pipeline_mode = #tpu.pipeline_mode<synchronous>, transform_indices = @transform_7, window_bounds = array<i64: 3, 128, 256>}, {pipeline_mode = #tpu.pipeline_mode<synchronous>, transform_indices = @transform_8, window_bounds = array<i64: 1, 256>}, {pipeline_mode = #tpu.pipeline_mode<synchronous>, transform_indices = @transform_9, window_bounds = array<i64: 1, 256>}, {transform_indices = @transform_10, window_bounds = array<i64: 1024, 512>}, {pipeline_mode = #tpu.pipeline_mode<synchronous>, transform_indices = @transform_11, window_bounds = array<i64: 1, 512>}, {pipeline_mode = #tpu.pipeline_mode<synchronous>, transform_indices = @transform_12, window_bounds = array<i64: 512, 128>}, {pipeline_mode = #tpu.pipeline_mode<synchronous>, transform_indices = @transform_13, window_bounds = array<i64: 1, 128>}, {pipeline_mode = #tpu.pipeline_mode<synchronous>, transform_indices = @transform_14, window_bounds = array<i64: 2, 128>}]} {
    %c0_i32 = arith.constant 0 : i32
    %0 = arith.cmpi eq, %arg0, %c0_i32 : i32
    %1 = arith.extui %0 : i1 to i32
    %c0_i32_0 = arith.constant 0 : i32
    %2 = arith.cmpi ne, %1, %c0_i32_0 : i32
    scf.if %2 {
      %cst_9 = arith.constant 0.000000e+00 : f32
      %14 = vector.broadcast %cst_9 : f32 to vector<2x32x4xf32>
      %c0_10 = arith.constant 0 : index
      %c0_11 = arith.constant 0 : index
      %c0_12 = arith.constant 0 : index
      %15 = vector.load %arg16[%c0_10, %c0_11, %c0_12] : memref<2x32x4xf32, #tpu.memory_space<vmem>>, vector<2x32x4xf32>
      tpu.vector_store %arg16[%c0_10, %c0_11, %c0_12], %14 {strides = array<i32>} : memref<2x32x4xf32, #tpu.memory_space<vmem>>, vector<2x32x4xf32>,
      %c0_13 = arith.constant 0 : index
      %c0_14 = arith.constant 0 : index
      %c0_15 = arith.constant 0 : index
      %16 = vector.load %arg1[%c0_13, %c0_14, %c0_15] : memref<2x16x4xf32, #tpu.memory_space<vmem>>, vector<2x16x4xf32>
      %c0_16 = arith.constant 0 : index
      %c8 = arith.constant 8 : index
      %c0_17 = arith.constant 0 : index
      %17 = vector.load %arg16[%c0_16, %c8, %c0_17] : memref<2x32x4xf32, #tpu.memory_space<vmem>>, vector<2x16x4xf32>
      tpu.vector_store %arg16[%c0_16, %c8, %c0_17], %16 {strides = array<i32>} : memref<2x32x4xf32, #tpu.memory_space<vmem>>, vector<2x16x4xf32>,
      %c0_18 = arith.constant 0 : index
      %c0_19 = arith.constant 0 : index
      %c0_20 = arith.constant 0 : index
      %18 = vector.load %arg2[%c0_18, %c0_19, %c0_20] : memref<3x4x128xf32, #tpu.memory_space<vmem>>, vector<3x4x128xf32>
      %cst_21 = arith.constant 0.000000e+00 : f32
      %19 = vector.broadcast %cst_21 : f32 to vector<2x16x128xf32>
      %c0_22 = arith.constant 0 : index
      %c7 = arith.constant 7 : index
      %c0_23 = arith.constant 0 : index
      %20 = vector.load %arg16[%c0_22, %c7, %c0_23] : memref<2x32x4xf32, #tpu.memory_space<vmem>>, vector<2x16x4xf32>
      %21 = vector.extract_strided_slice %20 {offsets = [0, 0, 0], sizes = [2, 16, 1], strides = [1, 1, 1]} : vector<2x16x4xf32> to vector<2x16x1xf32>
      %22 = vector.extract_strided_slice %18 {offsets = [0, 0, 0], sizes = [1, 1, 128], strides = [1, 1, 1]} : vector<3x4x128xf32> to vector<1x1x128xf32>
      %23 = vector.shape_cast %22 : vector<1x1x128xf32> to vector<1x128xf32>
      %24 = vector.shape_cast %23 : vector<1x128xf32> to vector<1x1x128xf32>
      %25 = vector.broadcast %21 : vector<2x16x1xf32> to vector<2x16x128xf32>
      %26 = vector.broadcast %24 : vector<1x1x128xf32> to vector<2x16x128xf32>
      %27 = arith.mulf %25, %26 : vector<2x16x128xf32>
      %28 = arith.addf %19, %27 : vector<2x16x128xf32>
      %29 = vector.extract_strided_slice %20 {offsets = [0, 0, 1], sizes = [2, 16, 1], strides = [1, 1, 1]} : vector<2x16x4xf32> to vector<2x16x1xf32>
      %30 = vector.extract_strided_slice %18 {offsets = [0, 1, 0], sizes = [1, 1, 128], strides = [1, 1, 1]} : vector<3x4x128xf32> to vector<1x1x128xf32>
      %31 = vector.shape_cast %30 : vector<1x1x128xf32> to vector<1x128xf32>
      %32 = vector.shape_cast %31 : vector<1x128xf32> to vector<1x1x128xf32>
      %33 = vector.broadcast %29 : vector<2x16x1xf32> to vector<2x16x128xf32>
      %34 = vector.broadcast %32 : vector<1x1x128xf32> to vector<2x16x128xf32>
      %35 = arith.mulf %33, %34 : vector<2x16x128xf32>
      %36 = arith.addf %28, %35 : vector<2x16x128xf32>
      %37 = vector.extract_strided_slice %20 {offsets = [0, 0, 2], sizes = [2, 16, 1], strides = [1, 1, 1]} : vector<2x16x4xf32> to vector<2x16x1xf32>
      %38 = vector.extract_strided_slice %18 {offsets = [0, 2, 0], sizes = [1, 1, 128], strides = [1, 1, 1]} : vector<3x4x128xf32> to vector<1x1x128xf32>
      %39 = vector.shape_cast %38 : vector<1x1x128xf32> to vector<1x128xf32>
      %40 = vector.shape_cast %39 : vector<1x128xf32> to vector<1x1x128xf32>
      %41 = vector.broadcast %37 : vector<2x16x1xf32> to vector<2x16x128xf32>
      %42 = vector.broadcast %40 : vector<1x1x128xf32> to vector<2x16x128xf32>
      %43 = arith.mulf %41, %42 : vector<2x16x128xf32>
      %44 = arith.addf %36, %43 : vector<2x16x128xf32>
      %45 = vector.extract_strided_slice %20 {offsets = [0, 0, 3], sizes = [2, 16, 1], strides = [1, 1, 1]} : vector<2x16x4xf32> to vector<2x16x1xf32>
      %46 = vector.extract_strided_slice %18 {offsets = [0, 3, 0], sizes = [1, 1, 128], strides = [1, 1, 1]} : vector<3x4x128xf32> to vector<1x1x128xf32>
      %47 = vector.shape_cast %46 : vector<1x1x128xf32> to vector<1x128xf32>
      %48 = vector.shape_cast %47 : vector<1x128xf32> to vector<1x1x128xf32>
      %49 = vector.broadcast %45 : vector<2x16x1xf32> to vector<2x16x128xf32>
      %50 = vector.broadcast %48 : vector<1x1x128xf32> to vector<2x16x128xf32>
      %51 = arith.mulf %49, %50 : vector<2x16x128xf32>
      %52 = arith.addf %44, %51 : vector<2x16x128xf32>
      %c0_24 = arith.constant 0 : index
      %c8_25 = arith.constant 8 : index
      %c0_26 = arith.constant 0 : index
      %53 = vector.load %arg16[%c0_24, %c8_25, %c0_26] : memref<2x32x4xf32, #tpu.memory_space<vmem>>, vector<2x16x4xf32>
      %54 = vector.extract_strided_slice %53 {offsets = [0, 0, 0], sizes = [2, 16, 1], strides = [1, 1, 1]} : vector<2x16x4xf32> to vector<2x16x1xf32>
      %55 = vector.extract_strided_slice %18 {offsets = [1, 0, 0], sizes = [1, 1, 128], strides = [1, 1, 1]} : vector<3x4x128xf32> to vector<1x1x128xf32>
      %56 = vector.shape_cast %55 : vector<1x1x128xf32> to vector<1x128xf32>
      %57 = vector.shape_cast %56 : vector<1x128xf32> to vector<1x1x128xf32>
      %58 = vector.broadcast %54 : vector<2x16x1xf32> to vector<2x16x128xf32>
      %59 = vector.broadcast %57 : vector<1x1x128xf32> to vector<2x16x128xf32>
      %60 = arith.mulf %58, %59 : vector<2x16x128xf32>
      %61 = arith.addf %52, %60 : vector<2x16x128xf32>
      %62 = vector.extract_strided_slice %53 {offsets = [0, 0, 1], sizes = [2, 16, 1], strides = [1, 1, 1]} : vector<2x16x4xf32> to vector<2x16x1xf32>
      %63 = vector.extract_strided_slice %18 {offsets = [1, 1, 0], sizes = [1, 1, 128], strides = [1, 1, 1]} : vector<3x4x128xf32> to vector<1x1x128xf32>
      %64 = vector.shape_cast %63 : vector<1x1x128xf32> to vector<1x128xf32>
      %65 = vector.shape_cast %64 : vector<1x128xf32> to vector<1x1x128xf32>
      %66 = vector.broadcast %62 : vector<2x16x1xf32> to vector<2x16x128xf32>
      %67 = vector.broadcast %65 : vector<1x1x128xf32> to vector<2x16x128xf32>
      %68 = arith.mulf %66, %67 : vector<2x16x128xf32>
      %69 = arith.addf %61, %68 : vector<2x16x128xf32>
      %70 = vector.extract_strided_slice %53 {offsets = [0, 0, 2], sizes = [2, 16, 1], strides = [1, 1, 1]} : vector<2x16x4xf32> to vector<2x16x1xf32>
      %71 = vector.extract_strided_slice %18 {offsets = [1, 2, 0], sizes = [1, 1, 128], strides = [1, 1, 1]} : vector<3x4x128xf32> to vector<1x1x128xf32>
      %72 = vector.shape_cast %71 : vector<1x1x128xf32> to vector<1x128xf32>
      %73 = vector.shape_cast %72 : vector<1x128xf32> to vector<1x1x128xf32>
      %74 = vector.broadcast %70 : vector<2x16x1xf32> to vector<2x16x128xf32>
      %75 = vector.broadcast %73 : vector<1x1x128xf32> to vector<2x16x128xf32>
      %76 = arith.mulf %74, %75 : vector<2x16x128xf32>
      %77 = arith.addf %69, %76 : vector<2x16x128xf32>
      %78 = vector.extract_strided_slice %53 {offsets = [0, 0, 3], sizes = [2, 16, 1], strides = [1, 1, 1]} : vector<2x16x4xf32> to vector<2x16x1xf32>
      %79 = vector.extract_strided_slice %18 {offsets = [1, 3, 0], sizes = [1, 1, 128], strides = [1, 1, 1]} : vector<3x4x128xf32> to vector<1x1x128xf32>
      %80 = vector.shape_cast %79 : vector<1x1x128xf32> to vector<1x128xf32>
      %81 = vector.shape_cast %80 : vector<1x128xf32> to vector<1x1x128xf32>
      %82 = vector.broadcast %78 : vector<2x16x1xf32> to vector<2x16x128xf32>
      %83 = vector.broadcast %81 : vector<1x1x128xf32> to vector<2x16x128xf32>
      %84 = arith.mulf %82, %83 : vector<2x16x128xf32>
      %85 = arith.addf %77, %84 : vector<2x16x128xf32>
      %c0_27 = arith.constant 0 : index
      %c9 = arith.constant 9 : index
      %c0_28 = arith.constant 0 : index
      %86 = vector.load %arg16[%c0_27, %c9, %c0_28] : memref<2x32x4xf32, #tpu.memory_space<vmem>>, vector<2x16x4xf32>
      %87 = vector.extract_strided_slice %86 {offsets = [0, 0, 0], sizes = [2, 16, 1], strides = [1, 1, 1]} : vector<2x16x4xf32> to vector<2x16x1xf32>
      %88 = vector.extract_strided_slice %18 {offsets = [2, 0, 0], sizes = [1, 1, 128], strides = [1, 1, 1]} : vector<3x4x128xf32> to vector<1x1x128xf32>
      %89 = vector.shape_cast %88 : vector<1x1x128xf32> to vector<1x128xf32>
      %90 = vector.shape_cast %89 : vector<1x128xf32> to vector<1x1x128xf32>
      %91 = vector.broadcast %87 : vector<2x16x1xf32> to vector<2x16x128xf32>
      %92 = vector.broadcast %90 : vector<1x1x128xf32> to vector<2x16x128xf32>
      %93 = arith.mulf %91, %92 : vector<2x16x128xf32>
      %94 = arith.addf %85, %93 : vector<2x16x128xf32>
      %95 = vector.extract_strided_slice %86 {offsets = [0, 0, 1], sizes = [2, 16, 1], strides = [1, 1, 1]} : vector<2x16x4xf32> to vector<2x16x1xf32>
      %96 = vector.extract_strided_slice %18 {offsets = [2, 1, 0], sizes = [1, 1, 128], strides = [1, 1, 1]} : vector<3x4x128xf32> to vector<1x1x128xf32>
      %97 = vector.shape_cast %96 : vector<1x1x128xf32> to vector<1x128xf32>
      %98 = vector.shape_cast %97 : vector<1x128xf32> to vector<1x1x128xf32>
      %99 = vector.broadcast %95 : vector<2x16x1xf32> to vector<2x16x128xf32>
      %100 = vector.broadcast %98 : vector<1x1x128xf32> to vector<2x16x128xf32>
      %101 = arith.mulf %99, %100 : vector<2x16x128xf32>
      %102 = arith.addf %94, %101 : vector<2x16x128xf32>
      %103 = vector.extract_strided_slice %86 {offsets = [0, 0, 2], sizes = [2, 16, 1], strides = [1, 1, 1]} : vector<2x16x4xf32> to vector<2x16x1xf32>
      %104 = vector.extract_strided_slice %18 {offsets = [2, 2, 0], sizes = [1, 1, 128], strides = [1, 1, 1]} : vector<3x4x128xf32> to vector<1x1x128xf32>
      %105 = vector.shape_cast %104 : vector<1x1x128xf32> to vector<1x128xf32>
      %106 = vector.shape_cast %105 : vector<1x128xf32> to vector<1x1x128xf32>
      %107 = vector.broadcast %103 : vector<2x16x1xf32> to vector<2x16x128xf32>
      %108 = vector.broadcast %106 : vector<1x1x128xf32> to vector<2x16x128xf32>
      %109 = arith.mulf %107, %108 : vector<2x16x128xf32>
      %110 = arith.addf %102, %109 : vector<2x16x128xf32>
      %111 = vector.extract_strided_slice %86 {offsets = [0, 0, 3], sizes = [2, 16, 1], strides = [1, 1, 1]} : vector<2x16x4xf32> to vector<2x16x1xf32>
      %112 = vector.extract_strided_slice %18 {offsets = [2, 3, 0], sizes = [1, 1, 128], strides = [1, 1, 1]} : vector<3x4x128xf32> to vector<1x1x128xf32>
      %113 = vector.shape_cast %112 : vector<1x1x128xf32> to vector<1x128xf32>
      %114 = vector.shape_cast %113 : vector<1x128xf32> to vector<1x1x128xf32>
      %115 = vector.broadcast %111 : vector<2x16x1xf32> to vector<2x16x128xf32>
      %116 = vector.broadcast %114 : vector<1x1x128xf32> to vector<2x16x128xf32>
      %117 = arith.mulf %115, %116 : vector<2x16x128xf32>
      %118 = arith.addf %110, %117 : vector<2x16x128xf32>
      %c0_29 = arith.constant 0 : index
      %c0_30 = arith.constant 0 : index
      %119 = vector.load %arg3[%c0_29, %c0_30] : memref<1x128xf32, #tpu.memory_space<vmem>>, vector<1x128xf32>
      %120 = vector.shape_cast %119 : vector<1x128xf32> to vector<1x1x128xf32>
      %121 = vector.broadcast %120 : vector<1x1x128xf32> to vector<2x16x128xf32>
      %122 = arith.mulf %118, %121 : vector<2x16x128xf32>
      %c0_31 = arith.constant 0 : index
      %c0_32 = arith.constant 0 : index
      %123 = vector.load %arg4[%c0_31, %c0_32] : memref<1x128xf32, #tpu.memory_space<vmem>>, vector<1x128xf32>
      %124 = vector.shape_cast %123 : vector<1x128xf32> to vector<1x1x128xf32>
      %125 = vector.broadcast %124 : vector<1x1x128xf32> to vector<2x16x128xf32>
      %126 = arith.addf %122, %125 : vector<2x16x128xf32>
      %cst_33 = arith.constant 0.000000e+00 : f32
      %127 = vector.broadcast %cst_33 : f32 to vector<2x16x128xf32>
      %128 = arith.maximumf %126, %127 : vector<2x16x128xf32>
      %cst_34 = arith.constant 0.000000e+00 : f32
      %129 = vector.broadcast %cst_34 : f32 to vector<2x32x128xf32>
      %c0_35 = arith.constant 0 : index
      %c0_36 = arith.constant 0 : index
      %c0_37 = arith.constant 0 : index
      %130 = vector.load %arg17[%c0_35, %c0_36, %c0_37] : memref<2x32x128xf32, #tpu.memory_space<vmem>>, vector<2x32x128xf32>
      tpu.vector_store %arg17[%c0_35, %c0_36, %c0_37], %129 {strides = array<i32>} : memref<2x32x128xf32, #tpu.memory_space<vmem>>, vector<2x32x128xf32>,
      %c0_38 = arith.constant 0 : index
      %c8_39 = arith.constant 8 : index
      %c0_40 = arith.constant 0 : index
      %131 = vector.load %arg17[%c0_38, %c8_39, %c0_40] : memref<2x32x128xf32, #tpu.memory_space<vmem>>, vector<2x16x128xf32>
      tpu.vector_store %arg17[%c0_38, %c8_39, %c0_40], %128 {strides = array<i32>} : memref<2x32x128xf32, #tpu.memory_space<vmem>>, vector<2x16x128xf32>,
      %c0_41 = arith.constant 0 : index
      %c7_42 = arith.constant 7 : index
      %c0_43 = arith.constant 0 : index
      %132 = vector.load %arg17[%c0_41, %c7_42, %c0_43] : memref<2x32x128xf32, #tpu.memory_space<vmem>>, vector<2x16x128xf32>
      %133 = vector.shape_cast %132 : vector<2x16x128xf32> to vector<32x128xf32>
      %134 = arith.truncf %133 : vector<32x128xf32> to vector<32x128xbf16>
      %c0_44 = arith.constant 0 : index
      %c0_45 = arith.constant 0 : index
      %c0_46 = arith.constant 0 : index
      %135 = vector.load %arg5[%c0_44, %c0_45, %c0_46] : memref<3x128x128xbf16, #tpu.memory_space<vmem>>, vector<1x128x128xbf16>
      %136 = vector.shape_cast %135 : vector<1x128x128xbf16> to vector<128x128xbf16>
      %cst_47 = arith.constant dense<0.000000e+00> : vector<32x128xf32>
      %137 = tpu.matmul %134, %136, %cst_47 {dimension_numbers = #tpu.dot_dimension_numbers<[1], [0], [0], [1], [0, 0, 1, 1], [], []>} : vector<32x128xbf16>, vector<128x128xbf16>, vector<32x128xf32> -> vector<32x128xf32>
      %c0_48 = arith.constant 0 : index
      %c8_49 = arith.constant 8 : index
      %c0_50 = arith.constant 0 : index
      %138 = vector.load %arg17[%c0_48, %c8_49, %c0_50] : memref<2x32x128xf32, #tpu.memory_space<vmem>>, vector<2x16x128xf32>
      %139 = vector.shape_cast %138 : vector<2x16x128xf32> to vector<32x128xf32>
      %140 = arith.truncf %139 : vector<32x128xf32> to vector<32x128xbf16>
      %c1 = arith.constant 1 : index
      %c0_51 = arith.constant 0 : index
      %c0_52 = arith.constant 0 : index
      %141 = vector.load %arg5[%c1, %c0_51, %c0_52] : memref<3x128x128xbf16, #tpu.memory_space<vmem>>, vector<1x128x128xbf16>
      %142 = vector.shape_cast %141 : vector<1x128x128xbf16> to vector<128x128xbf16>
      %cst_53 = arith.constant dense<0.000000e+00> : vector<32x128xf32>
      %143 = tpu.matmul %140, %142, %cst_53 {dimension_numbers = #tpu.dot_dimension_numbers<[1], [0], [0], [1], [0, 0, 1, 1], [], []>} : vector<32x128xbf16>, vector<128x128xbf16>, vector<32x128xf32> -> vector<32x128xf32>
      %144 = arith.addf %137, %143 : vector<32x128xf32>
      %c0_54 = arith.constant 0 : index
      %c9_55 = arith.constant 9 : index
      %c0_56 = arith.constant 0 : index
      %145 = vector.load %arg17[%c0_54, %c9_55, %c0_56] : memref<2x32x128xf32, #tpu.memory_space<vmem>>, vector<2x16x128xf32>
      %146 = vector.shape_cast %145 : vector<2x16x128xf32> to vector<32x128xf32>
      %147 = arith.truncf %146 : vector<32x128xf32> to vector<32x128xbf16>
      %c2 = arith.constant 2 : index
      %c0_57 = arith.constant 0 : index
      %c0_58 = arith.constant 0 : index
      %148 = vector.load %arg5[%c2, %c0_57, %c0_58] : memref<3x128x128xbf16, #tpu.memory_space<vmem>>, vector<1x128x128xbf16>
      %149 = vector.shape_cast %148 : vector<1x128x128xbf16> to vector<128x128xbf16>
      %cst_59 = arith.constant dense<0.000000e+00> : vector<32x128xf32>
      %150 = tpu.matmul %147, %149, %cst_59 {dimension_numbers = #tpu.dot_dimension_numbers<[1], [0], [0], [1], [0, 0, 1, 1], [], []>} : vector<32x128xbf16>, vector<128x128xbf16>, vector<32x128xf32> -> vector<32x128xf32>
      %151 = arith.addf %144, %150 : vector<32x128xf32>
      %c0_60 = arith.constant 0 : index
      %c0_61 = arith.constant 0 : index
      %152 = vector.load %arg6[%c0_60, %c0_61] : memref<1x128xf32, #tpu.memory_space<vmem>>, vector<1x128xf32>
      %153 = vector.broadcast %152 : vector<1x128xf32> to vector<32x128xf32>
      %154 = arith.mulf %151, %153 : vector<32x128xf32>
      %c0_62 = arith.constant 0 : index
      %c0_63 = arith.constant 0 : index
      %155 = vector.load %arg7[%c0_62, %c0_63] : memref<1x128xf32, #tpu.memory_space<vmem>>, vector<1x128xf32>
      %156 = vector.broadcast %155 : vector<1x128xf32> to vector<32x128xf32>
      %157 = arith.addf %154, %156 : vector<32x128xf32>
      %cst_64 = arith.constant 0.000000e+00 : f32
      %158 = vector.broadcast %cst_64 : f32 to vector<32x128xf32>
      %159 = arith.maximumf %157, %158 : vector<32x128xf32>
      %cst_65 = arith.constant 0.000000e+00 : f32
      %160 = vector.broadcast %cst_65 : f32 to vector<2x32x128xf32>
      %c0_66 = arith.constant 0 : index
      %c0_67 = arith.constant 0 : index
      %c0_68 = arith.constant 0 : index
      %161 = vector.load %arg18[%c0_66, %c0_67, %c0_68] : memref<2x32x128xf32, #tpu.memory_space<vmem>>, vector<2x32x128xf32>
      tpu.vector_store %arg18[%c0_66, %c0_67, %c0_68], %160 {strides = array<i32>} : memref<2x32x128xf32, #tpu.memory_space<vmem>>, vector<2x32x128xf32>,
      %162 = vector.shape_cast %159 : vector<32x128xf32> to vector<2x16x128xf32>
      %c0_69 = arith.constant 0 : index
      %c8_70 = arith.constant 8 : index
      %c0_71 = arith.constant 0 : index
      %163 = vector.load %arg18[%c0_69, %c8_70, %c0_71] : memref<2x32x128xf32, #tpu.memory_space<vmem>>, vector<2x16x128xf32>
      tpu.vector_store %arg18[%c0_69, %c8_70, %c0_71], %162 {strides = array<i32>} : memref<2x32x128xf32, #tpu.memory_space<vmem>>, vector<2x16x128xf32>,
      %c0_72 = arith.constant 0 : index
      %c7_73 = arith.constant 7 : index
      %c0_74 = arith.constant 0 : index
      %164 = vector.load %arg18[%c0_72, %c7_73, %c0_74] : memref<2x32x128xf32, #tpu.memory_space<vmem>>, vector<2x16x128xf32>
      %165 = vector.shape_cast %164 : vector<2x16x128xf32> to vector<32x128xf32>
      %166 = arith.truncf %165 : vector<32x128xf32> to vector<32x128xbf16>
      %c0_75 = arith.constant 0 : index
      %c0_76 = arith.constant 0 : index
      %c0_77 = arith.constant 0 : index
      %167 = vector.load %arg8[%c0_75, %c0_76, %c0_77] : memref<3x128x256xbf16, #tpu.memory_space<vmem>>, vector<1x128x256xbf16>
      %168 = vector.shape_cast %167 : vector<1x128x256xbf16> to vector<128x256xbf16>
      %cst_78 = arith.constant dense<0.000000e+00> : vector<32x256xf32>
      %169 = tpu.matmul %166, %168, %cst_78 {dimension_numbers = #tpu.dot_dimension_numbers<[1], [0], [0], [1], [0, 0, 1, 1], [], []>} : vector<32x128xbf16>, vector<128x256xbf16>, vector<32x256xf32> -> vector<32x256xf32>
      %c0_79 = arith.constant 0 : index
      %c8_80 = arith.constant 8 : index
      %c0_81 = arith.constant 0 : index
      %170 = vector.load %arg18[%c0_79, %c8_80, %c0_81] : memref<2x32x128xf32, #tpu.memory_space<vmem>>, vector<2x16x128xf32>
      %171 = vector.shape_cast %170 : vector<2x16x128xf32> to vector<32x128xf32>
      %172 = arith.truncf %171 : vector<32x128xf32> to vector<32x128xbf16>
      %c1_82 = arith.constant 1 : index
      %c0_83 = arith.constant 0 : index
      %c0_84 = arith.constant 0 : index
      %173 = vector.load %arg8[%c1_82, %c0_83, %c0_84] : memref<3x128x256xbf16, #tpu.memory_space<vmem>>, vector<1x128x256xbf16>
      %174 = vector.shape_cast %173 : vector<1x128x256xbf16> to vector<128x256xbf16>
      %cst_85 = arith.constant dense<0.000000e+00> : vector<32x256xf32>
      %175 = tpu.matmul %172, %174, %cst_85 {dimension_numbers = #tpu.dot_dimension_numbers<[1], [0], [0], [1], [0, 0, 1, 1], [], []>} : vector<32x128xbf16>, vector<128x256xbf16>, vector<32x256xf32> -> vector<32x256xf32>
      %176 = arith.addf %169, %175 : vector<32x256xf32>
      %c0_86 = arith.constant 0 : index
      %c9_87 = arith.constant 9 : index
      %c0_88 = arith.constant 0 : index
      %177 = vector.load %arg18[%c0_86, %c9_87, %c0_88] : memref<2x32x128xf32, #tpu.memory_space<vmem>>, vector<2x16x128xf32>
      %178 = vector.shape_cast %177 : vector<2x16x128xf32> to vector<32x128xf32>
      %179 = arith.truncf %178 : vector<32x128xf32> to vector<32x128xbf16>
      %c2_89 = arith.constant 2 : index
      %c0_90 = arith.constant 0 : index
      %c0_91 = arith.constant 0 : index
      %180 = vector.load %arg8[%c2_89, %c0_90, %c0_91] : memref<3x128x256xbf16, #tpu.memory_space<vmem>>, vector<1x128x256xbf16>
      %181 = vector.shape_cast %180 : vector<1x128x256xbf16> to vector<128x256xbf16>
      %cst_92 = arith.constant dense<0.000000e+00> : vector<32x256xf32>
      %182 = tpu.matmul %179, %181, %cst_92 {dimension_numbers = #tpu.dot_dimension_numbers<[1], [0], [0], [1], [0, 0, 1, 1], [], []>} : vector<32x128xbf16>, vector<128x256xbf16>, vector<32x256xf32> -> vector<32x256xf32>
      %183 = arith.addf %176, %182 : vector<32x256xf32>
      %c0_93 = arith.constant 0 : index
      %c0_94 = arith.constant 0 : index
      %184 = vector.load %arg9[%c0_93, %c0_94] : memref<1x256xf32, #tpu.memory_space<vmem>>, vector<1x256xf32>
      %185 = vector.broadcast %184 : vector<1x256xf32> to vector<32x256xf32>
      %186 = arith.mulf %183, %185 : vector<32x256xf32>
      %c0_95 = arith.constant 0 : index
      %c0_96 = arith.constant 0 : index
      %187 = vector.load %arg10[%c0_95, %c0_96] : memref<1x256xf32, #tpu.memory_space<vmem>>, vector<1x256xf32>
      %188 = vector.broadcast %187 : vector<1x256xf32> to vector<32x256xf32>
      %189 = arith.addf %186, %188 : vector<32x256xf32>
      %cst_97 = arith.constant 0.000000e+00 : f32
      %190 = vector.broadcast %cst_97 : f32 to vector<32x256xf32>
      %191 = arith.maximumf %189, %190 : vector<32x256xf32>
      %192 = vector.shape_cast %191 : vector<32x256xf32> to vector<2x16x256xf32>
      %193 = arith.truncf %192 : vector<2x16x256xf32> to vector<2x16x256xbf16>
      %194 = vector.extract_strided_slice %193 {offsets = [0, 0, 0], sizes = [2, 1, 256], strides = [1, 1, 1]} : vector<2x16x256xbf16> to vector<2x1x256xbf16>
      %195 = vector.shape_cast %194 : vector<2x1x256xbf16> to vector<2x256xbf16>
      %c0_98 = arith.constant 0 : index
      %c0_99 = arith.constant 0 : index
      %c0_100 = arith.constant 0 : index
      %196 = vector.load %arg19[%c0_98, %c0_99, %c0_100] : memref<4x2x1024xbf16, #tpu.memory_space<vmem>>, vector<1x2x256xbf16>
      %197 = vector.shape_cast %196 : vector<1x2x256xbf16> to vector<2x256xbf16>
      %198 = vector.shape_cast %195 : vector<2x256xbf16> to vector<1x2x256xbf16>
      tpu.vector_store %arg19[%c0_98, %c0_99, %c0_100], %198 {strides = array<i32>} : memref<4x2x1024xbf16, #tpu.memory_space<vmem>>, vector<1x2x256xbf16>,
      %199 = vector.extract_strided_slice %193 {offsets = [0, 1, 0], sizes = [2, 1, 256], strides = [1, 1, 1]} : vector<2x16x256xbf16> to vector<2x1x256xbf16>
      %200 = vector.shape_cast %199 : vector<2x1x256xbf16> to vector<2x256xbf16>
      %c0_101 = arith.constant 0 : index
      %c0_102 = arith.constant 0 : index
      %c256 = arith.constant 256 : index
      %201 = vector.load %arg19[%c0_101, %c0_102, %c256] : memref<4x2x1024xbf16, #tpu.memory_space<vmem>>, vector<1x2x256xbf16>
      %202 = vector.shape_cast %201 : vector<1x2x256xbf16> to vector<2x256xbf16>
      %203 = vector.shape_cast %200 : vector<2x256xbf16> to vector<1x2x256xbf16>
      tpu.vector_store %arg19[%c0_101, %c0_102, %c256], %203 {strides = array<i32>} : memref<4x2x1024xbf16, #tpu.memory_space<vmem>>, vector<1x2x256xbf16>,
      %204 = vector.extract_strided_slice %193 {offsets = [0, 2, 0], sizes = [2, 1, 256], strides = [1, 1, 1]} : vector<2x16x256xbf16> to vector<2x1x256xbf16>
      %205 = vector.shape_cast %204 : vector<2x1x256xbf16> to vector<2x256xbf16>
      %c0_103 = arith.constant 0 : index
      %c0_104 = arith.constant 0 : index
      %c512 = arith.constant 512 : index
      %206 = vector.load %arg19[%c0_103, %c0_104, %c512] : memref<4x2x1024xbf16, #tpu.memory_space<vmem>>, vector<1x2x256xbf16>
      %207 = vector.shape_cast %206 : vector<1x2x256xbf16> to vector<2x256xbf16>
      %208 = vector.shape_cast %205 : vector<2x256xbf16> to vector<1x2x256xbf16>
      tpu.vector_store %arg19[%c0_103, %c0_104, %c512], %208 {strides = array<i32>} : memref<4x2x1024xbf16, #tpu.memory_space<vmem>>, vector<1x2x256xbf16>,
      %209 = vector.extract_strided_slice %193 {offsets = [0, 3, 0], sizes = [2, 1, 256], strides = [1, 1, 1]} : vector<2x16x256xbf16> to vector<2x1x256xbf16>
      %210 = vector.shape_cast %209 : vector<2x1x256xbf16> to vector<2x256xbf16>
      %c0_105 = arith.constant 0 : index
      %c0_106 = arith.constant 0 : index
      %c768 = arith.constant 768 : index
      %211 = vector.load %arg19[%c0_105, %c0_106, %c768] : memref<4x2x1024xbf16, #tpu.memory_space<vmem>>, vector<1x2x256xbf16>
      %212 = vector.shape_cast %211 : vector<1x2x256xbf16> to vector<2x256xbf16>
      %213 = vector.shape_cast %210 : vector<2x256xbf16> to vector<1x2x256xbf16>
      tpu.vector_store %arg19[%c0_105, %c0_106, %c768], %213 {strides = array<i32>} : memref<4x2x1024xbf16, #tpu.memory_space<vmem>>, vector<1x2x256xbf16>,
      %214 = vector.extract_strided_slice %193 {offsets = [0, 4, 0], sizes = [2, 1, 256], strides = [1, 1, 1]} : vector<2x16x256xbf16> to vector<2x1x256xbf16>
      %215 = vector.shape_cast %214 : vector<2x1x256xbf16> to vector<2x256xbf16>
      %c1_107 = arith.constant 1 : index
      %c0_108 = arith.constant 0 : index
      %c0_109 = arith.constant 0 : index
      %216 = vector.load %arg19[%c1_107, %c0_108, %c0_109] : memref<4x2x1024xbf16, #tpu.memory_space<vmem>>, vector<1x2x256xbf16>
      %217 = vector.shape_cast %216 : vector<1x2x256xbf16> to vector<2x256xbf16>
      %218 = vector.shape_cast %215 : vector<2x256xbf16> to vector<1x2x256xbf16>
      tpu.vector_store %arg19[%c1_107, %c0_108, %c0_109], %218 {strides = array<i32>} : memref<4x2x1024xbf16, #tpu.memory_space<vmem>>, vector<1x2x256xbf16>,
      %219 = vector.extract_strided_slice %193 {offsets = [0, 5, 0], sizes = [2, 1, 256], strides = [1, 1, 1]} : vector<2x16x256xbf16> to vector<2x1x256xbf16>
      %220 = vector.shape_cast %219 : vector<2x1x256xbf16> to vector<2x256xbf16>
      %c1_110 = arith.constant 1 : index
      %c0_111 = arith.constant 0 : index
      %c256_112 = arith.constant 256 : index
      %221 = vector.load %arg19[%c1_110, %c0_111, %c256_112] : memref<4x2x1024xbf16, #tpu.memory_space<vmem>>, vector<1x2x256xbf16>
      %222 = vector.shape_cast %221 : vector<1x2x256xbf16> to vector<2x256xbf16>
      %223 = vector.shape_cast %220 : vector<2x256xbf16> to vector<1x2x256xbf16>
      tpu.vector_store %arg19[%c1_110, %c0_111, %c256_112], %223 {strides = array<i32>} : memref<4x2x1024xbf16, #tpu.memory_space<vmem>>, vector<1x2x256xbf16>,
      %224 = vector.extract_strided_slice %193 {offsets = [0, 6, 0], sizes = [2, 1, 256], strides = [1, 1, 1]} : vector<2x16x256xbf16> to vector<2x1x256xbf16>
      %225 = vector.shape_cast %224 : vector<2x1x256xbf16> to vector<2x256xbf16>
      %c1_113 = arith.constant 1 : index
      %c0_114 = arith.constant 0 : index
      %c512_115 = arith.constant 512 : index
      %226 = vector.load %arg19[%c1_113, %c0_114, %c512_115] : memref<4x2x1024xbf16, #tpu.memory_space<vmem>>, vector<1x2x256xbf16>
      %227 = vector.shape_cast %226 : vector<1x2x256xbf16> to vector<2x256xbf16>
      %228 = vector.shape_cast %225 : vector<2x256xbf16> to vector<1x2x256xbf16>
      tpu.vector_store %arg19[%c1_113, %c0_114, %c512_115], %228 {strides = array<i32>} : memref<4x2x1024xbf16, #tpu.memory_space<vmem>>, vector<1x2x256xbf16>,
      %229 = vector.extract_strided_slice %193 {offsets = [0, 7, 0], sizes = [2, 1, 256], strides = [1, 1, 1]} : vector<2x16x256xbf16> to vector<2x1x256xbf16>
      %230 = vector.shape_cast %229 : vector<2x1x256xbf16> to vector<2x256xbf16>
      %c1_116 = arith.constant 1 : index
      %c0_117 = arith.constant 0 : index
      %c768_118 = arith.constant 768 : index
      %231 = vector.load %arg19[%c1_116, %c0_117, %c768_118] : memref<4x2x1024xbf16, #tpu.memory_space<vmem>>, vector<1x2x256xbf16>
      %232 = vector.shape_cast %231 : vector<1x2x256xbf16> to vector<2x256xbf16>
      %233 = vector.shape_cast %230 : vector<2x256xbf16> to vector<1x2x256xbf16>
      tpu.vector_store %arg19[%c1_116, %c0_117, %c768_118], %233 {strides = array<i32>} : memref<4x2x1024xbf16, #tpu.memory_space<vmem>>, vector<1x2x256xbf16>,
      %234 = vector.extract_strided_slice %193 {offsets = [0, 8, 0], sizes = [2, 1, 256], strides = [1, 1, 1]} : vector<2x16x256xbf16> to vector<2x1x256xbf16>
      %235 = vector.shape_cast %234 : vector<2x1x256xbf16> to vector<2x256xbf16>
      %c2_119 = arith.constant 2 : index
      %c0_120 = arith.constant 0 : index
      %c0_121 = arith.constant 0 : index
      %236 = vector.load %arg19[%c2_119, %c0_120, %c0_121] : memref<4x2x1024xbf16, #tpu.memory_space<vmem>>, vector<1x2x256xbf16>
      %237 = vector.shape_cast %236 : vector<1x2x256xbf16> to vector<2x256xbf16>
      %238 = vector.shape_cast %235 : vector<2x256xbf16> to vector<1x2x256xbf16>
      tpu.vector_store %arg19[%c2_119, %c0_120, %c0_121], %238 {strides = array<i32>} : memref<4x2x1024xbf16, #tpu.memory_space<vmem>>, vector<1x2x256xbf16>,
      %239 = vector.extract_strided_slice %193 {offsets = [0, 9, 0], sizes = [2, 1, 256], strides = [1, 1, 1]} : vector<2x16x256xbf16> to vector<2x1x256xbf16>
      %240 = vector.shape_cast %239 : vector<2x1x256xbf16> to vector<2x256xbf16>
      %c2_122 = arith.constant 2 : index
      %c0_123 = arith.constant 0 : index
      %c256_124 = arith.constant 256 : index
      %241 = vector.load %arg19[%c2_122, %c0_123, %c256_124] : memref<4x2x1024xbf16, #tpu.memory_space<vmem>>, vector<1x2x256xbf16>
      %242 = vector.shape_cast %241 : vector<1x2x256xbf16> to vector<2x256xbf16>
      %243 = vector.shape_cast %240 : vector<2x256xbf16> to vector<1x2x256xbf16>
      tpu.vector_store %arg19[%c2_122, %c0_123, %c256_124], %243 {strides = array<i32>} : memref<4x2x1024xbf16, #tpu.memory_space<vmem>>, vector<1x2x256xbf16>,
      %244 = vector.extract_strided_slice %193 {offsets = [0, 10, 0], sizes = [2, 1, 256], strides = [1, 1, 1]} : vector<2x16x256xbf16> to vector<2x1x256xbf16>
      %245 = vector.shape_cast %244 : vector<2x1x256xbf16> to vector<2x256xbf16>
      %c2_125 = arith.constant 2 : index
      %c0_126 = arith.constant 0 : index
      %c512_127 = arith.constant 512 : index
      %246 = vector.load %arg19[%c2_125, %c0_126, %c512_127] : memref<4x2x1024xbf16, #tpu.memory_space<vmem>>, vector<1x2x256xbf16>
      %247 = vector.shape_cast %246 : vector<1x2x256xbf16> to vector<2x256xbf16>
      %248 = vector.shape_cast %245 : vector<2x256xbf16> to vector<1x2x256xbf16>
      tpu.vector_store %arg19[%c2_125, %c0_126, %c512_127], %248 {strides = array<i32>} : memref<4x2x1024xbf16, #tpu.memory_space<vmem>>, vector<1x2x256xbf16>,
      %249 = vector.extract_strided_slice %193 {offsets = [0, 11, 0], sizes = [2, 1, 256], strides = [1, 1, 1]} : vector<2x16x256xbf16> to vector<2x1x256xbf16>
      %250 = vector.shape_cast %249 : vector<2x1x256xbf16> to vector<2x256xbf16>
      %c2_128 = arith.constant 2 : index
      %c0_129 = arith.constant 0 : index
      %c768_130 = arith.constant 768 : index
      %251 = vector.load %arg19[%c2_128, %c0_129, %c768_130] : memref<4x2x1024xbf16, #tpu.memory_space<vmem>>, vector<1x2x256xbf16>
      %252 = vector.shape_cast %251 : vector<1x2x256xbf16> to vector<2x256xbf16>
      %253 = vector.shape_cast %250 : vector<2x256xbf16> to vector<1x2x256xbf16>
      tpu.vector_store %arg19[%c2_128, %c0_129, %c768_130], %253 {strides = array<i32>} : memref<4x2x1024xbf16, #tpu.memory_space<vmem>>, vector<1x2x256xbf16>,
      %254 = vector.extract_strided_slice %193 {offsets = [0, 12, 0], sizes = [2, 1, 256], strides = [1, 1, 1]} : vector<2x16x256xbf16> to vector<2x1x256xbf16>
      %255 = vector.shape_cast %254 : vector<2x1x256xbf16> to vector<2x256xbf16>
      %c3 = arith.constant 3 : index
      %c0_131 = arith.constant 0 : index
      %c0_132 = arith.constant 0 : index
      %256 = vector.load %arg19[%c3, %c0_131, %c0_132] : memref<4x2x1024xbf16, #tpu.memory_space<vmem>>, vector<1x2x256xbf16>
      %257 = vector.shape_cast %256 : vector<1x2x256xbf16> to vector<2x256xbf16>
      %258 = vector.shape_cast %255 : vector<2x256xbf16> to vector<1x2x256xbf16>
      tpu.vector_store %arg19[%c3, %c0_131, %c0_132], %258 {strides = array<i32>} : memref<4x2x1024xbf16, #tpu.memory_space<vmem>>, vector<1x2x256xbf16>,
      %259 = vector.extract_strided_slice %193 {offsets = [0, 13, 0], sizes = [2, 1, 256], strides = [1, 1, 1]} : vector<2x16x256xbf16> to vector<2x1x256xbf16>
      %260 = vector.shape_cast %259 : vector<2x1x256xbf16> to vector<2x256xbf16>
      %c3_133 = arith.constant 3 : index
      %c0_134 = arith.constant 0 : index
      %c256_135 = arith.constant 256 : index
      %261 = vector.load %arg19[%c3_133, %c0_134, %c256_135] : memref<4x2x1024xbf16, #tpu.memory_space<vmem>>, vector<1x2x256xbf16>
      %262 = vector.shape_cast %261 : vector<1x2x256xbf16> to vector<2x256xbf16>
      %263 = vector.shape_cast %260 : vector<2x256xbf16> to vector<1x2x256xbf16>
      tpu.vector_store %arg19[%c3_133, %c0_134, %c256_135], %263 {strides = array<i32>} : memref<4x2x1024xbf16, #tpu.memory_space<vmem>>, vector<1x2x256xbf16>,
      %264 = vector.extract_strided_slice %193 {offsets = [0, 14, 0], sizes = [2, 1, 256], strides = [1, 1, 1]} : vector<2x16x256xbf16> to vector<2x1x256xbf16>
      %265 = vector.shape_cast %264 : vector<2x1x256xbf16> to vector<2x256xbf16>
      %c3_136 = arith.constant 3 : index
      %c0_137 = arith.constant 0 : index
      %c512_138 = arith.constant 512 : index
      %266 = vector.load %arg19[%c3_136, %c0_137, %c512_138] : memref<4x2x1024xbf16, #tpu.memory_space<vmem>>, vector<1x2x256xbf16>
      %267 = vector.shape_cast %266 : vector<1x2x256xbf16> to vector<2x256xbf16>
      %268 = vector.shape_cast %265 : vector<2x256xbf16> to vector<1x2x256xbf16>
      tpu.vector_store %arg19[%c3_136, %c0_137, %c512_138], %268 {strides = array<i32>} : memref<4x2x1024xbf16, #tpu.memory_space<vmem>>, vector<1x2x256xbf16>,
      %269 = vector.extract_strided_slice %193 {offsets = [0, 15, 0], sizes = [2, 1, 256], strides = [1, 1, 1]} : vector<2x16x256xbf16> to vector<2x1x256xbf16>
      %270 = vector.shape_cast %269 : vector<2x1x256xbf16> to vector<2x256xbf16>
      %c3_139 = arith.constant 3 : index
      %c0_140 = arith.constant 0 : index
      %c768_141 = arith.constant 768 : index
      %271 = vector.load %arg19[%c3_139, %c0_140, %c768_141] : memref<4x2x1024xbf16, #tpu.memory_space<vmem>>, vector<1x2x256xbf16>
      %272 = vector.shape_cast %271 : vector<1x2x256xbf16> to vector<2x256xbf16>
      %273 = vector.shape_cast %270 : vector<2x256xbf16> to vector<1x2x256xbf16>
      tpu.vector_store %arg19[%c3_139, %c0_140, %c768_141], %273 {strides = array<i32>} : memref<4x2x1024xbf16, #tpu.memory_space<vmem>>, vector<1x2x256xbf16>,
      %cst_142 = arith.constant 0.000000e+00 : f32
      %274 = vector.broadcast %cst_142 : f32 to vector<2x512xf32>
      %c0_143 = arith.constant 0 : index
      %c0_144 = arith.constant 0 : index
      %275 = vector.load %arg20[%c0_143, %c0_144] : memref<2x512xf32, #tpu.memory_space<vmem>>, vector<2x512xf32>
      tpu.vector_store %arg20[%c0_143, %c0_144], %274 {strides = array<i32>} : memref<2x512xf32, #tpu.memory_space<vmem>>, vector<2x512xf32>,
    } else {
    }
    %c0 = arith.constant 0 : index
    %c0_1 = arith.constant 0 : index
    %3 = vector.load %arg20[%c0, %c0_1] : memref<2x512xf32, #tpu.memory_space<vmem>>, vector<2x512xf32>
    %4 = arith.index_cast %arg0 : i32 to index
    %c0_2 = arith.constant 0 : index
    %c0_3 = arith.constant 0 : index
    %5 = vector.load %arg19[%4, %c0_2, %c0_3] : memref<4x2x1024xbf16, #tpu.memory_space<vmem>>, vector<1x2x1024xbf16>
    %6 = vector.shape_cast %5 : vector<1x2x1024xbf16> to vector<2x1024xbf16>
    %c0_4 = arith.constant 0 : index
    %c0_5 = arith.constant 0 : index
    %7 = vector.load %arg11[%c0_4, %c0_5] : memref<1024x512xbf16, #tpu.memory_space<vmem>>, vector<1024x512xbf16>
    %cst = arith.constant dense<0.000000e+00> : vector<2x512xf32>
    %8 = tpu.matmul %6, %7, %cst {dimension_numbers = #tpu.dot_dimension_numbers<[1], [0], [0], [1], [0, 0, 1, 1], [], []>} : vector<2x1024xbf16>, vector<1024x512xbf16>, vector<2x512xf32> -> vector<2x512xf32>
    %9 = arith.addf %3, %8 : vector<2x512xf32>
    %c0_6 = arith.constant 0 : index
    %c0_7 = arith.constant 0 : index
    %10 = vector.load %arg20[%c0_6, %c0_7] : memref<2x512xf32, #tpu.memory_space<vmem>>, vector<2x512xf32>
    tpu.vector_store %arg20[%c0_6, %c0_7], %9 {strides = array<i32>} : memref<2x512xf32, #tpu.memory_space<vmem>>, vector<2x512xf32>,
    %c3_i32 = arith.constant 3 : i32
    %11 = arith.cmpi eq, %arg0, %c3_i32 : i32
    %12 = arith.extui %11 : i1 to i32
    %c0_i32_8 = arith.constant 0 : i32
    %13 = arith.cmpi ne, %12, %c0_i32_8 : i32
    scf.if %13 {
      %c0_9 = arith.constant 0 : index
      %c0_10 = arith.constant 0 : index
      %14 = vector.load %arg20[%c0_9, %c0_10] : memref<2x512xf32, #tpu.memory_space<vmem>>, vector<2x512xf32>
      %c0_11 = arith.constant 0 : index
      %c0_12 = arith.constant 0 : index
      %15 = vector.load %arg12[%c0_11, %c0_12] : memref<1x512xf32, #tpu.memory_space<vmem>>, vector<1x512xf32>
      %16 = vector.broadcast %15 : vector<1x512xf32> to vector<2x512xf32>
      %17 = arith.addf %14, %16 : vector<2x512xf32>
      %cst_13 = arith.constant 0.000000e+00 : f32
      %18 = vector.broadcast %cst_13 : f32 to vector<2x512xf32>
      %19 = arith.maximumf %17, %18 : vector<2x512xf32>
      %20 = arith.truncf %19 : vector<2x512xf32> to vector<2x512xbf16>
      %c0_14 = arith.constant 0 : index
      %c0_15 = arith.constant 0 : index
      %21 = vector.load %arg13[%c0_14, %c0_15] : memref<512x128xbf16, #tpu.memory_space<vmem>>, vector<512x128xbf16>
      %cst_16 = arith.constant dense<0.000000e+00> : vector<2x128xf32>
      %22 = tpu.matmul %20, %21, %cst_16 {dimension_numbers = #tpu.dot_dimension_numbers<[1], [0], [0], [1], [0, 0, 1, 1], [], []>} : vector<2x512xbf16>, vector<512x128xbf16>, vector<2x128xf32> -> vector<2x128xf32>
      %c0_17 = arith.constant 0 : index
      %c0_18 = arith.constant 0 : index
      %23 = vector.load %arg14[%c0_17, %c0_18] : memref<1x128xf32, #tpu.memory_space<vmem>>, vector<1x128xf32>
      %24 = vector.broadcast %23 : vector<1x128xf32> to vector<2x128xf32>
      %25 = arith.addf %22, %24 : vector<2x128xf32>
      %c0_19 = arith.constant 0 : index
      %c0_20 = arith.constant 0 : index
      %26 = vector.load %arg15[%c0_19, %c0_20] : memref<2x128xf32, #tpu.memory_space<vmem>>, vector<2x128xf32>
      tpu.vector_store %arg15[%c0_19, %c0_20], %25 {strides = array<i32>} : memref<2x128xf32, #tpu.memory_space<vmem>>, vector<2x128xf32>,
    } else {
    }
    return
  }
  func.func @transform_0(%arg0: i32) -> (i32, i32, i32) {
    %c0_i32 = arith.constant 0 : i32
    %c0_i32_0 = arith.constant 0 : i32
    %c0_i32_1 = arith.constant 0 : i32
    %c0_i32_2 = arith.constant 0 : i32
    return %c0_i32, %c0_i32_0, %c0_i32_1 : i32, i32, i32
  }
  func.func @transform_1(%arg0: i32) -> (i32, i32, i32) {
    %c0_i32 = arith.constant 0 : i32
    %c0_i32_0 = arith.constant 0 : i32
    %c0_i32_1 = arith.constant 0 : i32
    %c0_i32_2 = arith.constant 0 : i32
    return %c0_i32, %c0_i32_0, %c0_i32_1 : i32, i32, i32
  }
  func.func @transform_2(%arg0: i32) -> (i32, i32) {
    %c0_i32 = arith.constant 0 : i32
    %c0_i32_0 = arith.constant 0 : i32
    %c0_i32_1 = arith.constant 0 : i32
    return %c0_i32, %c0_i32_0 : i32, i32
  }
  func.func @transform_3(%arg0: i32) -> (i32, i32) {
    %c0_i32 = arith.constant 0 : i32
    %c0_i32_0 = arith.constant 0 : i32
    %c0_i32_1 = arith.constant 0 : i32
    return %c0_i32, %c0_i32_0 : i32, i32
  }
  func.func @transform_4(%arg0: i32) -> (i32, i32, i32) {
    %c0_i32 = arith.constant 0 : i32
    %c0_i32_0 = arith.constant 0 : i32
    %c0_i32_1 = arith.constant 0 : i32
    %c0_i32_2 = arith.constant 0 : i32
    return %c0_i32, %c0_i32_0, %c0_i32_1 : i32, i32, i32
  }
  func.func @transform_5(%arg0: i32) -> (i32, i32) {
    %c0_i32 = arith.constant 0 : i32
    %c0_i32_0 = arith.constant 0 : i32
    %c0_i32_1 = arith.constant 0 : i32
    return %c0_i32, %c0_i32_0 : i32, i32
  }
  func.func @transform_6(%arg0: i32) -> (i32, i32) {
    %c0_i32 = arith.constant 0 : i32
    %c0_i32_0 = arith.constant 0 : i32
    %c0_i32_1 = arith.constant 0 : i32
    return %c0_i32, %c0_i32_0 : i32, i32
  }
  func.func @transform_7(%arg0: i32) -> (i32, i32, i32) {
    %c0_i32 = arith.constant 0 : i32
    %c0_i32_0 = arith.constant 0 : i32
    %c0_i32_1 = arith.constant 0 : i32
    %c0_i32_2 = arith.constant 0 : i32
    return %c0_i32, %c0_i32_0, %c0_i32_1 : i32, i32, i32
  }
  func.func @transform_8(%arg0: i32) -> (i32, i32) {
    %c0_i32 = arith.constant 0 : i32
    %c0_i32_0 = arith.constant 0 : i32
    %c0_i32_1 = arith.constant 0 : i32
    return %c0_i32, %c0_i32_0 : i32, i32
  }
  func.func @transform_9(%arg0: i32) -> (i32, i32) {
    %c0_i32 = arith.constant 0 : i32
    %c0_i32_0 = arith.constant 0 : i32
    %c0_i32_1 = arith.constant 0 : i32
    return %c0_i32, %c0_i32_0 : i32, i32
  }
  func.func @transform_10(%arg0: i32) -> (i32, i32) {
    %c0_i32 = arith.constant 0 : i32
    %c0_i32_0 = arith.constant 0 : i32
    return %arg0, %c0_i32 : i32, i32
  }
  func.func @transform_11(%arg0: i32) -> (i32, i32) {
    %c0_i32 = arith.constant 0 : i32
    %c0_i32_0 = arith.constant 0 : i32
    %c0_i32_1 = arith.constant 0 : i32
    return %c0_i32, %c0_i32_0 : i32, i32
  }
  func.func @transform_12(%arg0: i32) -> (i32, i32) {
    %c0_i32 = arith.constant 0 : i32
    %c0_i32_0 = arith.constant 0 : i32
    %c0_i32_1 = arith.constant 0 : i32
    return %c0_i32, %c0_i32_0 : i32, i32
  }
  func.func @transform_13(%arg0: i32) -> (i32, i32) {
    %c0_i32 = arith.constant 0 : i32
    %c0_i32_0 = arith.constant 0 : i32
    %c0_i32_1 = arith.constant 0 : i32
    return %c0_i32, %c0_i32_0 : i32, i32
  }
  func.func @transform_14(%arg0: i32) -> (i32, i32) {
    %c0_i32 = arith.constant 0 : i32
    %c0_i32_0 = arith.constant 0 : i32
    %c0_i32_1 = arith.constant 0 : i32
    return %c0_i32, %c0_i32_0 : i32, i32
  }
}

</mosaic_0001>

<llo_original>
// kernel: deep_wifi_cnn_forward.1
$region0: #{deep_wifi_cnn_forward.1}
  #allocation0 [shape = 'u32[]', space=smem, size = 0x4, offset = 0x4, fixed_abs, tag = 'smem constant byte address 0x4 - core index']
  #allocation1 [shape = 'u32[72,128]{1,0:T(1,128)}', space=vmem, size = 0x9000, scoped, tag = 'internal scratch']
  #allocation2 [shape = 'f32[2,32,4]{2,1,0:T(8,128)}', space=vmem, size = 0x8000, scoped, tag = 'scratch operand']
  #allocation3 [shape = 'f32[2,32,128]{2,1,0:T(8,128)}', space=vmem, size = 0x8000, scoped, tag = 'scratch operand']
  #allocation4 [shape = 'f32[2,32,128]{2,1,0:T(8,128)}', space=vmem, size = 0x8000, scoped, tag = 'scratch operand']
  #allocation5 [shape = 'bf16[4,2,1024]{2,1,0:T(2,128)(2,1)}', space=vmem, size = 0x4000, scoped, tag = 'scratch operand']
  #allocation6 [shape = 'f32[2,512]{1,0:T(2,128)}', space=vmem, size = 0x1000, scoped, tag = 'scratch operand']
  %s0 = inlined_call_operand.vmem [shape: f32[2,16,4], index: 0, kind: input, shape index: {}]
  %s1 = inlined_call_operand.hbm [shape: f32[3,4,128], index: 1, kind: input, shape index: {}]
  %s2 = inlined_call_operand.hbm [shape: f32[1,128], index: 2, kind: input, shape index: {}]
  %s3 = inlined_call_operand.hbm [shape: f32[1,128], index: 3, kind: input, shape index: {}]
  %s4 = inlined_call_operand.hbm [shape: bf16[3,128,128], index: 4, kind: input, shape index: {}]
  %s5 = inlined_call_operand.hbm [shape: f32[1,128], index: 5, kind: input, shape index: {}]
  %s6 = inlined_call_operand.hbm [shape: f32[1,128], index: 6, kind: input, shape index: {}]
  %s7 = inlined_call_operand.hbm [shape: bf16[3,128,256], index: 7, kind: input, shape index: {}]
  %s8 = inlined_call_operand.hbm [shape: f32[1,256], index: 8, kind: input, shape index: {}]
  %s9 = inlined_call_operand.hbm [shape: f32[1,256], index: 9, kind: input, shape index: {}]
  %s10 = inlined_call_operand.hbm [shape: bf16[4096,512], index: 10, kind: input, shape index: {}]
  %s11 = inlined_call_operand.hbm [shape: f32[1,512], index: 11, kind: input, shape index: {}]
  %s12 = inlined_call_operand.hbm [shape: bf16[512,128], index: 12, kind: input, shape index: {}]
  %s13 = inlined_call_operand.hbm [shape: f32[1,128], index: 13, kind: input, shape index: {}]
  %s14 = inlined_call_operand.hbm [shape: f32[2,128], index: 14, kind: output, shape index: {}]
  %s15 = sld [smem:[#allocation0]]
  $region149: #{deep_wifi_cnn_forward.1} parent=0
    _
  %s17 = ssub.s32 1, %s15
  %s18 = scalar_select 0, %s17, %s15
  $region1: #{deep_wifi_cnn_forward.1} parent=0
    #allocation7 [shape = 'u8[6144]{0}', space=vmem, size = 0x1800, scoped, tag = 'input window, operand 1, single buffered']
    #allocation8 [shape = 's32[2]{0}', space=sflag, size = 0x8, scoped, tag = 'scoped memory for deep_wifi_cnn_forward.1']
    #allocation9 [shape = 's32[2]{0}', space=sflag, size = 0x8, scoped, tag = 'scoped memory for deep_wifi_cnn_forward.1']
    #allocation10 [shape = 'u8[512]{0}', space=vmem, size = 0x400, scoped, tag = 'input window, operand 2, single buffered']
    #allocation11 [shape = 's32[1]{0}', space=sflag, size = 0x4, scoped, tag = 'scoped memory for deep_wifi_cnn_forward.1']
    #allocation12 [shape = 'u8[512]{0}', space=vmem, size = 0x400, scoped, tag = 'input window, operand 3, single buffered']
    #allocation13 [shape = 'u8[98304]{0}', space=vmem, size = 0x18000, scoped, tag = 'input window, operand 4, single buffered']
    #allocation14 [shape = 's32[1]{0}', space=sflag, size = 0x4, scoped, tag = 'scoped memory for deep_wifi_cnn_forward.1']
    #allocation15 [shape = 'u8[512]{0}', space=vmem, size = 0x400, scoped, tag = 'input window, operand 5, single buffered']
    #allocation16 [shape = 'u8[512]{0}', space=vmem, size = 0x400, scoped, tag = 'input window, operand 6, single buffered']
    #allocation17 [shape = 's32[1]{0}', space=sflag, size = 0x4, scoped, tag = 'scoped memory for deep_wifi_cnn_forward.1']
    #allocation18 [shape = 'u8[196608]{0}', space=vmem, size = 0x30000, scoped, tag = 'input window, operand 7, single buffered']
    #allocation19 [shape = 'u8[1024]{0}', space=vmem, size = 0x400, scoped, tag = 'input window, operand 8, single buffered']
    #allocation20 [shape = 's32[1]{0}', space=sflag, size = 0x4, scoped, tag = 'scoped memory for deep_wifi_cnn_forward.1']
    #allocation21 [shape = 'u8[1024]{0}', space=vmem, size = 0x400, scoped, tag = 'input window, operand 9, single buffered']
    #allocation22 [shape = 'u8[2097152]{0}', space=vmem, size = 0x200000, scoped, tag = 'input window, operand 10']
    #allocation23 [shape = 's32[2]{0}', space=sflag, size = 0x8, scoped, tag = 'scoped memory for deep_wifi_cnn_forward.1']
    #allocation24 [shape = 'u8[2048]{0}', space=vmem, size = 0x800, scoped, tag = 'input window, operand 11, single buffered']
    #allocation25 [shape = 'u8[131072]{0}', space=vmem, size = 0x20000, scoped, tag = 'input window, operand 12, single buffered']
    #allocation26 [shape = 's32[1]{0}', space=sflag, size = 0x4, scoped, tag = 'scoped memory for deep_wifi_cnn_forward.1']
    #allocation27 [shape = 'u8[512]{0}', space=vmem, size = 0x400, scoped, tag = 'input window, operand 13, single buffered']
    #allocation28 [shape = 'u8[1024]{0}', space=vmem, size = 0x400, scoped, tag = 'output window, operand 0, single buffered']
    %19 = vsyncpa [#allocation8], 0
    %20 = vsyncpa [#allocation11], 0
    %21 = vsyncpa [#allocation14], 0
    %22 = vsyncpa [#allocation17], 0
    %23 = vsyncpa [#allocation20], 0
    %24 = vsyncpa [#allocation23], 0
    %s25 = scalar_lea.sflag [#allocation23], 1
    %26 = vsyncpa %s25, 0
    %27 = vsyncpa [#allocation26], 0
    %28 = vsyncpa [#allocation9], 0
    loop: start=0, step=1, limit=6
    $region2: #{deep_wifi_cnn_forward.1} parent=1 // loop_pre_header
      _
    $region3: #{deep_wifi_cnn_forward.1} parent=1 // loop_header
      %s30 = sphi 0, %s34
      %p31 = scmp.ge.s32.totalorder %s30, 6
      %s38 = sphi 0, %s38
      %s40 = sphi 0, %s38
      %s41 = sphi 0, %s40
      %s55 = sphi 0, %s41
      %s59 = sphi 0, %s59
      %s61 = sphi 0, %s59
      %s62 = sphi 0, %s61
      %s76 = sphi 0, %s62
      %s80 = sphi 0, %s80
      %s82 = sphi 0, %s80
      %s83 = sphi 0, %s82
      %s97 = sphi 0, %s83
      %s101 = sphi 0, %s101
      %s103 = sphi 0, %s101
      %s104 = sphi 0, %s103
      %s118 = sphi 0, %s104
      %s122 = sphi 0, %s122
      %s124 = sphi 0, %s122
      %s125 = sphi 0, %s124
      %s139 = sphi 0, %s125
      %s143 = sphi 0, %s143
      %s145 = sphi 0, %s143
      %s146 = sphi 0, %s145
      %s160 = sphi 0, %s146
      %s164 = sphi 0, %s164
      %s166 = sphi 0, %s164
      %s167 = sphi 0, %s166
      %s181 = sphi 0, %s167
      %s185 = sphi 0, %s185
      %s187 = sphi 0, %s185
      %s188 = sphi 0, %s187
      %s202 = sphi 0, %s188
      %s206 = sphi 0, %s206
      %s208 = sphi 0, %s206
      %s209 = sphi 0, %s208
      %s223 = sphi 0, %s209
      %s227 = sphi 0, %s227
      %s229 = sphi 0, %s227
      %s230 = sphi 0, %s229
      %s244 = sphi 0, %s230
      %s250 = sphi 0, %s252
      %s253 = sphi 0, %s250
      %s254 = sphi 0, %s253
      %s270 = sphi 0, %s254
      %s274 = sphi 0, %s274
      %s276 = sphi 0, %s274
      %s277 = sphi 0, %s276
      %s291 = sphi 0, %s277
      %s295 = sphi 0, %s295
      %s297 = sphi 0, %s295
      %s298 = sphi 0, %s297
      %s312 = sphi 0, %s298
      %s316 = sphi 0, %s316
      %s318 = sphi 0, %s316
      %s319 = sphi 0, %s318
      %s333 = sphi 0, %s319
      %s337 = sphi 0, %s337
      %s339 = sphi 0, %s337
      %s340 = sphi 0, %s339
      %s354 = sphi 0, %s340
    $region4: #{deep_wifi_cnn_forward.1} parent=1 // loop_header_branch
      %33 = sbr.rel (%p31) target = $region8
    $region5: #{deep_wifi_cnn_forward.1} parent=1 // loop_body
      %s35 = ssub.s32 %s30, 1
      %s36 = ssub.s32 %s30, 2
      %s37 = sadd.s32 %s30, 1
      %s39 = sadd.s32 %s38, 1
      %p42 = scmp.eq.s32.totalorder %s30, 3
      %p43 = scmp.ne.s32.totalorder %s38, %s40
      %p44 = scmp.eq.s32.totalorder %s30, 0
      %p45 = por %p43, %p44
      %p46 = scmp.ne.s32.totalorder %s38, %s40
      %p47 = scmp.eq.s32.totalorder %s35, 3
      %p48 = por %p46, %p47
      %p49 = scmp.ne.s32.totalorder %s40, %s41
      %p50 = scmp.eq.s32.totalorder %s35, 0
      %p51 = por %p49, %p50
      %p52 = scmp.ne.s32.totalorder %s40, %s41
      %p53 = scmp.eq.s32.totalorder %s36, 3
      %p54 = por %p52, %p53
      %p56 = scmp.ne.s32.totalorder %s41, %s55
      %p57 = scmp.eq.s32.totalorder %s36, 0
      %p58 = por %p56, %p57
      %s60 = sadd.s32 %s59, 1
      %p63 = scmp.eq.s32.totalorder %s30, 3
      %p64 = scmp.ne.s32.totalorder %s59, %s61
      %p65 = scmp.eq.s32.totalorder %s30, 0
      %p66 = por %p64, %p65
      %p67 = scmp.ne.s32.totalorder %s59, %s61
      %p68 = scmp.eq.s32.totalorder %s35, 3
      %p69 = por %p67, %p68
      %p70 = scmp.ne.s32.totalorder %s61, %s62
      %p71 = scmp.eq.s32.totalorder %s35, 0
      %p72 = por %p70, %p71
      %p73 = scmp.ne.s32.totalorder %s61, %s62
      %p74 = scmp.eq.s32.totalorder %s36, 3
      %p75 = por %p73, %p74
      %p77 = scmp.ne.s32.totalorder %s62, %s76
      %p78 = scmp.eq.s32.totalorder %s36, 0
      %p79 = por %p77, %p78
      %s81 = sadd.s32 %s80, 1
      %p84 = scmp.eq.s32.totalorder %s30, 3
      %p85 = scmp.ne.s32.totalorder %s80, %s82
      %p86 = scmp.eq.s32.totalorder %s30, 0
      %p87 = por %p85, %p86
      %p88 = scmp.ne.s32.totalorder %s80, %s82
      %p89 = scmp.eq.s32.totalorder %s35, 3
      %p90 = por %p88, %p89
      %p91 = scmp.ne.s32.totalorder %s82, %s83
      %p92 = scmp.eq.s32.totalorder %s35, 0
      %p93 = por %p91, %p92
      %p94 = scmp.ne.s32.totalorder %s82, %s83
      %p95 = scmp.eq.s32.totalorder %s36, 3
      %p96 = por %p94, %p95
      %p98 = scmp.ne.s32.totalorder %s83, %s97
      %p99 = scmp.eq.s32.totalorder %s36, 0
      %p100 = por %p98, %p99
      %s102 = sadd.s32 %s101, 1
      %p105 = scmp.eq.s32.totalorder %s30, 3
      %p106 = scmp.ne.s32.totalorder %s101, %s103
      %p107 = scmp.eq.s32.totalorder %s30, 0
      %p108 = por %p106, %p107
      %p109 = scmp.ne.s32.totalorder %s101, %s103
      %p110 = scmp.eq.s32.totalorder %s35, 3
      %p111 = por %p109, %p110
      %p112 = scmp.ne.s32.totalorder %s103, %s104
      %p113 = scmp.eq.s32.totalorder %s35, 0
      %p114 = por %p112, %p113
      %p115 = scmp.ne.s32.totalorder %s103, %s104
      %p116 = scmp.eq.s32.totalorder %s36, 3
      %p117 = por %p115, %p116
      %p119 = scmp.ne.s32.totalorder %s104, %s118
      %p120 = scmp.eq.s32.totalorder %s36, 0
      %p121 = por %p119, %p120
      %s123 = sadd.s32 %s122, 1
      %p126 = scmp.eq.s32.totalorder %s30, 3
      %p127 = scmp.ne.s32.totalorder %s122, %s124
      %p128 = scmp.eq.s32.totalorder %s30, 0
      %p129 = por %p127, %p128
      %p130 = scmp.ne.s32.totalorder %s122, %s124
      %p131 = scmp.eq.s32.totalorder %s35, 3
      %p132 = por %p130, %p131
      %p133 = scmp.ne.s32.totalorder %s124, %s125
      %p134 = scmp.eq.s32.totalorder %s35, 0
      %p135 = por %p133, %p134
      %p136 = scmp.ne.s32.totalorder %s124, %s125
      %p137 = scmp.eq.s32.totalorder %s36, 3
      %p138 = por %p136, %p137
      %p140 = scmp.ne.s32.totalorder %s125, %s139
      %p141 = scmp.eq.s32.totalorder %s36, 0
      %p142 = por %p140, %p141
      %s144 = sadd.s32 %s143, 1
      %p147 = scmp.eq.s32.totalorder %s30, 3
      %p148 = scmp.ne.s32.totalorder %s143, %s145
      %p149 = scmp.eq.s32.totalorder %s30, 0
      %p150 = por %p148, %p149
      %p151 = scmp.ne.s32.totalorder %s143, %s145
      %p152 = scmp.eq.s32.totalorder %s35, 3
      %p153 = por %p151, %p152
      %p154 = scmp.ne.s32.totalorder %s145, %s146
      %p155 = scmp.eq.s32.totalorder %s35, 0
      %p156 = por %p154, %p155
      %p157 = scmp.ne.s32.totalorder %s145, %s146
      %p158 = scmp.eq.s32.totalorder %s36, 3
      %p159 = por %p157, %p158
      %p161 = scmp.ne.s32.totalorder %s146, %s160
      %p162 = scmp.eq.s32.totalorder %s36, 0
      %p163 = por %p161, %p162
      %s165 = sadd.s32 %s164, 1
      %p168 = scmp.eq.s32.totalorder %s30, 3
      %p169 = scmp.ne.s32.totalorder %s164, %s166
      %p170 = scmp.eq.s32.totalorder %s30, 0
      %p171 = por %p169, %p170
      %p172 = scmp.ne.s32.totalorder %s164, %s166
      %p173 = scmp.eq.s32.totalorder %s35, 3
      %p174 = por %p172, %p173
      %p175 = scmp.ne.s32.totalorder %s166, %s167
      %p176 = scmp.eq.s32.totalorder %s35, 0
      %p177 = por %p175, %p176
      %p178 = scmp.ne.s32.totalorder %s166, %s167
      %p179 = scmp.eq.s32.totalorder %s36, 3
      %p180 = por %p178, %p179
      %p182 = scmp.ne.s32.totalorder %s167, %s181
      %p183 = scmp.eq.s32.totalorder %s36, 0
      %p184 = por %p182, %p183
      %s186 = sadd.s32 %s185, 1
      %p189 = scmp.eq.s32.totalorder %s30, 3
      %p190 = scmp.ne.s32.totalorder %s185, %s187
      %p191 = scmp.eq.s32.totalorder %s30, 0
      %p192 = por %p190, %p191
      %p193 = scmp.ne.s32.totalorder %s185, %s187
      %p194 = scmp.eq.s32.totalorder %s35, 3
      %p195 = por %p193, %p194
      %p196 = scmp.ne.s32.totalorder %s187, %s188
      %p197 = scmp.eq.s32.totalorder %s35, 0
      %p198 = por %p196, %p197
      %p199 = scmp.ne.s32.totalorder %s187, %s188
      %p200 = scmp.eq.s32.totalorder %s36, 3
      %p201 = por %p199, %p200
      %p203 = scmp.ne.s32.totalorder %s188, %s202
      %p204 = scmp.eq.s32.totalorder %s36, 0
      %p205 = por %p203, %p204
      %s207 = sadd.s32 %s206, 1
      %p210 = scmp.eq.s32.totalorder %s30, 3
      %p211 = scmp.ne.s32.totalorder %s206, %s208
      %p212 = scmp.eq.s32.totalorder %s30, 0
      %p213 = por %p211, %p212
      %p214 = scmp.ne.s32.totalorder %s206, %s208
      %p215 = scmp.eq.s32.totalorder %s35, 3
      %p216 = por %p214, %p215
      %p217 = scmp.ne.s32.totalorder %s208, %s209
      %p218 = scmp.eq.s32.totalorder %s35, 0
      %p219 = por %p217, %p218
      %p220 = scmp.ne.s32.totalorder %s208, %s209
      %p221 = scmp.eq.s32.totalorder %s36, 3
      %p222 = por %p220, %p221
      %p224 = scmp.ne.s32.totalorder %s209, %s223
      %p225 = scmp.eq.s32.totalorder %s36, 0
      %p226 = por %p224, %p225
      %s228 = sadd.s32 %s227, 1
      %p231 = scmp.eq.s32.totalorder %s30, 3
      %p232 = scmp.ne.s32.totalorder %s227, %s229
      %p233 = scmp.eq.s32.totalorder %s30, 0
      %p234 = por %p232, %p233
      %p235 = scmp.ne.s32.totalorder %s227, %s229
      %p236 = scmp.eq.s32.totalorder %s35, 3
      %p237 = por %p235, %p236
      %p238 = scmp.ne.s32.totalorder %s229, %s230
      %p239 = scmp.eq.s32.totalorder %s35, 0
      %p240 = por %p238, %p239
      %p241 = scmp.ne.s32.totalorder %s229, %s230
      %p242 = scmp.eq.s32.totalorder %s36, 3
      %p243 = por %p241, %p242
      %p245 = scmp.ne.s32.totalorder %s230, %s244
      %p246 = scmp.eq.s32.totalorder %s36, 0
      %p247 = por %p245, %p246
      %s248 = ssub.s32 %s30, %s37
      %p249 = scmp.eq.s32.totalorder %s248, 0
      %s251 = sadd.s32 %s250, 1
      %s252 = scalar_select %p249, %s250, %s251
      %p255 = pneg %p249
      %p256 = scmp.eq.s32.totalorder %s30, 3
      %p257 = por %p255, %p256
      %p258 = scmp.ne.s32.totalorder %s250, %s253
      %p259 = scmp.eq.s32.totalorder %s30, 0
      %p260 = por %p258, %p259
      %p261 = scmp.ne.s32.totalorder %s250, %s253
      %p262 = scmp.eq.s32.totalorder %s35, 3
      %p263 = por %p261, %p262
      %p264 = scmp.ne.s32.totalorder %s253, %s254
      %p265 = scmp.eq.s32.totalorder %s35, 0
      %p266 = por %p264, %p265
      %p267 = scmp.ne.s32.totalorder %s253, %s254
      %p268 = scmp.eq.s32.totalorder %s36, 3
      %p269 = por %p267, %p268
      %p271 = scmp.ne.s32.totalorder %s254, %s270
      %p272 = scmp.eq.s32.totalorder %s36, 0
      %p273 = por %p271, %p272
      %s275 = sadd.s32 %s274, 1
      %p278 = scmp.eq.s32.totalorder %s30, 3
      %p279 = scmp.ne.s32.totalorder %s274, %s276
      %p280 = scmp.eq.s32.totalorder %s30, 0
      %p281 = por %p279, %p280
      %p282 = scmp.ne.s32.totalorder %s274, %s276
      %p283 = scmp.eq.s32.totalorder %s35, 3
      %p284 = por %p282, %p283
      %p285 = scmp.ne.s32.totalorder %s276, %s277
      %p286 = scmp.eq.s32.totalorder %s35, 0
      %p287 = por %p285, %p286
      %p288 = scmp.ne.s32.totalorder %s276, %s277
      %p289 = scmp.eq.s32.totalorder %s36, 3
      %p290 = por %p288, %p289
      %p292 = scmp.ne.s32.totalorder %s277, %s291
      %p293 = scmp.eq.s32.totalorder %s36, 0
      %p294 = por %p292, %p293
      %s296 = sadd.s32 %s295, 1
      %p299 = scmp.eq.s32.totalorder %s30, 3
      %p300 = scmp.ne.s32.totalorder %s295, %s297
      %p301 = scmp.eq.s32.totalorder %s30, 0
      %p302 = por %p300, %p301
      %p303 = scmp.ne.s32.totalorder %s295, %s297
      %p304 = scmp.eq.s32.totalorder %s35, 3
      %p305 = por %p303, %p304
      %p306 = scmp.ne.s32.totalorder %s297, %s298
      %p307 = scmp.eq.s32.totalorder %s35, 0
      %p308 = por %p306, %p307
      %p309 = scmp.ne.s32.totalorder %s297, %s298
      %p310 = scmp.eq.s32.totalorder %s36, 3
      %p311 = por %p309, %p310
      %p313 = scmp.ne.s32.totalorder %s298, %s312
      %p314 = scmp.eq.s32.totalorder %s36, 0
      %p315 = por %p313, %p314
      %s317 = sadd.s32 %s316, 1
      %p320 = scmp.eq.s32.totalorder %s30, 3
      %p321 = scmp.ne.s32.totalorder %s316, %s318
      %p322 = scmp.eq.s32.totalorder %s30, 0
      %p323 = por %p321, %p322
      %p324 = scmp.ne.s32.totalorder %s316, %s318
      %p325 = scmp.eq.s32.totalorder %s35, 3
      %p326 = por %p324, %p325
      %p327 = scmp.ne.s32.totalorder %s318, %s319
      %p328 = scmp.eq.s32.totalorder %s35, 0
      %p329 = por %p327, %p328
      %p330 = scmp.ne.s32.totalorder %s318, %s319
      %p331 = scmp.eq.s32.totalorder %s36, 3
      %p332 = por %p330, %p331
      %p334 = scmp.ne.s32.totalorder %s319, %s333
      %p335 = scmp.eq.s32.totalorder %s36, 0
      %p336 = por %p334, %p335
      %s338 = sadd.s32 %s337, 1
      %p341 = scmp.eq.s32.totalorder %s30, 3
      %p342 = scmp.ne.s32.totalorder %s337, %s339
      %p343 = scmp.eq.s32.totalorder %s30, 0
      %p344 = por %p342, %p343
      %p345 = scmp.ne.s32.totalorder %s337, %s339
      %p346 = scmp.eq.s32.totalorder %s35, 3
      %p347 = por %p345, %p346
      %p348 = scmp.ne.s32.totalorder %s339, %s340
      %p349 = scmp.eq.s32.totalorder %s35, 0
      %p350 = por %p348, %p349
      %p351 = scmp.ne.s32.totalorder %s339, %s340
      %p352 = scmp.eq.s32.totalorder %s36, 3
      %p353 = por %p351, %p352
      %p355 = scmp.ne.s32.totalorder %s340, %s354
      %p356 = scmp.eq.s32.totalorder %s36, 0
      %p357 = por %p355, %p356
      %p358 = scmp.le.s32.totalorder 1, %s30
      %p359 = scmp.lt.s32.totalorder %s30, 5
      %p360 = pnand %p358, %p359
      %p361 = pneg %p360
      // Predicated region
      $region9: #{deep_wifi_cnn_forward.1} parent=5 // pred_check
        _
      $region10: #{deep_wifi_cnn_forward.1} parent=5 // pred_check_branch
        %363 = sbr.rel (%p360) target = $region12
      $region11: #{deep_wifi_cnn_forward.1} parent=5 // pred_region
        %s364 = ssub.s32 %s30, 1
        // Predicated region
        $region13: #{deep_wifi_cnn_forward.1} parent=11 // pred_check
          %p365 = pneg %p51
        $region14: #{deep_wifi_cnn_forward.1} parent=11 // pred_check_branch
          %367 = sbr.rel (%p365) target = $region16
        $region15: #{deep_wifi_cnn_forward.1} parent=11 // pred_region
          _
        $region16: #{deep_wifi_cnn_forward.1} parent=11 // pred_fallthru
          _
        // Predicated region
        $region17: #{deep_wifi_cnn_forward.1} parent=11 // pred_check
          %p368 = pneg %p72
        $region18: #{deep_wifi_cnn_forward.1} parent=11 // pred_check_branch
          %370 = sbr.rel (%p368) target = $region20
        $region19: #{deep_wifi_cnn_forward.1} parent=11 // pred_region
          %372 = vsyncadd [#allocation8], 0
          %s373 = sshll.u32 %s1, 4
          %s374 = int_to_ptr.hbm [resolvable:$true] %s373
          %s375 = sshll.u32 [#allocation7], 4
          %s376 = int_to_ptr.vmem [resolvable:$true] %s375
          %381 = dma.hbm_to_vmem [thread:$0]  %s374, 192, %s376, [#allocation8], 64, 64, 4
        $region20: #{deep_wifi_cnn_forward.1} parent=11 // pred_fallthru
          _
        // Predicated region
        $region21: #{deep_wifi_cnn_forward.1} parent=11 // pred_check
          %p382 = pneg %p93
        $region22: #{deep_wifi_cnn_forward.1} parent=11 // pred_check_branch
          %384 = sbr.rel (%p382) target = $region24
        $region23: #{deep_wifi_cnn_forward.1} parent=11 // pred_region
          %386 = vsyncadd [#allocation11], 0
          %s388 = sshll.u32 %s2, 4
          %s389 = int_to_ptr.hbm [resolvable:$true] %s388
          %s390 = sshll.u32 [#allocation10], 4
          %s391 = int_to_ptr.vmem [resolvable:$true] %s390
          %393 = dma.hbm_to_vmem [thread:$0]  %s389, 16, %s391, [#allocation11]
        $region24: #{deep_wifi_cnn_forward.1} parent=11 // pred_fallthru
          _
        // Predicated region
        $region25: #{deep_wifi_cnn_forward.1} parent=11 // pred_check
          %p394 = pneg %p114
        $region26: #{deep_wifi_cnn_forward.1} parent=11 // pred_check_branch
          %396 = sbr.rel (%p394) target = $region28
        $region27: #{deep_wifi_cnn_forward.1} parent=11 // pred_region
          %398 = vsyncadd [#allocation11], 0
          %s400 = sshll.u32 %s3, 4
          %s401 = int_to_ptr.hbm [resolvable:$true] %s400
          %s402 = sshll.u32 [#allocation12], 4
          %s403 = int_to_ptr.vmem [resolvable:$true] %s402
          %405 = dma.hbm_to_vmem [thread:$0]  %s401, 16, %s403, [#allocation11]
        $region28: #{deep_wifi_cnn_forward.1} parent=11 // pred_fallthru
          _
        // Predicated region
        $region29: #{deep_wifi_cnn_forward.1} parent=11 // pred_check
          %p406 = pneg %p135
        $region30: #{deep_wifi_cnn_forward.1} parent=11 // pred_check_branch
          %408 = sbr.rel (%p406) target = $region32
        $region31: #{deep_wifi_cnn_forward.1} parent=11 // pred_region
          %410 = vsyncadd [#allocation14], 0
          %s411 = sshll.u32 %s4, 4
          %s412 = int_to_ptr.hbm [resolvable:$true] %s411
          %s413 = sshll.u32 [#allocation13], 4
          %s414 = int_to_ptr.vmem [resolvable:$true] %s413
          %419 = dma.hbm_to_vmem [thread:$0]  %s412, 3072, %s414, [#allocation14], 64, 64, 4
        $region32: #{deep_wifi_cnn_forward.1} parent=11 // pred_fallthru
          _
        // Predicated region
        $region33: #{deep_wifi_cnn_forward.1} parent=11 // pred_check
          %p420 = pneg %p156
        $region34: #{deep_wifi_cnn_forward.1} parent=11 // pred_check_branch
          %422 = sbr.rel (%p420) target = $region36
        $region35: #{deep_wifi_cnn_forward.1} parent=11 // pred_region
          %424 = vsyncadd [#allocation14], 0
          %s426 = sshll.u32 %s5, 4
          %s427 = int_to_ptr.hbm [resolvable:$true] %s426
          %s428 = sshll.u32 [#allocation15], 4
          %s429 = int_to_ptr.vmem [resolvable:$true] %s428
          %431 = dma.hbm_to_vmem [thread:$0]  %s427, 16, %s429, [#allocation14]
        $region36: #{deep_wifi_cnn_forward.1} parent=11 // pred_fallthru
          _
        // Predicated region
        $region37: #{deep_wifi_cnn_forward.1} parent=11 // pred_check
          %p432 = pneg %p177
        $region38: #{deep_wifi_cnn_forward.1} parent=11 // pred_check_branch
          %434 = sbr.rel (%p432) target = $region40
        $region39: #{deep_wifi_cnn_forward.1} parent=11 // pred_region
          %436 = vsyncadd [#allocation17], 0
          %s438 = sshll.u32 %s6, 4
          %s439 = int_to_ptr.hbm [resolvable:$true] %s438
          %s440 = sshll.u32 [#allocation16], 4
          %s441 = int_to_ptr.vmem [resolvable:$true] %s440
          %443 = dma.hbm_to_vmem [thread:$0]  %s439, 16, %s441, [#allocation17]
        $region40: #{deep_wifi_cnn_forward.1} parent=11 // pred_fallthru
          _
        // Predicated region
        $region41: #{deep_wifi_cnn_forward.1} parent=11 // pred_check
          %p444 = pneg %p198
        $region42: #{deep_wifi_cnn_forward.1} parent=11 // pred_check_branch
          %446 = sbr.rel (%p444) target = $region44
        $region43: #{deep_wifi_cnn_forward.1} parent=11 // pred_region
          %448 = vsyncadd [#allocation17], 0
          %s449 = sshll.u32 %s7, 4
          %s450 = int_to_ptr.hbm [resolvable:$true] %s449
          %s451 = sshll.u32 [#allocation18], 4
          %s452 = int_to_ptr.vmem [resolvable:$true] %s451
          %457 = dma.hbm_to_vmem [thread:$0]  %s450, 6144, %s452, [#allocation17], 128, 128, 8
        $region44: #{deep_wifi_cnn_forward.1} parent=11 // pred_fallthru
          _
        // Predicated region
        $region45: #{deep_wifi_cnn_forward.1} parent=11 // pred_check
          %p458 = pneg %p219
        $region46: #{deep_wifi_cnn_forward.1} parent=11 // pred_check_branch
          %460 = sbr.rel (%p458) target = $region48
        $region47: #{deep_wifi_cnn_forward.1} parent=11 // pred_region
          %462 = vsyncadd [#allocation20], 0
          %s464 = sshll.u32 %s8, 4
          %s465 = int_to_ptr.hbm [resolvable:$true] %s464
          %s466 = sshll.u32 [#allocation19], 4
          %s467 = int_to_ptr.vmem [resolvable:$true] %s466
          %469 = dma.hbm_to_vmem [thread:$0]  %s465, 32, %s467, [#allocation20]
        $region48: #{deep_wifi_cnn_forward.1} parent=11 // pred_fallthru
          _
        // Predicated region
        $region49: #{deep_wifi_cnn_forward.1} parent=11 // pred_check
          %p470 = pneg %p240
        $region50: #{deep_wifi_cnn_forward.1} parent=11 // pred_check_branch
          %472 = sbr.rel (%p470) target = $region52
        $region51: #{deep_wifi_cnn_forward.1} parent=11 // pred_region
          %474 = vsyncadd [#allocation20], 0
          %s476 = sshll.u32 %s9, 4
          %s477 = int_to_ptr.hbm [resolvable:$true] %s476
          %s478 = sshll.u32 [#allocation21], 4
          %s479 = int_to_ptr.vmem [resolvable:$true] %s478
          %481 = dma.hbm_to_vmem [thread:$0]  %s477, 32, %s479, [#allocation20]
        $region52: #{deep_wifi_cnn_forward.1} parent=11 // pred_fallthru
          _
        // Predicated region
        $region53: #{deep_wifi_cnn_forward.1} parent=11 // pred_check
          %p482 = pneg %p287
        $region54: #{deep_wifi_cnn_forward.1} parent=11 // pred_check_branch
          %484 = sbr.rel (%p482) target = $region56
        $region55: #{deep_wifi_cnn_forward.1} parent=11 // pred_region
          %486 = vsyncadd [#allocation23], 0
          %s488 = sshll.u32 %s11, 4
          %s489 = int_to_ptr.hbm [resolvable:$true] %s488
          %s490 = sshll.u32 [#allocation24], 4
          %s491 = int_to_ptr.vmem [resolvable:$true] %s490
          %493 = dma.hbm_to_vmem [thread:$0]  %s489, 64, %s491, [#allocation23]
        $region56: #{deep_wifi_cnn_forward.1} parent=11 // pred_fallthru
          _
        // Predicated region
        $region57: #{deep_wifi_cnn_forward.1} parent=11 // pred_check
          %p494 = pneg %p308
        $region58: #{deep_wifi_cnn_forward.1} parent=11 // pred_check_branch
          %496 = sbr.rel (%p494) target = $region60
        $region59: #{deep_wifi_cnn_forward.1} parent=11 // pred_region
          %498 = vsyncadd [#allocation26], 0
          %s499 = sshll.u32 %s12, 4
          %s500 = int_to_ptr.hbm [resolvable:$true] %s499
          %s501 = sshll.u32 [#allocation25], 4
          %s502 = int_to_ptr.vmem [resolvable:$true] %s501
          %507 = dma.hbm_to_vmem [thread:$0]  %s500, 4096, %s502, [#allocation26], 64, 64, 4
        $region60: #{deep_wifi_cnn_forward.1} parent=11 // pred_fallthru
          _
        // Predicated region
        $region61: #{deep_wifi_cnn_forward.1} parent=11 // pred_check
          %p508 = pneg %p329
        $region62: #{deep_wifi_cnn_forward.1} parent=11 // pred_check_branch
          %510 = sbr.rel (%p508) target = $region64
        $region63: #{deep_wifi_cnn_forward.1} parent=11 // pred_region
          %512 = vsyncadd [#allocation26], 0
          %s514 = sshll.u32 %s13, 4
          %s515 = int_to_ptr.hbm [resolvable:$true] %s514
          %s516 = sshll.u32 [#allocation27], 4
          %s517 = int_to_ptr.vmem [resolvable:$true] %s516
          %519 = dma.hbm_to_vmem [thread:$0]  %s515, 16, %s517, [#allocation26]
        $region64: #{deep_wifi_cnn_forward.1} parent=11 // pred_fallthru
          _
      $region12: #{deep_wifi_cnn_forward.1} parent=5 // pred_fallthru
        _
      %p520 = scmp.lt.s32.totalorder %s30, 4
      // Predicated region
      $region65: #{deep_wifi_cnn_forward.1} parent=5 // pred_check
        %p521 = pneg %p520
      $region66: #{deep_wifi_cnn_forward.1} parent=5 // pred_check_branch
        %523 = sbr.rel (%p521) target = $region68
      $region67: #{deep_wifi_cnn_forward.1} parent=5 // pred_region
        // Predicated region
        $region69: #{deep_wifi_cnn_forward.1} parent=67 // pred_check
          %p524 = pneg %p260
        $region70: #{deep_wifi_cnn_forward.1} parent=67 // pred_check_branch
          %526 = sbr.rel (%p524) target = $region72
        $region71: #{deep_wifi_cnn_forward.1} parent=67 // pred_region
          %s527 = sand.u32 %s30, 1
          %s528 = scalar_lea.sflag [#allocation23], %s527
          %s529 = sand.u32 %s250, 1
          %s530 = smul.addr %s529, 2048
          %s531 = scalar_lea.vmem [#allocation22], %s530
          %s532 = smul.u32 128, %s30
          %534 = vsyncadd %s528, 0
          %s535 = smul.addr %s532, 4
          %s536 = smul.addr %s535, 4
          %s537 = scalar_lea.hbm %s10, %s536
          %s538 = sshll.u32 %s537, 4
          %s539 = int_to_ptr.hbm [resolvable:$true] %s538
          %s540 = sshll.u32 %s531, 4
          %s541 = int_to_ptr.vmem [resolvable:$true] %s540
          %546 = dma.hbm_to_vmem [thread:$0]  %s539, 32768, %s541, %s528, 256, 256, 16
        $region72: #{deep_wifi_cnn_forward.1} parent=67 // pred_fallthru
          _
      $region68: #{deep_wifi_cnn_forward.1} parent=5 // pred_fallthru
        _
      %p547 = scmp.le.s32.totalorder 1, %s30
      %p548 = scmp.lt.s32.totalorder %s30, 5
      %p549 = pnand %p547, %p548
      %p550 = pneg %p549
      // Predicated region
      $region73: #{deep_wifi_cnn_forward.1} parent=5 // pred_check
        _
      $region74: #{deep_wifi_cnn_forward.1} parent=5 // pred_check_branch
        %552 = sbr.rel (%p549) target = $region76
      $region75: #{deep_wifi_cnn_forward.1} parent=5 // pred_region
        %s553 = ssub.s32 %s30, 1
        // Predicated region
        $region77: #{deep_wifi_cnn_forward.1} parent=75 // pred_check
          %p554 = pneg %p72
        $region78: #{deep_wifi_cnn_forward.1} parent=75 // pred_check_branch
          %556 = sbr.rel (%p554) target = $region80
        $region79: #{deep_wifi_cnn_forward.1} parent=75 // pred_region
          %558 = dma.done [#allocation8], 192
        $region80: #{deep_wifi_cnn_forward.1} parent=75 // pred_fallthru
          _
        // Predicated region
        $region81: #{deep_wifi_cnn_forward.1} parent=75 // pred_check
          %p559 = pneg %p93
        $region82: #{deep_wifi_cnn_forward.1} parent=75 // pred_check_branch
          %561 = sbr.rel (%p559) target = $region84
        $region83: #{deep_wifi_cnn_forward.1} parent=75 // pred_region
          %563 = dma.done [#allocation11], 16
        $region84: #{deep_wifi_cnn_forward.1} parent=75 // pred_fallthru
          _
        // Predicated region
        $region85: #{deep_wifi_cnn_forward.1} parent=75 // pred_check
          %p564 = pneg %p114
        $region86: #{deep_wifi_cnn_forward.1} parent=75 // pred_check_branch
          %566 = sbr.rel (%p564) target = $region88
        $region87: #{deep_wifi_cnn_forward.1} parent=75 // pred_region
          %568 = dma.done [#allocation11], 16
        $region88: #{deep_wifi_cnn_forward.1} parent=75 // pred_fallthru
          _
        // Predicated region
        $region89: #{deep_wifi_cnn_forward.1} parent=75 // pred_check
          %p569 = pneg %p135
        $region90: #{deep_wifi_cnn_forward.1} parent=75 // pred_check_branch
          %571 = sbr.rel (%p569) target = $region92
        $region91: #{deep_wifi_cnn_forward.1} parent=75 // pred_region
          %573 = dma.done [#allocation14], 3072
        $region92: #{deep_wifi_cnn_forward.1} parent=75 // pred_fallthru
          _
        // Predicated region
        $region93: #{deep_wifi_cnn_forward.1} parent=75 // pred_check
          %p574 = pneg %p156
        $region94: #{deep_wifi_cnn_forward.1} parent=75 // pred_check_branch
          %576 = sbr.rel (%p574) target = $region96
        $region95: #{deep_wifi_cnn_forward.1} parent=75 // pred_region
          %578 = dma.done [#allocation14], 16
        $region96: #{deep_wifi_cnn_forward.1} parent=75 // pred_fallthru
          _
        // Predicated region
        $region97: #{deep_wifi_cnn_forward.1} parent=75 // pred_check
          %p579 = pneg %p177
        $region98: #{deep_wifi_cnn_forward.1} parent=75 // pred_check_branch
          %581 = sbr.rel (%p579) target = $region100
        $region99: #{deep_wifi_cnn_forward.1} parent=75 // pred_region
          %583 = dma.done [#allocation17], 16
        $region100: #{deep_wifi_cnn_forward.1} parent=75 // pred_fallthru
          _
        // Predicated region
        $region101: #{deep_wifi_cnn_forward.1} parent=75 // pred_check
          %p584 = pneg %p198
        $region102: #{deep_wifi_cnn_forward.1} parent=75 // pred_check_branch
          %586 = sbr.rel (%p584) target = $region104
        $region103: #{deep_wifi_cnn_forward.1} parent=75 // pred_region
          %588 = dma.done [#allocation17], 6144
        $region104: #{deep_wifi_cnn_forward.1} parent=75 // pred_fallthru
          _
        // Predicated region
        $region105: #{deep_wifi_cnn_forward.1} parent=75 // pred_check
          %p589 = pneg %p219
        $region106: #{deep_wifi_cnn_forward.1} parent=75 // pred_check_branch
          %591 = sbr.rel (%p589) target = $region108
        $region107: #{deep_wifi_cnn_forward.1} parent=75 // pred_region
          %593 = dma.done [#allocation20], 32
        $region108: #{deep_wifi_cnn_forward.1} parent=75 // pred_fallthru
          _
        // Predicated region
        $region109: #{deep_wifi_cnn_forward.1} parent=75 // pred_check
          %p594 = pneg %p240
        $region110: #{deep_wifi_cnn_forward.1} parent=75 // pred_check_branch
          %596 = sbr.rel (%p594) target = $region112
        $region111: #{deep_wifi_cnn_forward.1} parent=75 // pred_region
          %598 = dma.done [#allocation20], 32
        $region112: #{deep_wifi_cnn_forward.1} parent=75 // pred_fallthru
          _
        %s599 = sand.u32 %s35, 1
        %s600 = scalar_lea.sflag [#allocation23], %s599
        %s601 = sand.u32 %s253, 1
        %s602 = smul.addr %s601, 2048
        %s603 = scalar_lea.vmem [#allocation22], %s602
        // Predicated region
        $region113: #{deep_wifi_cnn_forward.1} parent=75 // pred_check
          %p604 = pneg %p266
        $region114: #{deep_wifi_cnn_forward.1} parent=75 // pred_check_branch
          %606 = sbr.rel (%p604) target = $region116
        $region115: #{deep_wifi_cnn_forward.1} parent=75 // pred_region
          %608 = dma.done %s600, 32768
        $region116: #{deep_wifi_cnn_forward.1} parent=75 // pred_fallthru
          _
        // Predicated region
        $region117: #{deep_wifi_cnn_forward.1} parent=75 // pred_check
          %p609 = pneg %p287
        $region118: #{deep_wifi_cnn_forward.1} parent=75 // pred_check_branch
          %611 = sbr.rel (%p609) target = $region120
        $region119: #{deep_wifi_cnn_forward.1} parent=75 // pred_region
          %613 = dma.done [#allocation23], 64
        $region120: #{deep_wifi_cnn_forward.1} parent=75 // pred_fallthru
          _
        // Predicated region
        $region121: #{deep_wifi_cnn_forward.1} parent=75 // pred_check
          %p614 = pneg %p308
        $region122: #{deep_wifi_cnn_forward.1} parent=75 // pred_check_branch
          %616 = sbr.rel (%p614) target = $region124
        $region123: #{deep_wifi_cnn_forward.1} parent=75 // pred_region
          %618 = dma.done [#allocation26], 4096
        $region124: #{deep_wifi_cnn_forward.1} parent=75 // pred_fallthru
          _
        // Predicated region
        $region125: #{deep_wifi_cnn_forward.1} parent=75 // pred_check
          %p619 = pneg %p329
        $region126: #{deep_wifi_cnn_forward.1} parent=75 // pred_check_branch
          %621 = sbr.rel (%p619) target = $region128
        $region127: #{deep_wifi_cnn_forward.1} parent=75 // pred_region
          %623 = dma.done [#allocation26], 16
        $region128: #{deep_wifi_cnn_forward.1} parent=75 // pred_fallthru
          _
        %p624 = pneg %p51
        %p625 = pneg %p48
        %p626 = pneg %p72
        %p627 = pneg %p69
        %p628 = pneg %p93
        %p629 = pneg %p90
        %p630 = pneg %p114
        %p631 = pneg %p111
        %p632 = pneg %p135
        %p633 = pneg %p132
        %p634 = pneg %p156
        %p635 = pneg %p153
        %p636 = pneg %p177
        %p637 = pneg %p174
        %p638 = pneg %p198
        %p639 = pneg %p195
        %p640 = pneg %p219
        %p641 = pneg %p216
        %p642 = pneg %p240
        %p643 = pneg %p237
        %s644 = sand.u32 %s35, 1
        %s645 = scalar_lea.sflag [#allocation23], %s644
        %s646 = sand.u32 %s253, 1
        %s647 = smul.addr %s646, 2048
        %s648 = scalar_lea.vmem [#allocation22], %s647
        %p649 = pneg %p266
        %p650 = pneg %p263
        %p651 = pneg %p287
        %p652 = pneg %p284
        %p653 = pneg %p308
        %p654 = pneg %p305
        %p655 = pneg %p329
        %p656 = pneg %p326
        %p657 = pneg %p350
        %p658 = pneg %p347
        %s659 = smul.u32 128, %s35
        %p660 = scmp.eq.s32.totalorder %s35, 0
        // Predicated region
        $region129: #{deep_wifi_cnn_forward.1} parent=75 // pred_check
          %p661 = pneg %p660
        $region130: #{deep_wifi_cnn_forward.1} parent=75 // pred_check_branch
          %663 = sbr.rel (%p661) target = $region132
        $region131: #{deep_wifi_cnn_forward.1} parent=75 // pred_region
          %vm664 = vcmask 31744
          %665 = vst.msk [vmem:[#allocation2] sm:$0xff] %vm664, 0.0
          %666 = vst.msk [vmem:[#allocation2 + $0x8] sm:$0xff] %vm664, 0.0
          %667 = vst.msk [vmem:[#allocation2 + $0x10] sm:$0xff] %vm664, 0.0
          %668 = vst.msk [vmem:[#allocation2 + $0x18] sm:$0xff] %vm664, 0.0
          %669 = vst.msk [vmem:[#allocation2 + $0x20] sm:$0xff] %vm664, 0.0
          %670 = vst.msk [vmem:[#allocation2 + $0x28] sm:$0xff] %vm664, 0.0
          %671 = vst.msk [vmem:[#allocation2 + $0x30] sm:$0xff] %vm664, 0.0
          %672 = vst.msk [vmem:[#allocation2 + $0x38] sm:$0xff] %vm664, 0.0
          %v673 = vld [vmem:[%s0] sm:$0xff]
          %v674 = vld [vmem:[%s0 + $0x8] sm:$0xff]
          %v675 = vld [vmem:[%s0 + $0x10] sm:$0xff]
          %v676 = vld [vmem:[%s0 + $0x18] sm:$0xff]
          %677 = vst.msk [vmem:[#allocation2 + $0x8] sm:$0xff] %vm664, %v673
          %678 = vst.msk [vmem:[#allocation2 + $0x10] sm:$0xff] %vm664, %v674
          %679 = vst.msk [vmem:[#allocation2 + $0x28] sm:$0xff] %vm664, %v675
          %680 = vst.msk [vmem:[#allocation2 + $0x30] sm:$0xff] %vm664, %v676
          %v681 = vld [vmem:[#allocation7] sm:$0xf]
          %v682 = vld [vmem:[#allocation7 + $0x4] sm:$0xf]
          %v683 = vld [vmem:[#allocation7 + $0x8] sm:$0xf]
          %v684 = vld [vmem:[#allocation2 + $0x7] sm:$0xff]
          %v685 = vld [vmem:[#allocation2 + $0xf] sm:$0xff]
          %v686 = vld [vmem:[#allocation2 + $0x27] sm:$0xff]
          %v687 = vld [vmem:[#allocation2 + $0x2f] sm:$0xff]
          %689 = vset.pattern.permute.xlu0 0
          %690 = vperm.xlu0 %689, %v684
          %v691 = vpop.permute.xlu0 %690
          %694 = vset.pattern.permute.xlu0 0
          %695 = vperm.xlu0 %694, %v685
          %v696 = vpop.permute.xlu0 %695
          %699 = vset.pattern.permute.xlu0 0
          %700 = vperm.xlu0 %699, %v686
          %v701 = vpop.permute.xlu0 %700
          %704 = vset.pattern.permute.xlu0 0
          %705 = vperm.xlu0 %704, %v687
          %v706 = vpop.permute.xlu0 %705
          %v708 = vperm.slane %v681, 0
          %v709 = vmul.f32 %v691, %v708
          %v710 = vmul.f32 %v696, %v708
          %v711 = vmul.f32 %v701, %v708
          %v712 = vmul.f32 %v706, %v708
          %v713 = vadd.f32 %v709, 0.0
          %v714 = vadd.f32 %v710, 0.0
          %v715 = vadd.f32 %v711, 0.0
          %v716 = vadd.f32 %v712, 0.0
          %717 = vset.pattern.permute.xlu0 1
          %718 = vperm.xlu0 %717, %v684
          %v719 = vpop.permute.xlu0 %718
          %721 = vset.pattern.permute.xlu0 1
          %722 = vperm.xlu0 %721, %v685
          %v723 = vpop.permute.xlu0 %722
          %725 = vset.pattern.permute.xlu0 1
          %726 = vperm.xlu0 %725, %v686
          %v727 = vpop.permute.xlu0 %726
          %729 = vset.pattern.permute.xlu0 1
          %730 = vperm.xlu0 %729, %v687
          %v731 = vpop.permute.xlu0 %730
          %v733 = vperm.slane %v681, 1
          %v734 = vmul.f32 %v719, %v733
          %v735 = vmul.f32 %v723, %v733
          %v736 = vmul.f32 %v727, %v733
          %v737 = vmul.f32 %v731, %v733
          %v738 = vadd.f32 %v713, %v734
          %v739 = vadd.f32 %v714, %v735
          %v740 = vadd.f32 %v715, %v736
          %v741 = vadd.f32 %v716, %v737
          %742 = vset.pattern.permute.xlu0 2
          %743 = vperm.xlu0 %742, %v684
          %v744 = vpop.permute.xlu0 %743
          %746 = vset.pattern.permute.xlu0 2
          %747 = vperm.xlu0 %746, %v685
          %v748 = vpop.permute.xlu0 %747
          %750 = vset.pattern.permute.xlu0 2
          %751 = vperm.xlu0 %750, %v686
          %v752 = vpop.permute.xlu0 %751
          %754 = vset.pattern.permute.xlu0 2
          %755 = vperm.xlu0 %754, %v687
          %v756 = vpop.permute.xlu0 %755
          %v758 = vperm.slane %v681, 2
          %v759 = vmul.f32 %v744, %v758
          %v760 = vmul.f32 %v748, %v758
          %v761 = vmul.f32 %v752, %v758
          %v762 = vmul.f32 %v756, %v758
          %v763 = vadd.f32 %v738, %v759
          %v764 = vadd.f32 %v739, %v760
          %v765 = vadd.f32 %v740, %v761
          %v766 = vadd.f32 %v741, %v762
          %767 = vset.pattern.permute.xlu0 3
          %768 = vperm.xlu0 %767, %v684
          %v769 = vpop.permute.xlu0 %768
          %771 = vset.pattern.permute.xlu0 3
          %772 = vperm.xlu0 %771, %v685
          %v773 = vpop.permute.xlu0 %772
          %775 = vset.pattern.permute.xlu0 3
          %776 = vperm.xlu0 %775, %v686
          %v777 = vpop.permute.xlu0 %776
          %779 = vset.pattern.permute.xlu0 3
          %780 = vperm.xlu0 %779, %v687
          %v781 = vpop.permute.xlu0 %780
          %v783 = vperm.slane %v681, 3
          %v784 = vmul.f32 %v769, %v783
          %v785 = vmul.f32 %v773, %v783
          %v786 = vmul.f32 %v777, %v783
          %v787 = vmul.f32 %v781, %v783
          %v788 = vadd.f32 %v763, %v784
          %v789 = vadd.f32 %v764, %v785
          %v790 = vadd.f32 %v765, %v786
          %v791 = vadd.f32 %v766, %v787
          %v792 = vld [vmem:[#allocation2 + $0x8] sm:$0xff]
          %v793 = vld [vmem:[#allocation2 + $0x10] sm:$0xff]
          %v794 = vld [vmem:[#allocation2 + $0x28] sm:$0xff]
          %v795 = vld [vmem:[#allocation2 + $0x30] sm:$0xff]
          %797 = vset.pattern.permute.xlu0 0
          %798 = vperm.xlu0 %797, %v792
          %v799 = vpop.permute.xlu0 %798
          %802 = vset.pattern.permute.xlu0 0
          %803 = vperm.xlu0 %802, %v793
          %v804 = vpop.permute.xlu0 %803
          %807 = vset.pattern.permute.xlu0 0
          %808 = vperm.xlu0 %807, %v794
          %v809 = vpop.permute.xlu0 %808
          %812 = vset.pattern.permute.xlu0 0
          %813 = vperm.xlu0 %812, %v795
          %v814 = vpop.permute.xlu0 %813
          %v816 = vperm.slane %v682, 0
          %v817 = vmul.f32 %v799, %v816
          %v818 = vmul.f32 %v804, %v816
          %v819 = vmul.f32 %v809, %v816
          %v820 = vmul.f32 %v814, %v816
          %v821 = vadd.f32 %v788, %v817
          %v822 = vadd.f32 %v789, %v818
          %v823 = vadd.f32 %v790, %v819
          %v824 = vadd.f32 %v791, %v820
          %825 = vset.pattern.permute.xlu0 1
          %826 = vperm.xlu0 %825, %v792
          %v827 = vpop.permute.xlu0 %826
          %829 = vset.pattern.permute.xlu0 1
          %830 = vperm.xlu0 %829, %v793
          %v831 = vpop.permute.xlu0 %830
          %833 = vset.pattern.permute.xlu0 1
          %834 = vperm.xlu0 %833, %v794
          %v835 = vpop.permute.xlu0 %834
          %837 = vset.pattern.permute.xlu0 1
          %838 = vperm.xlu0 %837, %v795
          %v839 = vpop.permute.xlu0 %838
          %v841 = vperm.slane %v682, 1
          %v842 = vmul.f32 %v827, %v841
          %v843 = vmul.f32 %v831, %v841
          %v844 = vmul.f32 %v835, %v841
          %v845 = vmul.f32 %v839, %v841
          %v846 = vadd.f32 %v821, %v842
          %v847 = vadd.f32 %v822, %v843
          %v848 = vadd.f32 %v823, %v844
          %v849 = vadd.f32 %v824, %v845
          %850 = vset.pattern.permute.xlu0 2
          %851 = vperm.xlu0 %850, %v792
          %v852 = vpop.permute.xlu0 %851
          %854 = vset.pattern.permute.xlu0 2
          %855 = vperm.xlu0 %854, %v793
          %v856 = vpop.permute.xlu0 %855
          %858 = vset.pattern.permute.xlu0 2
          %859 = vperm.xlu0 %858, %v794
          %v860 = vpop.permute.xlu0 %859
          %862 = vset.pattern.permute.xlu0 2
          %863 = vperm.xlu0 %862, %v795
          %v864 = vpop.permute.xlu0 %863
          %v866 = vperm.slane %v682, 2
          %v867 = vmul.f32 %v852, %v866
          %v868 = vmul.f32 %v856, %v866
          %v869 = vmul.f32 %v860, %v866
          %v870 = vmul.f32 %v864, %v866
          %v871 = vadd.f32 %v846, %v867
          %v872 = vadd.f32 %v847, %v868
          %v873 = vadd.f32 %v848, %v869
          %v874 = vadd.f32 %v849, %v870
          %875 = vset.pattern.permute.xlu0 3
          %876 = vperm.xlu0 %875, %v792
          %v877 = vpop.permute.xlu0 %876
          %879 = vset.pattern.permute.xlu0 3
          %880 = vperm.xlu0 %879, %v793
          %v881 = vpop.permute.xlu0 %880
          %883 = vset.pattern.permute.xlu0 3
          %884 = vperm.xlu0 %883, %v794
          %v885 = vpop.permute.xlu0 %884
          %887 = vset.pattern.permute.xlu0 3
          %888 = vperm.xlu0 %887, %v795
          %v889 = vpop.permute.xlu0 %888
          %v891 = vperm.slane %v682, 3
          %v892 = vmul.f32 %v877, %v891
          %v893 = vmul.f32 %v881, %v891
          %v894 = vmul.f32 %v885, %v891
          %v895 = vmul.f32 %v889, %v891
          %v896 = vadd.f32 %v871, %v892
          %v897 = vadd.f32 %v872, %v893
          %v898 = vadd.f32 %v873, %v894
          %v899 = vadd.f32 %v874, %v895
          %v900 = vld [vmem:[#allocation2 + $0x9] sm:$0xff]
          %v901 = vld [vmem:[#allocation2 + $0x11] sm:$0xff]
          %v902 = vld [vmem:[#allocation2 + $0x29] sm:$0xff]
          %v903 = vld [vmem:[#allocation2 + $0x31] sm:$0xff]
          %905 = vset.pattern.permute.xlu0 0
          %906 = vperm.xlu0 %905, %v900
          %v907 = vpop.permute.xlu0 %906
          %910 = vset.pattern.permute.xlu0 0
          %911 = vperm.xlu0 %910, %v901
          %v912 = vpop.permute.xlu0 %911
          %915 = vset.pattern.permute.xlu0 0
          %916 = vperm.xlu0 %915, %v902
          %v917 = vpop.permute.xlu0 %916
          %920 = vset.pattern.permute.xlu0 0
          %921 = vperm.xlu0 %920, %v903
          %v922 = vpop.permute.xlu0 %921
          %v924 = vperm.slane %v683, 0
          %v925 = vmul.f32 %v907, %v924
          %v926 = vmul.f32 %v912, %v924
          %v927 = vmul.f32 %v917, %v924
          %v928 = vmul.f32 %v922, %v924
          %v929 = vadd.f32 %v896, %v925
          %v930 = vadd.f32 %v897, %v926
          %v931 = vadd.f32 %v898, %v927
          %v932 = vadd.f32 %v899, %v928
          %933 = vset.pattern.permute.xlu0 1
          %934 = vperm.xlu0 %933, %v900
          %v935 = vpop.permute.xlu0 %934
          %937 = vset.pattern.permute.xlu0 1
          %938 = vperm.xlu0 %937, %v901
          %v939 = vpop.permute.xlu0 %938
          %941 = vset.pattern.permute.xlu0 1
          %942 = vperm.xlu0 %941, %v902
          %v943 = vpop.permute.xlu0 %942
          %945 = vset.pattern.permute.xlu0 1
          %946 = vperm.xlu0 %945, %v903
          %v947 = vpop.permute.xlu0 %946
          %v949 = vperm.slane %v683, 1
          %v950 = vmul.f32 %v935, %v949
          %v951 = vmul.f32 %v939, %v949
          %v952 = vmul.f32 %v943, %v949
          %v953 = vmul.f32 %v947, %v949
          %v954 = vadd.f32 %v929, %v950
          %v955 = vadd.f32 %v930, %v951
          %v956 = vadd.f32 %v931, %v952
          %v957 = vadd.f32 %v932, %v953
          %958 = vset.pattern.permute.xlu0 2
          %959 = vperm.xlu0 %958, %v900
          %v960 = vpop.permute.xlu0 %959
          %962 = vset.pattern.permute.xlu0 2
          %963 = vperm.xlu0 %962, %v901
          %v964 = vpop.permute.xlu0 %963
          %966 = vset.pattern.permute.xlu0 2
          %967 = vperm.xlu0 %966, %v902
          %v968 = vpop.permute.xlu0 %967
          %970 = vset.pattern.permute.xlu0 2
          %971 = vperm.xlu0 %970, %v903
          %v972 = vpop.permute.xlu0 %971
          %v974 = vperm.slane %v683, 2
          %v975 = vmul.f32 %v960, %v974
          %v976 = vmul.f32 %v964, %v974
          %v977 = vmul.f32 %v968, %v974
          %v978 = vmul.f32 %v972, %v974
          %v979 = vadd.f32 %v954, %v975
          %v980 = vadd.f32 %v955, %v976
          %v981 = vadd.f32 %v956, %v977
          %v982 = vadd.f32 %v957, %v978
          %983 = vset.pattern.permute.xlu0 3
          %984 = vperm.xlu0 %983, %v900
          %v985 = vpop.permute.xlu0 %984
          %987 = vset.pattern.permute.xlu0 3
          %988 = vperm.xlu0 %987, %v901
          %v989 = vpop.permute.xlu0 %988
          %991 = vset.pattern.permute.xlu0 3
          %992 = vperm.xlu0 %991, %v902
          %v993 = vpop.permute.xlu0 %992
          %995 = vset.pattern.permute.xlu0 3
          %996 = vperm.xlu0 %995, %v903
          %v997 = vpop.permute.xlu0 %996
          %v999 = vperm.slane %v683, 3
          %v1000 = vmul.f32 %v985, %v999
          %v1001 = vmul.f32 %v989, %v999
          %v1002 = vmul.f32 %v993, %v999
          %v1003 = vmul.f32 %v997, %v999
          %v1004 = vadd.f32 %v979, %v1000
          %v1005 = vadd.f32 %v980, %v1001
          %v1006 = vadd.f32 %v981, %v1002
          %v1007 = vadd.f32 %v982, %v1003
          %v1008 = vld [vmem:[#allocation10] sm:$0x1]
          %v1010 = vperm.slane %v1008, 0
          %v1012 = vmul.f32 %v1004, %v1010
          %v1013 = vmul.f32 %v1005, %v1010
          %v1014 = vmul.f32 %v1006, %v1010
          %v1015 = vmul.f32 %v1007, %v1010
          %v1016 = vld [vmem:[#allocation12] sm:$0x1]
          %v1018 = vperm.slane %v1016, 0
          %v1020 = vadd.f32 %v1012, %v1018
          %v1021 = vadd.f32 %v1013, %v1018
          %v1022 = vadd.f32 %v1014, %v1018
          %v1023 = vadd.f32 %v1015, %v1018
          %v1024 = vmax.f32 %v1020, 0.0
          %v1025 = vmax.f32 %v1021, 0.0
          %v1026 = vmax.f32 %v1022, 0.0
          %v1027 = vmax.f32 %v1023, 0.0
          %1028 = vst [vmem:[#allocation3] sm:$0xff] 0.0
          %1029 = vst [vmem:[#allocation3 + $0x8] sm:$0xff] 0.0
          %1030 = vst [vmem:[#allocation3 + $0x10] sm:$0xff] 0.0
          %1031 = vst [vmem:[#allocation3 + $0x18] sm:$0xff] 0.0
          %1032 = vst [vmem:[#allocation3 + $0x20] sm:$0xff] 0.0
          %1033 = vst [vmem:[#allocation3 + $0x28] sm:$0xff] 0.0
          %1034 = vst [vmem:[#allocation3 + $0x30] sm:$0xff] 0.0
          %1035 = vst [vmem:[#allocation3 + $0x38] sm:$0xff] 0.0
          %1036 = vst [vmem:[#allocation3 + $0x8] sm:$0xff] %v1024
          %1037 = vst [vmem:[#allocation3 + $0x10] sm:$0xff] %v1025
          %1038 = vst [vmem:[#allocation3 + $0x28] sm:$0xff] %v1026
          %1039 = vst [vmem:[#allocation3 + $0x30] sm:$0xff] %v1027
          %v1040 = vld [vmem:[#allocation3 + $0x7] sm:$0xff]
          %v1041 = vld [vmem:[#allocation3 + $0xf] sm:$0xff]
          %v1042 = vld [vmem:[#allocation3 + $0x27] sm:$0xff]
          %v1043 = vld [vmem:[#allocation3 + $0x2f] sm:$0xff]
          %v1044 = vpack.c.bf16 %v1041, %v1040
          %v1045 = vpack.c.bf16 %v1043, %v1042
          %v1046 = vld [vmem:[#allocation13] sm:$0xf]
          %v1047 = vld [vmem:[#allocation13 + $0x4] sm:$0xf]
          %v1048 = vld [vmem:[#allocation13 + $0x8] sm:$0xf]
          %v1049 = vld [vmem:[#allocation13 + $0xc] sm:$0xf]
          %v1050 = vld [vmem:[#allocation13 + $0x10] sm:$0xf]
          %v1051 = vld [vmem:[#allocation13 + $0x14] sm:$0xf]
          %v1052 = vld [vmem:[#allocation13 + $0x18] sm:$0xf]
          %v1053 = vld [vmem:[#allocation13 + $0x1c] sm:$0xf]
          %v1054 = vld [vmem:[#allocation13 + $0x20] sm:$0xf]
          %v1055 = vld [vmem:[#allocation13 + $0x24] sm:$0xf]
          %v1056 = vld [vmem:[#allocation13 + $0x28] sm:$0xf]
          %v1057 = vld [vmem:[#allocation13 + $0x2c] sm:$0xf]
          %v1058 = vld [vmem:[#allocation13 + $0x30] sm:$0xf]
          %v1059 = vld [vmem:[#allocation13 + $0x34] sm:$0xf]
          %v1060 = vld [vmem:[#allocation13 + $0x38] sm:$0xf]
          %v1061 = vld [vmem:[#allocation13 + $0x3c] sm:$0xf]
          %v1062 = vld [vmem:[#allocation3 + $0x8] sm:$0xff]
          %v1063 = vld [vmem:[#allocation3 + $0x10] sm:$0xff]
          %v1064 = vld [vmem:[#allocation3 + $0x28] sm:$0xff]
          %v1065 = vld [vmem:[#allocation3 + $0x30] sm:$0xff]
          %v1066 = vpack.c.bf16 %v1063, %v1062
          %v1067 = vpack.c.bf16 %v1065, %v1064
          %s1068 = scalar_lea.vmem [#allocation13], 64
          %v1069 = vld [vmem:[%s1068] sm:$0xf]
          %v1070 = vld [vmem:[%s1068 + $0x4] sm:$0xf]
          %v1071 = vld [vmem:[%s1068 + $0x8] sm:$0xf]
          %v1072 = vld [vmem:[%s1068 + $0xc] sm:$0xf]
          %v1073 = vld [vmem:[%s1068 + $0x10] sm:$0xf]
          %v1074 = vld [vmem:[%s1068 + $0x14] sm:$0xf]
          %v1075 = vld [vmem:[%s1068 + $0x18] sm:$0xf]
          %v1076 = vld [vmem:[%s1068 + $0x1c] sm:$0xf]
          %v1077 = vld [vmem:[%s1068 + $0x20] sm:$0xf]
          %v1078 = vld [vmem:[%s1068 + $0x24] sm:$0xf]
          %v1079 = vld [vmem:[%s1068 + $0x28] sm:$0xf]
          %v1080 = vld [vmem:[%s1068 + $0x2c] sm:$0xf]
          %v1081 = vld [vmem:[%s1068 + $0x30] sm:$0xf]
          %v1082 = vld [vmem:[%s1068 + $0x34] sm:$0xf]
          %v1083 = vld [vmem:[%s1068 + $0x38] sm:$0xf]
          %v1084 = vld [vmem:[%s1068 + $0x3c] sm:$0xf]
          %v1101 = vunpack.c.l.b16 %v1069
          %v1102 = vunpack.c.l.b16 %v1070
          %v1103 = vunpack.c.l.b16 %v1071
          %v1104 = vunpack.c.l.b16 %v1072
          %v1105 = vunpack.c.l.b16 %v1073
          %v1106 = vunpack.c.l.b16 %v1074
          %v1107 = vunpack.c.l.b16 %v1075
          %v1108 = vunpack.c.l.b16 %v1076
          %v1109 = vunpack.c.l.b16 %v1077
          %v1110 = vunpack.c.l.b16 %v1078
          %v1111 = vunpack.c.l.b16 %v1079
          %v1112 = vunpack.c.l.b16 %v1080
          %v1113 = vunpack.c.l.b16 %v1081
          %v1114 = vunpack.c.l.b16 %v1082
          %v1115 = vunpack.c.l.b16 %v1083
          %v1116 = vunpack.c.l.b16 %v1084
          %v1117 = vpack.c.b16 %v1102, %v1101
          %v1118 = vpack.c.b16 %v1104, %v1103
          %v1119 = vpack.c.b16 %v1106, %v1105
          %v1120 = vpack.c.b16 %v1108, %v1107
          %v1121 = vpack.c.b16 %v1110, %v1109
          %v1122 = vpack.c.b16 %v1112, %v1111
          %v1123 = vpack.c.b16 %v1114, %v1113
          %v1124 = vpack.c.b16 %v1116, %v1115
          %1133 = vmatpush.bf16.msra.mxu0 %v1124
          %1134 = vmatpush.bf16.msra.mxu0 %v1123
          %1135 = vmatpush.bf16.msra.mxu0 %v1122
          %1136 = vmatpush.bf16.msra.mxu0 %v1121
          %1137 = vmatpush.bf16.msra.mxu0 %v1120
          %1138 = vmatpush.bf16.msra.mxu0 %v1119
          %1139 = vmatpush.bf16.msra.mxu0 %v1118
          %1140 = vmatpush.bf16.msra.mxu0 %v1117
          %1141 = vmatmul.bf16.gmra.mxu0 %v1066
          %v1142 = vpop.f32.mrf.mxu0
          %v1143 = vadd.f32 0.0, %v1142
          %v1144 = vpop.f32.mrf.mxu0
          %v1145 = vadd.f32 0.0, %v1144
          %1146 = vmatmul.bf16.gmra.mxu0 %v1067
          %v1147 = vpop.f32.mrf.mxu0
          %v1148 = vadd.f32 0.0, %v1147
          %v1149 = vpop.f32.mrf.mxu0
          %v1150 = vadd.f32 0.0, %v1149
          %1151 = vdwg.mxu0
          %v1168 = vunpack.c.l.b16 %v1046
          %v1169 = vunpack.c.l.b16 %v1047
          %v1170 = vunpack.c.l.b16 %v1048
          %v1171 = vunpack.c.l.b16 %v1049
          %v1172 = vunpack.c.l.b16 %v1050
          %v1173 = vunpack.c.l.b16 %v1051
          %v1174 = vunpack.c.l.b16 %v1052
          %v1175 = vunpack.c.l.b16 %v1053
          %v1176 = vunpack.c.l.b16 %v1054
          %v1177 = vunpack.c.l.b16 %v1055
          %v1178 = vunpack.c.l.b16 %v1056
          %v1179 = vunpack.c.l.b16 %v1057
          %v1180 = vunpack.c.l.b16 %v1058
          %v1181 = vunpack.c.l.b16 %v1059
          %v1182 = vunpack.c.l.b16 %v1060
          %v1183 = vunpack.c.l.b16 %v1061
          %v1184 = vpack.c.b16 %v1169, %v1168
          %v1185 = vpack.c.b16 %v1171, %v1170
          %v1186 = vpack.c.b16 %v1173, %v1172
          %v1187 = vpack.c.b16 %v1175, %v1174
          %v1188 = vpack.c.b16 %v1177, %v1176
          %v1189 = vpack.c.b16 %v1179, %v1178
          %v1190 = vpack.c.b16 %v1181, %v1180
          %v1191 = vpack.c.b16 %v1183, %v1182
          %1200 = vmatpush.bf16.msra.mxu0 %v1191
          %1201 = vmatpush.bf16.msra.mxu0 %v1190
          %1202 = vmatpush.bf16.msra.mxu0 %v1189
          %1203 = vmatpush.bf16.msra.mxu0 %v1188
          %1204 = vmatpush.bf16.msra.mxu0 %v1187
          %1205 = vmatpush.bf16.msra.mxu0 %v1186
          %1206 = vmatpush.bf16.msra.mxu0 %v1185
          %1207 = vmatpush.bf16.msra.mxu0 %v1184
          %1208 = vmatmul.bf16.gmra.mxu0 %v1044
          %v1209 = vpop.f32.mrf.mxu0
          %v1210 = vadd.f32 %v1143, %v1209
          %v1211 = vpop.f32.mrf.mxu0
          %v1212 = vadd.f32 %v1145, %v1211
          %1213 = vmatmul.bf16.gmra.mxu0 %v1045
          %v1214 = vpop.f32.mrf.mxu0
          %v1215 = vadd.f32 %v1148, %v1214
          %v1216 = vpop.f32.mrf.mxu0
          %v1217 = vadd.f32 %v1150, %v1216
          %1218 = vdwg.mxu0
          %v1219 = vld [vmem:[#allocation3 + $0x9] sm:$0xff]
          %v1220 = vld [vmem:[#allocation3 + $0x11] sm:$0xff]
          %v1221 = vld [vmem:[#allocation3 + $0x29] sm:$0xff]
          %v1222 = vld [vmem:[#allocation3 + $0x31] sm:$0xff]
          %v1223 = vpack.c.bf16 %v1220, %v1219
          %v1224 = vpack.c.bf16 %v1222, %v1221
          %s1225 = scalar_lea.vmem [#allocation13], 128
          %v1226 = vld [vmem:[%s1225] sm:$0xf]
          %v1227 = vld [vmem:[%s1225 + $0x4] sm:$0xf]
          %v1228 = vld [vmem:[%s1225 + $0x8] sm:$0xf]
          %v1229 = vld [vmem:[%s1225 + $0xc] sm:$0xf]
          %v1230 = vld [vmem:[%s1225 + $0x10] sm:$0xf]
          %v1231 = vld [vmem:[%s1225 + $0x14] sm:$0xf]
          %v1232 = vld [vmem:[%s1225 + $0x18] sm:$0xf]
          %v1233 = vld [vmem:[%s1225 + $0x1c] sm:$0xf]
          %v1234 = vld [vmem:[%s1225 + $0x20] sm:$0xf]
          %v1235 = vld [vmem:[%s1225 + $0x24] sm:$0xf]
          %v1236 = vld [vmem:[%s1225 + $0x28] sm:$0xf]
          %v1237 = vld [vmem:[%s1225 + $0x2c] sm:$0xf]
          %v1238 = vld [vmem:[%s1225 + $0x30] sm:$0xf]
          %v1239 = vld [vmem:[%s1225 + $0x34] sm:$0xf]
          %v1240 = vld [vmem:[%s1225 + $0x38] sm:$0xf]
          %v1241 = vld [vmem:[%s1225 + $0x3c] sm:$0xf]
          %v1258 = vunpack.c.l.b16 %v1226
          %v1259 = vunpack.c.l.b16 %v1227
          %v1260 = vunpack.c.l.b16 %v1228
          %v1261 = vunpack.c.l.b16 %v1229
          %v1262 = vunpack.c.l.b16 %v1230
          %v1263 = vunpack.c.l.b16 %v1231
          %v1264 = vunpack.c.l.b16 %v1232
          %v1265 = vunpack.c.l.b16 %v1233
          %v1266 = vunpack.c.l.b16 %v1234
          %v1267 = vunpack.c.l.b16 %v1235
          %v1268 = vunpack.c.l.b16 %v1236
          %v1269 = vunpack.c.l.b16 %v1237
          %v1270 = vunpack.c.l.b16 %v1238
          %v1271 = vunpack.c.l.b16 %v1239
          %v1272 = vunpack.c.l.b16 %v1240
          %v1273 = vunpack.c.l.b16 %v1241
          %v1274 = vpack.c.b16 %v1259, %v1258
          %v1275 = vpack.c.b16 %v1261, %v1260
          %v1276 = vpack.c.b16 %v1263, %v1262
          %v1277 = vpack.c.b16 %v1265, %v1264
          %v1278 = vpack.c.b16 %v1267, %v1266
          %v1279 = vpack.c.b16 %v1269, %v1268
          %v1280 = vpack.c.b16 %v1271, %v1270
          %v1281 = vpack.c.b16 %v1273, %v1272
          %1290 = vmatpush.bf16.msra.mxu0 %v1281
          %1291 = vmatpush.bf16.msra.mxu0 %v1280
          %1292 = vmatpush.bf16.msra.mxu0 %v1279
          %1293 = vmatpush.bf16.msra.mxu0 %v1278
          %1294 = vmatpush.bf16.msra.mxu0 %v1277
          %1295 = vmatpush.bf16.msra.mxu0 %v1276
          %1296 = vmatpush.bf16.msra.mxu0 %v1275
          %1297 = vmatpush.bf16.msra.mxu0 %v1274
          %1298 = vmatmul.bf16.gmra.mxu0 %v1223
          %v1299 = vpop.f32.mrf.mxu0
          %v1300 = vadd.f32 0.0, %v1299
          %v1301 = vpop.f32.mrf.mxu0
          %v1302 = vadd.f32 0.0, %v1301
          %1303 = vmatmul.bf16.gmra.mxu0 %v1224
          %v1304 = vpop.f32.mrf.mxu0
          %v1305 = vadd.f32 0.0, %v1304
          %v1306 = vpop.f32.mrf.mxu0
          %v1307 = vadd.f32 0.0, %v1306
          %1308 = vdwg.mxu0
          %v1309 = vadd.f32 %v1210, %v1300
          %v1310 = vadd.f32 %v1212, %v1302
          %v1311 = vadd.f32 %v1215, %v1305
          %v1312 = vadd.f32 %v1217, %v1307
          %v1313 = vld [vmem:[#allocation15] sm:$0x1]
          %v1315 = vperm.slane %v1313, 0
          %v1317 = vmul.f32 %v1309, %v1315
          %v1318 = vmul.f32 %v1310, %v1315
          %v1319 = vmul.f32 %v1311, %v1315
          %v1320 = vmul.f32 %v1312, %v1315
          %v1321 = vld [vmem:[#allocation16] sm:$0x1]
          %v1323 = vperm.slane %v1321, 0
          %v1325 = vadd.f32 %v1317, %v1323
          %v1326 = vadd.f32 %v1318, %v1323
          %v1327 = vadd.f32 %v1319, %v1323
          %v1328 = vadd.f32 %v1320, %v1323
          %v1329 = vmax.f32 %v1325, 0.0
          %v1330 = vmax.f32 %v1326, 0.0
          %v1331 = vmax.f32 %v1327, 0.0
          %v1332 = vmax.f32 %v1328, 0.0
          %1333 = vst [vmem:[#allocation4] sm:$0xff] 0.0
          %1334 = vst [vmem:[#allocation4 + $0x8] sm:$0xff] 0.0
          %1335 = vst [vmem:[#allocation4 + $0x10] sm:$0xff] 0.0
          %1336 = vst [vmem:[#allocation4 + $0x18] sm:$0xff] 0.0
          %1337 = vst [vmem:[#allocation4 + $0x20] sm:$0xff] 0.0
          %1338 = vst [vmem:[#allocation4 + $0x28] sm:$0xff] 0.0
          %1339 = vst [vmem:[#allocation4 + $0x30] sm:$0xff] 0.0
          %1340 = vst [vmem:[#allocation4 + $0x38] sm:$0xff] 0.0
          %1341 = vst [vmem:[#allocation4 + $0x8] sm:$0xff] %v1329
          %1342 = vst [vmem:[#allocation4 + $0x10] sm:$0xff] %v1330
          %1343 = vst [vmem:[#allocation4 + $0x28] sm:$0xff] %v1331
          %1344 = vst [vmem:[#allocation4 + $0x30] sm:$0xff] %v1332
          %v1345 = vld [vmem:[#allocation4 + $0x7] sm:$0xff]
          %v1346 = vld [vmem:[#allocation4 + $0xf] sm:$0xff]
          %v1347 = vld [vmem:[#allocation4 + $0x27] sm:$0xff]
          %v1348 = vld [vmem:[#allocation4 + $0x2f] sm:$0xff]
          %v1349 = vpack.c.bf16 %v1346, %v1345
          %v1350 = vpack.c.bf16 %v1348, %v1347
          %v1351 = vld [vmem:[#allocation18] sm:$0xff]
          %v1352 = vld [vmem:[#allocation18 + $0x8] sm:$0xff]
          %v1353 = vld [vmem:[#allocation18 + $0x10] sm:$0xff]
          %v1354 = vld [vmem:[#allocation18 + $0x18] sm:$0xff]
          %v1355 = vld [vmem:[#allocation18 + $0x20] sm:$0xff]
          %v1356 = vld [vmem:[#allocation18 + $0x28] sm:$0xff]
          %v1357 = vld [vmem:[#allocation18 + $0x30] sm:$0xff]
          %v1358 = vld [vmem:[#allocation18 + $0x38] sm:$0xff]
          %v1359 = vld [vmem:[#allocation18 + $0x40] sm:$0xff]
          %v1360 = vld [vmem:[#allocation18 + $0x48] sm:$0xff]
          %v1361 = vld [vmem:[#allocation18 + $0x50] sm:$0xff]
          %v1362 = vld [vmem:[#allocation18 + $0x58] sm:$0xff]
          %v1363 = vld [vmem:[#allocation18 + $0x60] sm:$0xff]
          %v1364 = vld [vmem:[#allocation18 + $0x68] sm:$0xff]
          %v1365 = vld [vmem:[#allocation18 + $0x70] sm:$0xff]
          %v1366 = vld [vmem:[#allocation18 + $0x78] sm:$0xff]
          %v1367 = vld [vmem:[#allocation4 + $0x8] sm:$0xff]
          %v1368 = vld [vmem:[#allocation4 + $0x10] sm:$0xff]
          %v1369 = vld [vmem:[#allocation4 + $0x28] sm:$0xff]
          %v1370 = vld [vmem:[#allocation4 + $0x30] sm:$0xff]
          %v1371 = vpack.c.bf16 %v1368, %v1367
          %v1372 = vpack.c.bf16 %v1370, %v1369
          %s1373 = scalar_lea.vmem [#allocation18], 128
          %v1374 = vld [vmem:[%s1373] sm:$0xff]
          %v1375 = vld [vmem:[%s1373 + $0x8] sm:$0xff]
          %v1376 = vld [vmem:[%s1373 + $0x10] sm:$0xff]
          %v1377 = vld [vmem:[%s1373 + $0x18] sm:$0xff]
          %v1378 = vld [vmem:[%s1373 + $0x20] sm:$0xff]
          %v1379 = vld [vmem:[%s1373 + $0x28] sm:$0xff]
          %v1380 = vld [vmem:[%s1373 + $0x30] sm:$0xff]
          %v1381 = vld [vmem:[%s1373 + $0x38] sm:$0xff]
          %v1382 = vld [vmem:[%s1373 + $0x40] sm:$0xff]
          %v1383 = vld [vmem:[%s1373 + $0x48] sm:$0xff]
          %v1384 = vld [vmem:[%s1373 + $0x50] sm:$0xff]
          %v1385 = vld [vmem:[%s1373 + $0x58] sm:$0xff]
          %v1386 = vld [vmem:[%s1373 + $0x60] sm:$0xff]
          %v1387 = vld [vmem:[%s1373 + $0x68] sm:$0xff]
          %v1388 = vld [vmem:[%s1373 + $0x70] sm:$0xff]
          %v1389 = vld [vmem:[%s1373 + $0x78] sm:$0xff]
          %v1406 = vunpack.c.l.b16 %v1374
          %v1407 = vunpack.c.h.b16 %v1374
          %v1408 = vunpack.c.l.b16 %v1375
          %v1409 = vunpack.c.h.b16 %v1375
          %v1410 = vunpack.c.l.b16 %v1376
          %v1411 = vunpack.c.h.b16 %v1376
          %v1412 = vunpack.c.l.b16 %v1377
          %v1413 = vunpack.c.h.b16 %v1377
          %v1414 = vunpack.c.l.b16 %v1378
          %v1415 = vunpack.c.h.b16 %v1378
          %v1416 = vunpack.c.l.b16 %v1379
          %v1417 = vunpack.c.h.b16 %v1379
          %v1418 = vunpack.c.l.b16 %v1380
          %v1419 = vunpack.c.h.b16 %v1380
          %v1420 = vunpack.c.l.b16 %v1381
          %v1421 = vunpack.c.h.b16 %v1381
          %v1422 = vunpack.c.l.b16 %v1382
          %v1423 = vunpack.c.h.b16 %v1382
          %v1424 = vunpack.c.l.b16 %v1383
          %v1425 = vunpack.c.h.b16 %v1383
          %v1426 = vunpack.c.l.b16 %v1384
          %v1427 = vunpack.c.h.b16 %v1384
          %v1428 = vunpack.c.l.b16 %v1385
          %v1429 = vunpack.c.h.b16 %v1385
          %v1430 = vunpack.c.l.b16 %v1386
          %v1431 = vunpack.c.h.b16 %v1386
          %v1432 = vunpack.c.l.b16 %v1387
          %v1433 = vunpack.c.h.b16 %v1387
          %v1434 = vunpack.c.l.b16 %v1388
          %v1435 = vunpack.c.h.b16 %v1388
          %v1436 = vunpack.c.l.b16 %v1389
          %v1437 = vunpack.c.h.b16 %v1389
          %v1438 = vpack.c.b16 %v1408, %v1406
          %v1439 = vpack.c.b16 %v1409, %v1407
          %v1440 = vpack.c.b16 %v1412, %v1410
          %v1441 = vpack.c.b16 %v1413, %v1411
          %v1442 = vpack.c.b16 %v1416, %v1414
          %v1443 = vpack.c.b16 %v1417, %v1415
          %v1444 = vpack.c.b16 %v1420, %v1418
          %v1445 = vpack.c.b16 %v1421, %v1419
          %v1446 = vpack.c.b16 %v1424, %v1422
          %v1447 = vpack.c.b16 %v1425, %v1423
          %v1448 = vpack.c.b16 %v1428, %v1426
          %v1449 = vpack.c.b16 %v1429, %v1427
          %v1450 = vpack.c.b16 %v1432, %v1430
          %v1451 = vpack.c.b16 %v1433, %v1431
          %v1452 = vpack.c.b16 %v1436, %v1434
          %v1453 = vpack.c.b16 %v1437, %v1435
          %1470 = vmatpush.bf16.msra.mxu0 %v1452
          %1471 = vmatpush.bf16.msra.mxu0 %v1450
          %1472 = vmatpush.bf16.msra.mxu0 %v1448
          %1473 = vmatpush.bf16.msra.mxu0 %v1446
          %1474 = vmatpush.bf16.msra.mxu0 %v1444
          %1475 = vmatpush.bf16.msra.mxu0 %v1442
          %1476 = vmatpush.bf16.msra.mxu0 %v1440
          %1477 = vmatpush.bf16.msra.mxu0 %v1438
          %1478 = vmatmul.bf16.gmra.mxu0 %v1371
          %v1479 = vpop.f32.mrf.mxu0
          %v1480 = vadd.f32 0.0, %v1479
          %v1481 = vpop.f32.mrf.mxu0
          %v1482 = vadd.f32 0.0, %v1481
          %1483 = vmatmul.bf16.gmra.mxu0 %v1372
          %v1484 = vpop.f32.mrf.mxu0
          %v1485 = vadd.f32 0.0, %v1484
          %v1486 = vpop.f32.mrf.mxu0
          %v1487 = vadd.f32 0.0, %v1486
          %1488 = vdwg.mxu0
          %1489 = vmatpush.bf16.msra.mxu0 %v1453
          %1490 = vmatpush.bf16.msra.mxu0 %v1451
          %1491 = vmatpush.bf16.msra.mxu0 %v1449
          %1492 = vmatpush.bf16.msra.mxu0 %v1447
          %1493 = vmatpush.bf16.msra.mxu0 %v1445
          %1494 = vmatpush.bf16.msra.mxu0 %v1443
          %1495 = vmatpush.bf16.msra.mxu0 %v1441
          %1496 = vmatpush.bf16.msra.mxu0 %v1439
          %1497 = vmatmul.bf16.gmra.mxu0 %v1371
          %v1498 = vpop.f32.mrf.mxu0
          %v1499 = vadd.f32 0.0, %v1498
          %v1500 = vpop.f32.mrf.mxu0
          %v1501 = vadd.f32 0.0, %v1500
          %1502 = vmatmul.bf16.gmra.mxu0 %v1372
          %v1503 = vpop.f32.mrf.mxu0
          %v1504 = vadd.f32 0.0, %v1503
          %v1505 = vpop.f32.mrf.mxu0
          %v1506 = vadd.f32 0.0, %v1505
          %1507 = vdwg.mxu0
          %v1524 = vunpack.c.l.b16 %v1351
          %v1525 = vunpack.c.h.b16 %v1351
          %v1526 = vunpack.c.l.b16 %v1352
          %v1527 = vunpack.c.h.b16 %v1352
          %v1528 = vunpack.c.l.b16 %v1353
          %v1529 = vunpack.c.h.b16 %v1353
          %v1530 = vunpack.c.l.b16 %v1354
          %v1531 = vunpack.c.h.b16 %v1354
          %v1532 = vunpack.c.l.b16 %v1355
          %v1533 = vunpack.c.h.b16 %v1355
          %v1534 = vunpack.c.l.b16 %v1356
          %v1535 = vunpack.c.h.b16 %v1356
          %v1536 = vunpack.c.l.b16 %v1357
          %v1537 = vunpack.c.h.b16 %v1357
          %v1538 = vunpack.c.l.b16 %v1358
          %v1539 = vunpack.c.h.b16 %v1358
          %v1540 = vunpack.c.l.b16 %v1359
          %v1541 = vunpack.c.h.b16 %v1359
          %v1542 = vunpack.c.l.b16 %v1360
          %v1543 = vunpack.c.h.b16 %v1360
          %v1544 = vunpack.c.l.b16 %v1361
          %v1545 = vunpack.c.h.b16 %v1361
          %v1546 = vunpack.c.l.b16 %v1362
          %v1547 = vunpack.c.h.b16 %v1362
          %v1548 = vunpack.c.l.b16 %v1363
          %v1549 = vunpack.c.h.b16 %v1363
          %v1550 = vunpack.c.l.b16 %v1364
          %v1551 = vunpack.c.h.b16 %v1364
          %v1552 = vunpack.c.l.b16 %v1365
          %v1553 = vunpack.c.h.b16 %v1365
          %v1554 = vunpack.c.l.b16 %v1366
          %v1555 = vunpack.c.h.b16 %v1366
          %v1556 = vpack.c.b16 %v1526, %v1524
          %v1557 = vpack.c.b16 %v1527, %v1525
          %v1558 = vpack.c.b16 %v1530, %v1528
          %v1559 = vpack.c.b16 %v1531, %v1529
          %v1560 = vpack.c.b16 %v1534, %v1532
          %v1561 = vpack.c.b16 %v1535, %v1533
          %v1562 = vpack.c.b16 %v1538, %v1536
          %v1563 = vpack.c.b16 %v1539, %v1537
          %v1564 = vpack.c.b16 %v1542, %v1540
          %v1565 = vpack.c.b16 %v1543, %v1541
          %v1566 = vpack.c.b16 %v1546, %v1544
          %v1567 = vpack.c.b16 %v1547, %v1545
          %v1568 = vpack.c.b16 %v1550, %v1548
          %v1569 = vpack.c.b16 %v1551, %v1549
          %v1570 = vpack.c.b16 %v1554, %v1552
          %v1571 = vpack.c.b16 %v1555, %v1553
          %1588 = vmatpush.bf16.msra.mxu0 %v1570
          %1589 = vmatpush.bf16.msra.mxu0 %v1568
          %1590 = vmatpush.bf16.msra.mxu0 %v1566
          %1591 = vmatpush.bf16.msra.mxu0 %v1564
          %1592 = vmatpush.bf16.msra.mxu0 %v1562
          %1593 = vmatpush.bf16.msra.mxu0 %v1560
          %1594 = vmatpush.bf16.msra.mxu0 %v1558
          %1595 = vmatpush.bf16.msra.mxu0 %v1556
          %1596 = vmatmul.bf16.gmra.mxu0 %v1349
          %v1597 = vpop.f32.mrf.mxu0
          %v1598 = vadd.f32 %v1480, %v1597
          %v1599 = vpop.f32.mrf.mxu0
          %v1600 = vadd.f32 %v1482, %v1599
          %1601 = vmatmul.bf16.gmra.mxu0 %v1350
          %v1602 = vpop.f32.mrf.mxu0
          %v1603 = vadd.f32 %v1485, %v1602
          %v1604 = vpop.f32.mrf.mxu0
          %v1605 = vadd.f32 %v1487, %v1604
          %1606 = vdwg.mxu0
          %1607 = vmatpush.bf16.msra.mxu0 %v1571
          %1608 = vmatpush.bf16.msra.mxu0 %v1569
          %1609 = vmatpush.bf16.msra.mxu0 %v1567
          %1610 = vmatpush.bf16.msra.mxu0 %v1565
          %1611 = vmatpush.bf16.msra.mxu0 %v1563
          %1612 = vmatpush.bf16.msra.mxu0 %v1561
          %1613 = vmatpush.bf16.msra.mxu0 %v1559
          %1614 = vmatpush.bf16.msra.mxu0 %v1557
          %1615 = vmatmul.bf16.gmra.mxu0 %v1349
          %v1616 = vpop.f32.mrf.mxu0
          %v1617 = vadd.f32 %v1499, %v1616
          %v1618 = vpop.f32.mrf.mxu0
          %v1619 = vadd.f32 %v1501, %v1618
          %1620 = vmatmul.bf16.gmra.mxu0 %v1350
          %v1621 = vpop.f32.mrf.mxu0
          %v1622 = vadd.f32 %v1504, %v1621
          %v1623 = vpop.f32.mrf.mxu0
          %v1624 = vadd.f32 %v1506, %v1623
          %1625 = vdwg.mxu0
          %v1626 = vld [vmem:[#allocation4 + $0x9] sm:$0xff]
          %v1627 = vld [vmem:[#allocation4 + $0x11] sm:$0xff]
          %v1628 = vld [vmem:[#allocation4 + $0x29] sm:$0xff]
          %v1629 = vld [vmem:[#allocation4 + $0x31] sm:$0xff]
          %v1630 = vpack.c.bf16 %v1627, %v1626
          %v1631 = vpack.c.bf16 %v1629, %v1628
          %s1632 = scalar_lea.vmem [#allocation18], 256
          %v1633 = vld [vmem:[%s1632] sm:$0xff]
          %v1634 = vld [vmem:[%s1632 + $0x8] sm:$0xff]
          %v1635 = vld [vmem:[%s1632 + $0x10] sm:$0xff]
          %v1636 = vld [vmem:[%s1632 + $0x18] sm:$0xff]
          %v1637 = vld [vmem:[%s1632 + $0x20] sm:$0xff]
          %v1638 = vld [vmem:[%s1632 + $0x28] sm:$0xff]
          %v1639 = vld [vmem:[%s1632 + $0x30] sm:$0xff]
          %v1640 = vld [vmem:[%s1632 + $0x38] sm:$0xff]
          %v1641 = vld [vmem:[%s1632 + $0x40] sm:$0xff]
          %v1642 = vld [vmem:[%s1632 + $0x48] sm:$0xff]
          %v1643 = vld [vmem:[%s1632 + $0x50] sm:$0xff]
          %v1644 = vld [vmem:[%s1632 + $0x58] sm:$0xff]
          %v1645 = vld [vmem:[%s1632 + $0x60] sm:$0xff]
          %v1646 = vld [vmem:[%s1632 + $0x68] sm:$0xff]
          %v1647 = vld [vmem:[%s1632 + $0x70] sm:$0xff]
          %v1648 = vld [vmem:[%s1632 + $0x78] sm:$0xff]
          %v1665 = vunpack.c.l.b16 %v1633
          %v1666 = vunpack.c.h.b16 %v1633
          %v1667 = vunpack.c.l.b16 %v1634
          %v1668 = vunpack.c.h.b16 %v1634
          %v1669 = vunpack.c.l.b16 %v1635
          %v1670 = vunpack.c.h.b16 %v1635
          %v1671 = vunpack.c.l.b16 %v1636
          %v1672 = vunpack.c.h.b16 %v1636
          %v1673 = vunpack.c.l.b16 %v1637
          %v1674 = vunpack.c.h.b16 %v1637
          %v1675 = vunpack.c.l.b16 %v1638
          %v1676 = vunpack.c.h.b16 %v1638
          %v1677 = vunpack.c.l.b16 %v1639
          %v1678 = vunpack.c.h.b16 %v1639
          %v1679 = vunpack.c.l.b16 %v1640
          %v1680 = vunpack.c.h.b16 %v1640
          %v1681 = vunpack.c.l.b16 %v1641
          %v1682 = vunpack.c.h.b16 %v1641
          %v1683 = vunpack.c.l.b16 %v1642
          %v1684 = vunpack.c.h.b16 %v1642
          %v1685 = vunpack.c.l.b16 %v1643
          %v1686 = vunpack.c.h.b16 %v1643
          %v1687 = vunpack.c.l.b16 %v1644
          %v1688 = vunpack.c.h.b16 %v1644
          %v1689 = vunpack.c.l.b16 %v1645
          %v1690 = vunpack.c.h.b16 %v1645
          %v1691 = vunpack.c.l.b16 %v1646
          %v1692 = vunpack.c.h.b16 %v1646
          %v1693 = vunpack.c.l.b16 %v1647
          %v1694 = vunpack.c.h.b16 %v1647
          %v1695 = vunpack.c.l.b16 %v1648
          %v1696 = vunpack.c.h.b16 %v1648
          %v1697 = vpack.c.b16 %v1667, %v1665
          %v1698 = vpack.c.b16 %v1668, %v1666
          %v1699 = vpack.c.b16 %v1671, %v1669
          %v1700 = vpack.c.b16 %v1672, %v1670
          %v1701 = vpack.c.b16 %v1675, %v1673
          %v1702 = vpack.c.b16 %v1676, %v1674
          %v1703 = vpack.c.b16 %v1679, %v1677
          %v1704 = vpack.c.b16 %v1680, %v1678
          %v1705 = vpack.c.b16 %v1683, %v1681
          %v1706 = vpack.c.b16 %v1684, %v1682
          %v1707 = vpack.c.b16 %v1687, %v1685
          %v1708 = vpack.c.b16 %v1688, %v1686
          %v1709 = vpack.c.b16 %v1691, %v1689
          %v1710 = vpack.c.b16 %v1692, %v1690
          %v1711 = vpack.c.b16 %v1695, %v1693
          %v1712 = vpack.c.b16 %v1696, %v1694
          %1729 = vmatpush.bf16.msra.mxu0 %v1711
          %1730 = vmatpush.bf16.msra.mxu0 %v1709
          %1731 = vmatpush.bf16.msra.mxu0 %v1707
          %1732 = vmatpush.bf16.msra.mxu0 %v1705
          %1733 = vmatpush.bf16.msra.mxu0 %v1703
          %1734 = vmatpush.bf16.msra.mxu0 %v1701
          %1735 = vmatpush.bf16.msra.mxu0 %v1699
          %1736 = vmatpush.bf16.msra.mxu0 %v1697
          %1737 = vmatmul.bf16.gmra.mxu0 %v1630
          %v1738 = vpop.f32.mrf.mxu0
          %v1739 = vadd.f32 0.0, %v1738
          %v1740 = vpop.f32.mrf.mxu0
          %v1741 = vadd.f32 0.0, %v1740
          %1742 = vmatmul.bf16.gmra.mxu0 %v1631
          %v1743 = vpop.f32.mrf.mxu0
          %v1744 = vadd.f32 0.0, %v1743
          %v1745 = vpop.f32.mrf.mxu0
          %v1746 = vadd.f32 0.0, %v1745
          %1747 = vdwg.mxu0
          %1748 = vmatpush.bf16.msra.mxu0 %v1712
          %1749 = vmatpush.bf16.msra.mxu0 %v1710
          %1750 = vmatpush.bf16.msra.mxu0 %v1708
          %1751 = vmatpush.bf16.msra.mxu0 %v1706
          %1752 = vmatpush.bf16.msra.mxu0 %v1704
          %1753 = vmatpush.bf16.msra.mxu0 %v1702
          %1754 = vmatpush.bf16.msra.mxu0 %v1700
          %1755 = vmatpush.bf16.msra.mxu0 %v1698
          %1756 = vmatmul.bf16.gmra.mxu0 %v1630
          %v1757 = vpop.f32.mrf.mxu0
          %v1758 = vadd.f32 0.0, %v1757
          %v1759 = vpop.f32.mrf.mxu0
          %v1760 = vadd.f32 0.0, %v1759
          %1761 = vmatmul.bf16.gmra.mxu0 %v1631
          %v1762 = vpop.f32.mrf.mxu0
          %v1763 = vadd.f32 0.0, %v1762
          %v1764 = vpop.f32.mrf.mxu0
          %v1765 = vadd.f32 0.0, %v1764
          %1766 = vdwg.mxu0
          %v1767 = vadd.f32 %v1598, %v1739
          %v1768 = vadd.f32 %v1617, %v1758
          %v1769 = vadd.f32 %v1600, %v1741
          %v1770 = vadd.f32 %v1619, %v1760
          %v1771 = vadd.f32 %v1603, %v1744
          %v1772 = vadd.f32 %v1622, %v1763
          %v1773 = vadd.f32 %v1605, %v1746
          %v1774 = vadd.f32 %v1624, %v1765
          %v1775 = vld [vmem:[#allocation19] sm:$0x3]
          %v1777 = vperm.slane %v1775, 0
          %v1778 = vperm.slane %v1775, 1
          %v1781 = vmul.f32 %v1767, %v1777
          %v1782 = vmul.f32 %v1768, %v1778
          %v1783 = vmul.f32 %v1769, %v1777
          %v1784 = vmul.f32 %v1770, %v1778
          %v1785 = vmul.f32 %v1771, %v1777
          %v1786 = vmul.f32 %v1772, %v1778
          %v1787 = vmul.f32 %v1773, %v1777
          %v1788 = vmul.f32 %v1774, %v1778
          %v1789 = vld [vmem:[#allocation21] sm:$0x3]
          %v1791 = vperm.slane %v1789, 0
          %v1792 = vperm.slane %v1789, 1
          %v1795 = vadd.f32 %v1781, %v1791
          %v1796 = vadd.f32 %v1782, %v1792
          %v1797 = vadd.f32 %v1783, %v1791
          %v1798 = vadd.f32 %v1784, %v1792
          %v1799 = vadd.f32 %v1785, %v1791
          %v1800 = vadd.f32 %v1786, %v1792
          %v1801 = vadd.f32 %v1787, %v1791
          %v1802 = vadd.f32 %v1788, %v1792
          %v1803 = vmax.f32 %v1795, 0.0
          %v1804 = vmax.f32 %v1796, 0.0
          %v1805 = vmax.f32 %v1797, 0.0
          %v1806 = vmax.f32 %v1798, 0.0
          %v1807 = vmax.f32 %v1799, 0.0
          %v1808 = vmax.f32 %v1800, 0.0
          %v1809 = vmax.f32 %v1801, 0.0
          %v1810 = vmax.f32 %v1802, 0.0
          %v1811 = vpack.c.bf16 %v1804, %v1803
          %v1812 = vpack.c.bf16 %v1806, %v1805
          %v1813 = vpack.c.bf16 %v1808, %v1807
          %v1814 = vpack.c.bf16 %v1810, %v1809
          %v1817 = vrot.slane %v1811, 3
          %v1818 = vrot.slane %v1813, 3
          %vm1819 = vcmask 1040384
          %v1822 = vsel %vm1819, %v1811, %v1817
          %v1825 = vsel %vm1819, %v1813, %v1818
          %1826 = vst [vmem:[#allocation1] ss:$4 sm:$0xff] %v1822
          %v1827 = vld [vmem:[#allocation1] sm:$0xff]
          %s1829 = scalar_lea.vmem [#allocation1], 32
          %1830 = vst [vmem:[%s1829] ss:$4 sm:$0xff] %v1825
          %v1831 = vld [vmem:[#allocation1 + $0x20] sm:$0xff]
          %v1833 = vunpack.c.l.b16 %v1827
          %v1834 = vunpack.c.h.b16 %v1827
          %v1835 = vunpack.c.l.b16 %v1831
          %v1836 = vunpack.c.h.b16 %v1831
          %v1837 = vrot.slane %v1835, 7
          %vm1838 = vcmask 1041409
          %v1839 = vsel %vm1838, %v1837, %v1833
          %v1840 = vrot.slane %v1836, 7
          %v1841 = vsel %vm1838, %v1840, %v1834
          %v1842 = vpack.c.b16 %v1841, %v1839
          %v1843 = vrot.slane %v1842, 3
          %v1846 = vsel %vm1819, %v1842, %v1843
          %1848 = vst [vmem:[#allocation5] sm:$0x3] %v1846
          %1849 = vst [vmem:[#allocation1] ss:$4 sm:$0xff] %v1822
          %v1850 = vld [vmem:[#allocation1] sm:$0xff]
          %s1852 = scalar_lea.vmem [#allocation1], 32
          %1853 = vst [vmem:[%s1852] ss:$4 sm:$0xff] %v1825
          %v1854 = vld [vmem:[#allocation1 + $0x20] sm:$0xff]
          %v1856 = vunpack.c.l.b16 %v1850
          %v1857 = vunpack.c.h.b16 %v1850
          %v1858 = vunpack.c.l.b16 %v1854
          %v1859 = vunpack.c.h.b16 %v1854
          %v1860 = vrot.slane %v1856, 1
          %v1861 = vsel %vm1838, %v1858, %v1860
          %v1862 = vrot.slane %v1857, 1
          %v1863 = vsel %vm1838, %v1859, %v1862
          %v1864 = vpack.c.b16 %v1863, %v1861
          %v1865 = vrot.slane %v1864, 3
          %v1868 = vsel %vm1819, %v1864, %v1865
          %1870 = vst [vmem:[#allocation5 + $0x2] sm:$0x3] %v1868
          %1871 = vst [vmem:[#allocation1] sm:$0xff] %v1811
          %s1872 = scalar_lea.vmem [#allocation1], 1
          %v1873 = vld [vmem:[%s1872] ss:$4 sm:$0xff]
          %1874 = vst [vmem:[#allocation1 + $0x20] sm:$0xff] %v1813
          %s1875 = scalar_lea.vmem [#allocation1], 33
          %v1876 = vld [vmem:[%s1875] ss:$4 sm:$0xff]
          %1877 = vst [vmem:[#allocation1] ss:$4 sm:$0xff] %v1873
          %v1878 = vld [vmem:[#allocation1] sm:$0xff]
          %s1880 = scalar_lea.vmem [#allocation1], 32
          %1881 = vst [vmem:[%s1880] ss:$4 sm:$0xff] %v1876
          %v1882 = vld [vmem:[#allocation1 + $0x20] sm:$0xff]
          %v1884 = vunpack.c.l.b16 %v1878
          %v1885 = vunpack.c.h.b16 %v1878
          %v1886 = vunpack.c.l.b16 %v1882
          %v1887 = vunpack.c.h.b16 %v1882
          %v1888 = vrot.slane %v1886, 7
          %v1889 = vsel %vm1838, %v1888, %v1884
          %v1890 = vrot.slane %v1887, 7
          %v1891 = vsel %vm1838, %v1890, %v1885
          %v1892 = vpack.c.b16 %v1891, %v1889
          %v1893 = vrot.slane %v1892, 3
          %v1896 = vsel %vm1819, %v1892, %v1893
          %1898 = vst [vmem:[#allocation5 + $0x4] sm:$0x3] %v1896
          %1899 = vst [vmem:[#allocation1] sm:$0xff] %v1811
          %s1900 = scalar_lea.vmem [#allocation1], 1
          %v1901 = vld [vmem:[%s1900] ss:$4 sm:$0xff]
          %1902 = vst [vmem:[#allocation1 + $0x20] sm:$0xff] %v1813
          %s1903 = scalar_lea.vmem [#allocation1], 33
          %v1904 = vld [vmem:[%s1903] ss:$4 sm:$0xff]
          %1905 = vst [vmem:[#allocation1] ss:$4 sm:$0xff] %v1901
          %v1906 = vld [vmem:[#allocation1] sm:$0xff]
          %s1908 = scalar_lea.vmem [#allocation1], 32
          %1909 = vst [vmem:[%s1908] ss:$4 sm:$0xff] %v1904
          %v1910 = vld [vmem:[#allocation1 + $0x20] sm:$0xff]
          %v1912 = vunpack.c.l.b16 %v1906
          %v1913 = vunpack.c.h.b16 %v1906
          %v1914 = vunpack.c.l.b16 %v1910
          %v1915 = vunpack.c.h.b16 %v1910
          %v1916 = vrot.slane %v1912, 1
          %v1917 = vsel %vm1838, %v1914, %v1916
          %v1918 = vrot.slane %v1913, 1
          %v1919 = vsel %vm1838, %v1915, %v1918
          %v1920 = vpack.c.b16 %v1919, %v1917
          %v1921 = vrot.slane %v1920, 3
          %v1924 = vsel %vm1819, %v1920, %v1921
          %1926 = vst [vmem:[#allocation5 + $0x6] sm:$0x3] %v1924
          %1927 = vst [vmem:[#allocation1] sm:$0xff] %v1811
          %s1928 = scalar_lea.vmem [#allocation1], 2
          %v1929 = vld [vmem:[%s1928] ss:$4 sm:$0xff]
          %1930 = vst [vmem:[#allocation1 + $0x20] sm:$0xff] %v1813
          %s1931 = scalar_lea.vmem [#allocation1], 34
          %v1932 = vld [vmem:[%s1931] ss:$4 sm:$0xff]
          %1933 = vst [vmem:[#allocation1] ss:$4 sm:$0xff] %v1929
          %v1934 = vld [vmem:[#allocation1] sm:$0xff]
          %s1936 = scalar_lea.vmem [#allocation1], 32
          %1937 = vst [vmem:[%s1936] ss:$4 sm:$0xff] %v1932
          %v1938 = vld [vmem:[#allocation1 + $0x20] sm:$0xff]
          %v1940 = vunpack.c.l.b16 %v1934
          %v1941 = vunpack.c.h.b16 %v1934
          %v1942 = vunpack.c.l.b16 %v1938
          %v1943 = vunpack.c.h.b16 %v1938
          %v1944 = vrot.slane %v1942, 7
          %v1945 = vsel %vm1838, %v1944, %v1940
          %v1946 = vrot.slane %v1943, 7
          %v1947 = vsel %vm1838, %v1946, %v1941
          %v1948 = vpack.c.b16 %v1947, %v1945
          %v1949 = vrot.slane %v1948, 3
          %v1952 = vsel %vm1819, %v1948, %v1949
          %s1954 = scalar_lea.vmem [#allocation5], 8
          %1955 = vst [vmem:[%s1954] sm:$0x3] %v1952
          %1956 = vst [vmem:[#allocation1] sm:$0xff] %v1811
          %s1957 = scalar_lea.vmem [#allocation1], 2
          %v1958 = vld [vmem:[%s1957] ss:$4 sm:$0xff]
          %1959 = vst [vmem:[#allocation1 + $0x20] sm:$0xff] %v1813
          %s1960 = scalar_lea.vmem [#allocation1], 34
          %v1961 = vld [vmem:[%s1960] ss:$4 sm:$0xff]
          %1962 = vst [vmem:[#allocation1] ss:$4 sm:$0xff] %v1958
          %v1963 = vld [vmem:[#allocation1] sm:$0xff]
          %s1965 = scalar_lea.vmem [#allocation1], 32
          %1966 = vst [vmem:[%s1965] ss:$4 sm:$0xff] %v1961
          %v1967 = vld [vmem:[#allocation1 + $0x20] sm:$0xff]
          %v1969 = vunpack.c.l.b16 %v1963
          %v1970 = vunpack.c.h.b16 %v1963
          %v1971 = vunpack.c.l.b16 %v1967
          %v1972 = vunpack.c.h.b16 %v1967
          %v1973 = vrot.slane %v1969, 1
          %v1974 = vsel %vm1838, %v1971, %v1973
          %v1975 = vrot.slane %v1970, 1
          %v1976 = vsel %vm1838, %v1972, %v1975
          %v1977 = vpack.c.b16 %v1976, %v1974
          %v1978 = vrot.slane %v1977, 3
          %v1981 = vsel %vm1819, %v1977, %v1978
          %1983 = vst [vmem:[%s1954 + $0x2] sm:$0x3] %v1981
          %1984 = vst [vmem:[#allocation1] sm:$0xff] %v1811
          %s1985 = scalar_lea.vmem [#allocation1], 3
          %v1986 = vld [vmem:[%s1985] ss:$4 sm:$0xff]
          %1987 = vst [vmem:[#allocation1 + $0x20] sm:$0xff] %v1813
          %s1988 = scalar_lea.vmem [#allocation1], 35
          %v1989 = vld [vmem:[%s1988] ss:$4 sm:$0xff]
          %1990 = vst [vmem:[#allocation1] ss:$4 sm:$0xff] %v1986
          %v1991 = vld [vmem:[#allocation1] sm:$0xff]
          %s1993 = scalar_lea.vmem [#allocation1], 32
          %1994 = vst [vmem:[%s1993] ss:$4 sm:$0xff] %v1989
          %v1995 = vld [vmem:[#allocation1 + $0x20] sm:$0xff]
          %v1997 = vunpack.c.l.b16 %v1991
          %v1998 = vunpack.c.h.b16 %v1991
          %v1999 = vunpack.c.l.b16 %v1995
          %v2000 = vunpack.c.h.b16 %v1995
          %v2001 = vrot.slane %v1999, 7
          %v2002 = vsel %vm1838, %v2001, %v1997
          %v2003 = vrot.slane %v2000, 7
          %v2004 = vsel %vm1838, %v2003, %v1998
          %v2005 = vpack.c.b16 %v2004, %v2002
          %v2006 = vrot.slane %v2005, 3
          %v2009 = vsel %vm1819, %v2005, %v2006
          %2011 = vst [vmem:[%s1954 + $0x4] sm:$0x3] %v2009
          %2012 = vst [vmem:[#allocation1] sm:$0xff] %v1811
          %s2013 = scalar_lea.vmem [#allocation1], 3
          %v2014 = vld [vmem:[%s2013] ss:$4 sm:$0xff]
          %2015 = vst [vmem:[#allocation1 + $0x20] sm:$0xff] %v1813
          %s2016 = scalar_lea.vmem [#allocation1], 35
          %v2017 = vld [vmem:[%s2016] ss:$4 sm:$0xff]
          %2018 = vst [vmem:[#allocation1] ss:$4 sm:$0xff] %v2014
          %v2019 = vld [vmem:[#allocation1] sm:$0xff]
          %s2021 = scalar_lea.vmem [#allocation1], 32
          %2022 = vst [vmem:[%s2021] ss:$4 sm:$0xff] %v2017
          %v2023 = vld [vmem:[#allocation1 + $0x20] sm:$0xff]
          %v2025 = vunpack.c.l.b16 %v2019
          %v2026 = vunpack.c.h.b16 %v2019
          %v2027 = vunpack.c.l.b16 %v2023
          %v2028 = vunpack.c.h.b16 %v2023
          %v2029 = vrot.slane %v2025, 1
          %v2030 = vsel %vm1838, %v2027, %v2029
          %v2031 = vrot.slane %v2026, 1
          %v2032 = vsel %vm1838, %v2028, %v2031
          %v2033 = vpack.c.b16 %v2032, %v2030
          %v2034 = vrot.slane %v2033, 3
          %v2037 = vsel %vm1819, %v2033, %v2034
          %2039 = vst [vmem:[%s1954 + $0x6] sm:$0x3] %v2037
          %v2042 = vrot.slane %v1812, 3
          %v2043 = vrot.slane %v1814, 3
          %v2046 = vsel %vm1819, %v1812, %v2042
          %v2049 = vsel %vm1819, %v1814, %v2043
          %2050 = vst [vmem:[#allocation1] ss:$4 sm:$0xff] %v2046
          %v2051 = vld [vmem:[#allocation1] sm:$0xff]
          %s2053 = scalar_lea.vmem [#allocation1], 32
          %2054 = vst [vmem:[%s2053] ss:$4 sm:$0xff] %v2049
          %v2055 = vld [vmem:[#allocation1 + $0x20] sm:$0xff]
          %v2057 = vunpack.c.l.b16 %v2051
          %v2058 = vunpack.c.h.b16 %v2051
          %v2059 = vunpack.c.l.b16 %v2055
          %v2060 = vunpack.c.h.b16 %v2055
          %v2061 = vrot.slane %v2059, 7
          %v2062 = vsel %vm1838, %v2061, %v2057
          %v2063 = vrot.slane %v2060, 7
          %v2064 = vsel %vm1838, %v2063, %v2058
          %v2065 = vpack.c.b16 %v2064, %v2062
          %v2066 = vrot.slane %v2065, 3
          %v2069 = vsel %vm1819, %v2065, %v2066
          %s2071 = scalar_lea.vmem [#allocation5], 16
          %2072 = vst [vmem:[%s2071] sm:$0x3] %v2069
          %2073 = vst [vmem:[#allocation1] ss:$4 sm:$0xff] %v2046
          %v2074 = vld [vmem:[#allocation1] sm:$0xff]
          %s2076 = scalar_lea.vmem [#allocation1], 32
          %2077 = vst [vmem:[%s2076] ss:$4 sm:$0xff] %v2049
          %v2078 = vld [vmem:[#allocation1 + $0x20] sm:$0xff]
          %v2080 = vunpack.c.l.b16 %v2074
          %v2081 = vunpack.c.h.b16 %v2074
          %v2082 = vunpack.c.l.b16 %v2078
          %v2083 = vunpack.c.h.b16 %v2078
          %v2084 = vrot.slane %v2080, 1
          %v2085 = vsel %vm1838, %v2082, %v2084
          %v2086 = vrot.slane %v2081, 1
          %v2087 = vsel %vm1838, %v2083, %v2086
          %v2088 = vpack.c.b16 %v2087, %v2085
          %v2089 = vrot.slane %v2088, 3
          %v2092 = vsel %vm1819, %v2088, %v2089
          %2094 = vst [vmem:[%s2071 + $0x2] sm:$0x3] %v2092
          %2095 = vst [vmem:[#allocation1] sm:$0xff] %v1812
          %s2096 = scalar_lea.vmem [#allocation1], 1
          %v2097 = vld [vmem:[%s2096] ss:$4 sm:$0xff]
          %2098 = vst [vmem:[#allocation1 + $0x20] sm:$0xff] %v1814
          %s2099 = scalar_lea.vmem [#allocation1], 33
          %v2100 = vld [vmem:[%s2099] ss:$4 sm:$0xff]
          %2101 = vst [vmem:[#allocation1] ss:$4 sm:$0xff] %v2097
          %v2102 = vld [vmem:[#allocation1] sm:$0xff]
          %s2104 = scalar_lea.vmem [#allocation1], 32
          %2105 = vst [vmem:[%s2104] ss:$4 sm:$0xff] %v2100
          %v2106 = vld [vmem:[#allocation1 + $0x20] sm:$0xff]
          %v2108 = vunpack.c.l.b16 %v2102
          %v2109 = vunpack.c.h.b16 %v2102
          %v2110 = vunpack.c.l.b16 %v2106
          %v2111 = vunpack.c.h.b16 %v2106
          %v2112 = vrot.slane %v2110, 7
          %v2113 = vsel %vm1838, %v2112, %v2108
          %v2114 = vrot.slane %v2111, 7
          %v2115 = vsel %vm1838, %v2114, %v2109
          %v2116 = vpack.c.b16 %v2115, %v2113
          %v2117 = vrot.slane %v2116, 3
          %v2120 = vsel %vm1819, %v2116, %v2117
          %2122 = vst [vmem:[%s2071 + $0x4] sm:$0x3] %v2120
          %2123 = vst [vmem:[#allocation1] sm:$0xff] %v1812
          %s2124 = scalar_lea.vmem [#allocation1], 1
          %v2125 = vld [vmem:[%s2124] ss:$4 sm:$0xff]
          %2126 = vst [vmem:[#allocation1 + $0x20] sm:$0xff] %v1814
          %s2127 = scalar_lea.vmem [#allocation1], 33
          %v2128 = vld [vmem:[%s2127] ss:$4 sm:$0xff]
          %2129 = vst [vmem:[#allocation1] ss:$4 sm:$0xff] %v2125
          %v2130 = vld [vmem:[#allocation1] sm:$0xff]
          %s2132 = scalar_lea.vmem [#allocation1], 32
          %2133 = vst [vmem:[%s2132] ss:$4 sm:$0xff] %v2128
          %v2134 = vld [vmem:[#allocation1 + $0x20] sm:$0xff]
          %v2136 = vunpack.c.l.b16 %v2130
          %v2137 = vunpack.c.h.b16 %v2130
          %v2138 = vunpack.c.l.b16 %v2134
          %v2139 = vunpack.c.h.b16 %v2134
          %v2140 = vrot.slane %v2136, 1
          %v2141 = vsel %vm1838, %v2138, %v2140
          %v2142 = vrot.slane %v2137, 1
          %v2143 = vsel %vm1838, %v2139, %v2142
          %v2144 = vpack.c.b16 %v2143, %v2141
          %v2145 = vrot.slane %v2144, 3
          %v2148 = vsel %vm1819, %v2144, %v2145
          %2150 = vst [vmem:[%s2071 + $0x6] sm:$0x3] %v2148
          %2151 = vst [vmem:[#allocation1] sm:$0xff] %v1812
          %s2152 = scalar_lea.vmem [#allocation1], 2
          %v2153 = vld [vmem:[%s2152] ss:$4 sm:$0xff]
          %2154 = vst [vmem:[#allocation1 + $0x20] sm:$0xff] %v1814
          %s2155 = scalar_lea.vmem [#allocation1], 34
          %v2156 = vld [vmem:[%s2155] ss:$4 sm:$0xff]
          %2157 = vst [vmem:[#allocation1] ss:$4 sm:$0xff] %v2153
          %v2158 = vld [vmem:[#allocation1] sm:$0xff]
          %s2160 = scalar_lea.vmem [#allocation1], 32
          %2161 = vst [vmem:[%s2160] ss:$4 sm:$0xff] %v2156
          %v2162 = vld [vmem:[#allocation1 + $0x20] sm:$0xff]
          %v2164 = vunpack.c.l.b16 %v2158
          %v2165 = vunpack.c.h.b16 %v2158
          %v2166 = vunpack.c.l.b16 %v2162
          %v2167 = vunpack.c.h.b16 %v2162
          %v2168 = vrot.slane %v2166, 7
          %v2169 = vsel %vm1838, %v2168, %v2164
          %v2170 = vrot.slane %v2167, 7
          %v2171 = vsel %vm1838, %v2170, %v2165
          %v2172 = vpack.c.b16 %v2171, %v2169
          %v2173 = vrot.slane %v2172, 3
          %v2176 = vsel %vm1819, %v2172, %v2173
          %s2178 = scalar_lea.vmem [#allocation5], 24
          %2179 = vst [vmem:[%s2178] sm:$0x3] %v2176
          %2180 = vst [vmem:[#allocation1] sm:$0xff] %v1812
          %s2181 = scalar_lea.vmem [#allocation1], 2
          %v2182 = vld [vmem:[%s2181] ss:$4 sm:$0xff]
          %2183 = vst [vmem:[#allocation1 + $0x20] sm:$0xff] %v1814
          %s2184 = scalar_lea.vmem [#allocation1], 34
          %v2185 = vld [vmem:[%s2184] ss:$4 sm:$0xff]
          %2186 = vst [vmem:[#allocation1] ss:$4 sm:$0xff] %v2182
          %v2187 = vld [vmem:[#allocation1] sm:$0xff]
          %s2189 = scalar_lea.vmem [#allocation1], 32
          %2190 = vst [vmem:[%s2189] ss:$4 sm:$0xff] %v2185
          %v2191 = vld [vmem:[#allocation1 + $0x20] sm:$0xff]
          %v2193 = vunpack.c.l.b16 %v2187
          %v2194 = vunpack.c.h.b16 %v2187
          %v2195 = vunpack.c.l.b16 %v2191
          %v2196 = vunpack.c.h.b16 %v2191
          %v2197 = vrot.slane %v2193, 1
          %v2198 = vsel %vm1838, %v2195, %v2197
          %v2199 = vrot.slane %v2194, 1
          %v2200 = vsel %vm1838, %v2196, %v2199
          %v2201 = vpack.c.b16 %v2200, %v2198
          %v2202 = vrot.slane %v2201, 3
          %v2205 = vsel %vm1819, %v2201, %v2202
          %2207 = vst [vmem:[%s2178 + $0x2] sm:$0x3] %v2205
          %2208 = vst [vmem:[#allocation1] sm:$0xff] %v1812
          %s2209 = scalar_lea.vmem [#allocation1], 3
          %v2210 = vld [vmem:[%s2209] ss:$4 sm:$0xff]
          %2211 = vst [vmem:[#allocation1 + $0x20] sm:$0xff] %v1814
          %s2212 = scalar_lea.vmem [#allocation1], 35
          %v2213 = vld [vmem:[%s2212] ss:$4 sm:$0xff]
          %2214 = vst [vmem:[#allocation1] ss:$4 sm:$0xff] %v2210
          %v2215 = vld [vmem:[#allocation1] sm:$0xff]
          %s2217 = scalar_lea.vmem [#allocation1], 32
          %2218 = vst [vmem:[%s2217] ss:$4 sm:$0xff] %v2213
          %v2219 = vld [vmem:[#allocation1 + $0x20] sm:$0xff]
          %v2221 = vunpack.c.l.b16 %v2215
          %v2222 = vunpack.c.h.b16 %v2215
          %v2223 = vunpack.c.l.b16 %v2219
          %v2224 = vunpack.c.h.b16 %v2219
          %v2225 = vrot.slane %v2223, 7
          %v2226 = vsel %vm1838, %v2225, %v2221
          %v2227 = vrot.slane %v2224, 7
          %v2228 = vsel %vm1838, %v2227, %v2222
          %v2229 = vpack.c.b16 %v2228, %v2226
          %v2230 = vrot.slane %v2229, 3
          %v2233 = vsel %vm1819, %v2229, %v2230
          %2235 = vst [vmem:[%s2178 + $0x4] sm:$0x3] %v2233
          %2236 = vst [vmem:[#allocation1] sm:$0xff] %v1812
          %s2237 = scalar_lea.vmem [#allocation1], 3
          %v2238 = vld [vmem:[%s2237] ss:$4 sm:$0xff]
          %2239 = vst [vmem:[#allocation1 + $0x20] sm:$0xff] %v1814
          %s2240 = scalar_lea.vmem [#allocation1], 35
          %v2241 = vld [vmem:[%s2240] ss:$4 sm:$0xff]
          %2242 = vst [vmem:[#allocation1] ss:$4 sm:$0xff] %v2238
          %v2243 = vld [vmem:[#allocation1] sm:$0xff]
          %s2245 = scalar_lea.vmem [#allocation1], 32
          %2246 = vst [vmem:[%s2245] ss:$4 sm:$0xff] %v2241
          %v2247 = vld [vmem:[#allocation1 + $0x20] sm:$0xff]
          %v2249 = vunpack.c.l.b16 %v2243
          %v2250 = vunpack.c.h.b16 %v2243
          %v2251 = vunpack.c.l.b16 %v2247
          %v2252 = vunpack.c.h.b16 %v2247
          %v2253 = vrot.slane %v2249, 1
          %v2254 = vsel %vm1838, %v2251, %v2253
          %v2255 = vrot.slane %v2250, 1
          %v2256 = vsel %vm1838, %v2252, %v2255
          %v2257 = vpack.c.b16 %v2256, %v2254
          %v2258 = vrot.slane %v2257, 3
          %v2261 = vsel %vm1819, %v2257, %v2258
          %2263 = vst [vmem:[%s2178 + $0x6] sm:$0x3] %v2261
          %2264 = vst [vmem:[#allocation6] sm:$0xff] 0.0
        $region132: #{deep_wifi_cnn_forward.1} parent=75 // pred_fallthru
          _
        %v2265 = vld [vmem:[#allocation6] sm:$0xff]
        %s2266 = smul.u32 %s35, 8
        %s2267 = scalar_lea.vmem [#allocation5], %s2266
        %v2268 = vld [vmem:[%s2267] sm:$0xff]
        %v2269 = vld [vmem:[%s603] sm:$0xff]
        %v2270 = vld [vmem:[%s603 + $0x8] sm:$0xff]
        %v2271 = vld [vmem:[%s603 + $0x10] sm:$0xff]
        %v2272 = vld [vmem:[%s603 + $0x18] sm:$0xff]
        %v2273 = vld [vmem:[%s603 + $0x20] sm:$0xff]
        %v2274 = vld [vmem:[%s603 + $0x28] sm:$0xff]
        %v2275 = vld [vmem:[%s603 + $0x30] sm:$0xff]
        %v2276 = vld [vmem:[%s603 + $0x38] sm:$0xff]
        %v2277 = vld [vmem:[%s603 + $0x40] sm:$0xff]
        %v2278 = vld [vmem:[%s603 + $0x48] sm:$0xff]
        %v2279 = vld [vmem:[%s603 + $0x50] sm:$0xff]
        %v2280 = vld [vmem:[%s603 + $0x58] sm:$0xff]
        %v2281 = vld [vmem:[%s603 + $0x60] sm:$0xff]
        %v2282 = vld [vmem:[%s603 + $0x68] sm:$0xff]
        %v2283 = vld [vmem:[%s603 + $0x70] sm:$0xff]
        %v2284 = vld [vmem:[%s603 + $0x78] sm:$0xff]
        %v2285 = vld [vmem:[%s603 + $0x80] sm:$0xff]
        %v2286 = vld [vmem:[%s603 + $0x88] sm:$0xff]
        %v2287 = vld [vmem:[%s603 + $0x90] sm:$0xff]
        %v2288 = vld [vmem:[%s603 + $0x98] sm:$0xff]
        %v2289 = vld [vmem:[%s603 + $0xa0] sm:$0xff]
        %v2290 = vld [vmem:[%s603 + $0xa8] sm:$0xff]
        %v2291 = vld [vmem:[%s603 + $0xb0] sm:$0xff]
        %v2292 = vld [vmem:[%s603 + $0xb8] sm:$0xff]
        %v2293 = vld [vmem:[%s603 + $0xc0] sm:$0xff]
        %v2294 = vld [vmem:[%s603 + $0xc8] sm:$0xff]
        %v2295 = vld [vmem:[%s603 + $0xd0] sm:$0xff]
        %v2296 = vld [vmem:[%s603 + $0xd8] sm:$0xff]
        %v2297 = vld [vmem:[%s603 + $0xe0] sm:$0xff]
        %v2298 = vld [vmem:[%s603 + $0xe8] sm:$0xff]
        %v2299 = vld [vmem:[%s603 + $0xf0] sm:$0xff]
        %v2300 = vld [vmem:[%s603 + $0xf8] sm:$0xff]
        %v2301 = vld [vmem:[%s603 + $0x100] sm:$0xff]
        %v2302 = vld [vmem:[%s603 + $0x108] sm:$0xff]
        %v2303 = vld [vmem:[%s603 + $0x110] sm:$0xff]
        %v2304 = vld [vmem:[%s603 + $0x118] sm:$0xff]
        %v2305 = vld [vmem:[%s603 + $0x120] sm:$0xff]
        %v2306 = vld [vmem:[%s603 + $0x128] sm:$0xff]
        %v2307 = vld [vmem:[%s603 + $0x130] sm:$0xff]
        %v2308 = vld [vmem:[%s603 + $0x138] sm:$0xff]
        %v2309 = vld [vmem:[%s603 + $0x140] sm:$0xff]
        %v2310 = vld [vmem:[%s603 + $0x148] sm:$0xff]
        %v2311 = vld [vmem:[%s603 + $0x150] sm:$0xff]
        %v2312 = vld [vmem:[%s603 + $0x158] sm:$0xff]
        %v2313 = vld [vmem:[%s603 + $0x160] sm:$0xff]
        %v2314 = vld [vmem:[%s603 + $0x168] sm:$0xff]
        %v2315 = vld [vmem:[%s603 + $0x170] sm:$0xff]
        %v2316 = vld [vmem:[%s603 + $0x178] sm:$0xff]
        %v2317 = vld [vmem:[%s603 + $0x180] sm:$0xff]
        %v2318 = vld [vmem:[%s603 + $0x188] sm:$0xff]
        %v2319 = vld [vmem:[%s603 + $0x190] sm:$0xff]
        %v2320 = vld [vmem:[%s603 + $0x198] sm:$0xff]
        %v2321 = vld [vmem:[%s603 + $0x1a0] sm:$0xff]
        %v2322 = vld [vmem:[%s603 + $0x1a8] sm:$0xff]
        %v2323 = vld [vmem:[%s603 + $0x1b0] sm:$0xff]
        %v2324 = vld [vmem:[%s603 + $0x1b8] sm:$0xff]
        %v2325 = vld [vmem:[%s603 + $0x1c0] sm:$0xff]
        %v2326 = vld [vmem:[%s603 + $0x1c8] sm:$0xff]
        %v2327 = vld [vmem:[%s603 + $0x1d0] sm:$0xff]
        %v2328 = vld [vmem:[%s603 + $0x1d8] sm:$0xff]
        %v2329 = vld [vmem:[%s603 + $0x1e0] sm:$0xff]
        %v2330 = vld [vmem:[%s603 + $0x1e8] sm:$0xff]
        %v2331 = vld [vmem:[%s603 + $0x1f0] sm:$0xff]
        %v2332 = vld [vmem:[%s603 + $0x1f8] sm:$0xff]
        %v2333 = vld [vmem:[%s603 + $0x200] sm:$0xff]
        %v2334 = vld [vmem:[%s603 + $0x208] sm:$0xff]
        %v2335 = vld [vmem:[%s603 + $0x210] sm:$0xff]
        %v2336 = vld [vmem:[%s603 + $0x218] sm:$0xff]
        %v2337 = vld [vmem:[%s603 + $0x220] sm:$0xff]
        %v2338 = vld [vmem:[%s603 + $0x228] sm:$0xff]
        %v2339 = vld [vmem:[%s603 + $0x230] sm:$0xff]
        %v2340 = vld [vmem:[%s603 + $0x238] sm:$0xff]
        %v2341 = vld [vmem:[%s603 + $0x240] sm:$0xff]
        %v2342 = vld [vmem:[%s603 + $0x248] sm:$0xff]
        %v2343 = vld [vmem:[%s603 + $0x250] sm:$0xff]
        %v2344 = vld [vmem:[%s603 + $0x258] sm:$0xff]
        %v2345 = vld [vmem:[%s603 + $0x260] sm:$0xff]
        %v2346 = vld [vmem:[%s603 + $0x268] sm:$0xff]
        %v2347 = vld [vmem:[%s603 + $0x270] sm:$0xff]
        %v2348 = vld [vmem:[%s603 + $0x278] sm:$0xff]
        %v2349 = vld [vmem:[%s603 + $0x280] sm:$0xff]
        %v2350 = vld [vmem:[%s603 + $0x288] sm:$0xff]
        %v2351 = vld [vmem:[%s603 + $0x290] sm:$0xff]
        %v2352 = vld [vmem:[%s603 + $0x298] sm:$0xff]
        %v2353 = vld [vmem:[%s603 + $0x2a0] sm:$0xff]
        %v2354 = vld [vmem:[%s603 + $0x2a8] sm:$0xff]
        %v2355 = vld [vmem:[%s603 + $0x2b0] sm:$0xff]
        %v2356 = vld [vmem:[%s603 + $0x2b8] sm:$0xff]
        %v2357 = vld [vmem:[%s603 + $0x2c0] sm:$0xff]
        %v2358 = vld [vmem:[%s603 + $0x2c8] sm:$0xff]
        %v2359 = vld [vmem:[%s603 + $0x2d0] sm:$0xff]
        %v2360 = vld [vmem:[%s603 + $0x2d8] sm:$0xff]
        %v2361 = vld [vmem:[%s603 + $0x2e0] sm:$0xff]
        %v2362 = vld [vmem:[%s603 + $0x2e8] sm:$0xff]
        %v2363 = vld [vmem:[%s603 + $0x2f0] sm:$0xff]
        %v2364 = vld [vmem:[%s603 + $0x2f8] sm:$0xff]
        %v2365 = vld [vmem:[%s603 + $0x300] sm:$0xff]
        %v2366 = vld [vmem:[%s603 + $0x308] sm:$0xff]
        %v2367 = vld [vmem:[%s603 + $0x310] sm:$0xff]
        %v2368 = vld [vmem:[%s603 + $0x318] sm:$0xff]
        %v2369 = vld [vmem:[%s603 + $0x320] sm:$0xff]
        %v2370 = vld [vmem:[%s603 + $0x328] sm:$0xff]
        %v2371 = vld [vmem:[%s603 + $0x330] sm:$0xff]
        %v2372 = vld [vmem:[%s603 + $0x338] sm:$0xff]
        %v2373 = vld [vmem:[%s603 + $0x340] sm:$0xff]
        %v2374 = vld [vmem:[%s603 + $0x348] sm:$0xff]
        %v2375 = vld [vmem:[%s603 + $0x350] sm:$0xff]
        %v2376 = vld [vmem:[%s603 + $0x358] sm:$0xff]
        %v2377 = vld [vmem:[%s603 + $0x360] sm:$0xff]
        %v2378 = vld [vmem:[%s603 + $0x368] sm:$0xff]
        %v2379 = vld [vmem:[%s603 + $0x370] sm:$0xff]
        %v2380 = vld [vmem:[%s603 + $0x378] sm:$0xff]
        %v2381 = vld [vmem:[%s603 + $0x380] sm:$0xff]
        %v2382 = vld [vmem:[%s603 + $0x388] sm:$0xff]
        %v2383 = vld [vmem:[%s603 + $0x390] sm:$0xff]
        %v2384 = vld [vmem:[%s603 + $0x398] sm:$0xff]
        %v2385 = vld [vmem:[%s603 + $0x3a0] sm:$0xff]
        %v2386 = vld [vmem:[%s603 + $0x3a8] sm:$0xff]
        %v2387 = vld [vmem:[%s603 + $0x3b0] sm:$0xff]
        %v2388 = vld [vmem:[%s603 + $0x3b8] sm:$0xff]
        %v2389 = vld [vmem:[%s603 + $0x3c0] sm:$0xff]
        %v2390 = vld [vmem:[%s603 + $0x3c8] sm:$0xff]
        %v2391 = vld [vmem:[%s603 + $0x3d0] sm:$0xff]
        %v2392 = vld [vmem:[%s603 + $0x3d8] sm:$0xff]
        %v2393 = vld [vmem:[%s603 + $0x3e0] sm:$0xff]
        %v2394 = vld [vmem:[%s603 + $0x3e8] sm:$0xff]
        %v2395 = vld [vmem:[%s603 + $0x3f0] sm:$0xff]
        %v2396 = vld [vmem:[%s603 + $0x3f8] sm:$0xff]
        %v2397 = vld [vmem:[%s603 + $0x400] sm:$0xff]
        %v2398 = vld [vmem:[%s603 + $0x408] sm:$0xff]
        %v2399 = vld [vmem:[%s603 + $0x410] sm:$0xff]
        %v2400 = vld [vmem:[%s603 + $0x418] sm:$0xff]
        %v2401 = vld [vmem:[%s603 + $0x420] sm:$0xff]
        %v2402 = vld [vmem:[%s603 + $0x428] sm:$0xff]
        %v2403 = vld [vmem:[%s603 + $0x430] sm:$0xff]
        %v2404 = vld [vmem:[%s603 + $0x438] sm:$0xff]
        %v2405 = vld [vmem:[%s603 + $0x440] sm:$0xff]
        %v2406 = vld [vmem:[%s603 + $0x448] sm:$0xff]
        %v2407 = vld [vmem:[%s603 + $0x450] sm:$0xff]
        %v2408 = vld [vmem:[%s603 + $0x458] sm:$0xff]
        %v2409 = vld [vmem:[%s603 + $0x460] sm:$0xff]
        %v2410 = vld [vmem:[%s603 + $0x468] sm:$0xff]
        %v2411 = vld [vmem:[%s603 + $0x470] sm:$0xff]
        %v2412 = vld [vmem:[%s603 + $0x478] sm:$0xff]
        %v2413 = vld [vmem:[%s603 + $0x480] sm:$0xff]
        %v2414 = vld [vmem:[%s603 + $0x488] sm:$0xff]
        %v2415 = vld [vmem:[%s603 + $0x490] sm:$0xff]
        %v2416 = vld [vmem:[%s603 + $0x498] sm:$0xff]
        %v2417 = vld [vmem:[%s603 + $0x4a0] sm:$0xff]
        %v2418 = vld [vmem:[%s603 + $0x4a8] sm:$0xff]
        %v2419 = vld [vmem:[%s603 + $0x4b0] sm:$0xff]
        %v2420 = vld [vmem:[%s603 + $0x4b8] sm:$0xff]
        %v2421 = vld [vmem:[%s603 + $0x4c0] sm:$0xff]
        %v2422 = vld [vmem:[%s603 + $0x4c8] sm:$0xff]
        %v2423 = vld [vmem:[%s603 + $0x4d0] sm:$0xff]
        %v2424 = vld [vmem:[%s603 + $0x4d8] sm:$0xff]
        %v2425 = vld [vmem:[%s603 + $0x4e0] sm:$0xff]
        %v2426 = vld [vmem:[%s603 + $0x4e8] sm:$0xff]
        %v2427 = vld [vmem:[%s603 + $0x4f0] sm:$0xff]
        %v2428 = vld [vmem:[%s603 + $0x4f8] sm:$0xff]
        %v2429 = vld [vmem:[%s603 + $0x500] sm:$0xff]
        %v2430 = vld [vmem:[%s603 + $0x508] sm:$0xff]
        %v2431 = vld [vmem:[%s603 + $0x510] sm:$0xff]
        %v2432 = vld [vmem:[%s603 + $0x518] sm:$0xff]
        %v2433 = vld [vmem:[%s603 + $0x520] sm:$0xff]
        %v2434 = vld [vmem:[%s603 + $0x528] sm:$0xff]
        %v2435 = vld [vmem:[%s603 + $0x530] sm:$0xff]
        %v2436 = vld [vmem:[%s603 + $0x538] sm:$0xff]
        %v2437 = vld [vmem:[%s603 + $0x540] sm:$0xff]
        %v2438 = vld [vmem:[%s603 + $0x548] sm:$0xff]
        %v2439 = vld [vmem:[%s603 + $0x550] sm:$0xff]
        %v2440 = vld [vmem:[%s603 + $0x558] sm:$0xff]
        %v2441 = vld [vmem:[%s603 + $0x560] sm:$0xff]
        %v2442 = vld [vmem:[%s603 + $0x568] sm:$0xff]
        %v2443 = vld [vmem:[%s603 + $0x570] sm:$0xff]
        %v2444 = vld [vmem:[%s603 + $0x578] sm:$0xff]
        %v2445 = vld [vmem:[%s603 + $0x580] sm:$0xff]
        %v2446 = vld [vmem:[%s603 + $0x588] sm:$0xff]
        %v2447 = vld [vmem:[%s603 + $0x590] sm:$0xff]
        %v2448 = vld [vmem:[%s603 + $0x598] sm:$0xff]
        %v2449 = vld [vmem:[%s603 + $0x5a0] sm:$0xff]
        %v2450 = vld [vmem:[%s603 + $0x5a8] sm:$0xff]
        %v2451 = vld [vmem:[%s603 + $0x5b0] sm:$0xff]
        %v2452 = vld [vmem:[%s603 + $0x5b8] sm:$0xff]
        %v2453 = vld [vmem:[%s603 + $0x5c0] sm:$0xff]
        %v2454 = vld [vmem:[%s603 + $0x5c8] sm:$0xff]
        %v2455 = vld [vmem:[%s603 + $0x5d0] sm:$0xff]
        %v2456 = vld [vmem:[%s603 + $0x5d8] sm:$0xff]
        %v2457 = vld [vmem:[%s603 + $0x5e0] sm:$0xff]
        %v2458 = vld [vmem:[%s603 + $0x5e8] sm:$0xff]
        %v2459 = vld [vmem:[%s603 + $0x5f0] sm:$0xff]
        %v2460 = vld [vmem:[%s603 + $0x5f8] sm:$0xff]
        %v2461 = vld [vmem:[%s603 + $0x600] sm:$0xff]
        %v2462 = vld [vmem:[%s603 + $0x608] sm:$0xff]
        %v2463 = vld [vmem:[%s603 + $0x610] sm:$0xff]
        %v2464 = vld [vmem:[%s603 + $0x618] sm:$0xff]
        %v2465 = vld [vmem:[%s603 + $0x620] sm:$0xff]
        %v2466 = vld [vmem:[%s603 + $0x628] sm:$0xff]
        %v2467 = vld [vmem:[%s603 + $0x630] sm:$0xff]
        %v2468 = vld [vmem:[%s603 + $0x638] sm:$0xff]
        %v2469 = vld [vmem:[%s603 + $0x640] sm:$0xff]
        %v2470 = vld [vmem:[%s603 + $0x648] sm:$0xff]
        %v2471 = vld [vmem:[%s603 + $0x650] sm:$0xff]
        %v2472 = vld [vmem:[%s603 + $0x658] sm:$0xff]
        %v2473 = vld [vmem:[%s603 + $0x660] sm:$0xff]
        %v2474 = vld [vmem:[%s603 + $0x668] sm:$0xff]
        %v2475 = vld [vmem:[%s603 + $0x670] sm:$0xff]
        %v2476 = vld [vmem:[%s603 + $0x678] sm:$0xff]
        %v2477 = vld [vmem:[%s603 + $0x680] sm:$0xff]
        %v2478 = vld [vmem:[%s603 + $0x688] sm:$0xff]
        %v2479 = vld [vmem:[%s603 + $0x690] sm:$0xff]
        %v2480 = vld [vmem:[%s603 + $0x698] sm:$0xff]
        %v2481 = vld [vmem:[%s603 + $0x6a0] sm:$0xff]
        %v2482 = vld [vmem:[%s603 + $0x6a8] sm:$0xff]
        %v2483 = vld [vmem:[%s603 + $0x6b0] sm:$0xff]
        %v2484 = vld [vmem:[%s603 + $0x6b8] sm:$0xff]
        %v2485 = vld [vmem:[%s603 + $0x6c0] sm:$0xff]
        %v2486 = vld [vmem:[%s603 + $0x6c8] sm:$0xff]
        %v2487 = vld [vmem:[%s603 + $0x6d0] sm:$0xff]
        %v2488 = vld [vmem:[%s603 + $0x6d8] sm:$0xff]
        %v2489 = vld [vmem:[%s603 + $0x6e0] sm:$0xff]
        %v2490 = vld [vmem:[%s603 + $0x6e8] sm:$0xff]
        %v2491 = vld [vmem:[%s603 + $0x6f0] sm:$0xff]
        %v2492 = vld [vmem:[%s603 + $0x6f8] sm:$0xff]
        %v2493 = vld [vmem:[%s603 + $0x700] sm:$0xff]
        %v2494 = vld [vmem:[%s603 + $0x708] sm:$0xff]
        %v2495 = vld [vmem:[%s603 + $0x710] sm:$0xff]
        %v2496 = vld [vmem:[%s603 + $0x718] sm:$0xff]
        %v2497 = vld [vmem:[%s603 + $0x720] sm:$0xff]
        %v2498 = vld [vmem:[%s603 + $0x728] sm:$0xff]
        %v2499 = vld [vmem:[%s603 + $0x730] sm:$0xff]
        %v2500 = vld [vmem:[%s603 + $0x738] sm:$0xff]
        %v2501 = vld [vmem:[%s603 + $0x740] sm:$0xff]
        %v2502 = vld [vmem:[%s603 + $0x748] sm:$0xff]
        %v2503 = vld [vmem:[%s603 + $0x750] sm:$0xff]
        %v2504 = vld [vmem:[%s603 + $0x758] sm:$0xff]
        %v2505 = vld [vmem:[%s603 + $0x760] sm:$0xff]
        %v2506 = vld [vmem:[%s603 + $0x768] sm:$0xff]
        %v2507 = vld [vmem:[%s603 + $0x770] sm:$0xff]
        %v2508 = vld [vmem:[%s603 + $0x778] sm:$0xff]
        %v2509 = vld [vmem:[%s603 + $0x780] sm:$0xff]
        %v2510 = vld [vmem:[%s603 + $0x788] sm:$0xff]
        %v2511 = vld [vmem:[%s603 + $0x790] sm:$0xff]
        %v2512 = vld [vmem:[%s603 + $0x798] sm:$0xff]
        %v2513 = vld [vmem:[%s603 + $0x7a0] sm:$0xff]
        %v2514 = vld [vmem:[%s603 + $0x7a8] sm:$0xff]
        %v2515 = vld [vmem:[%s603 + $0x7b0] sm:$0xff]
        %v2516 = vld [vmem:[%s603 + $0x7b8] sm:$0xff]
        %v2517 = vld [vmem:[%s603 + $0x7c0] sm:$0xff]
        %v2518 = vld [vmem:[%s603 + $0x7c8] sm:$0xff]
        %v2519 = vld [vmem:[%s603 + $0x7d0] sm:$0xff]
        %v2520 = vld [vmem:[%s603 + $0x7d8] sm:$0xff]
        %v2521 = vld [vmem:[%s603 + $0x7e0] sm:$0xff]
        %v2522 = vld [vmem:[%s603 + $0x7e8] sm:$0xff]
        %v2523 = vld [vmem:[%s603 + $0x7f0] sm:$0xff]
        %v2524 = vld [vmem:[%s603 + $0x7f8] sm:$0xff]
        %2526 = vst [vmem:[#allocation1] ss:$9 sm:$0xff] %v2268
        %v2527 = vld [vmem:[#allocation1] sm:$0xff]
        %v2528 = vld [vmem:[#allocation1 + $0x9] sm:$0xff]
        %v2529 = vld [vmem:[#allocation1 + $0x12] sm:$0xff]
        %v2530 = vld [vmem:[#allocation1 + $0x1b] sm:$0xff]
        %v2531 = vld [vmem:[#allocation1 + $0x24] sm:$0xff]
        %v2532 = vld [vmem:[#allocation1 + $0x2d] sm:$0xff]
        %v2533 = vld [vmem:[#allocation1 + $0x36] sm:$0xff]
        %v2534 = vld [vmem:[#allocation1 + $0x3f] sm:$0xff]
        %v2799 = vunpack.c.l.b16 %v2269
        %v2800 = vunpack.c.h.b16 %v2269
        %v2801 = vunpack.c.l.b16 %v2270
        %v2802 = vunpack.c.h.b16 %v2270
        %v2803 = vunpack.c.l.b16 %v2271
        %v2804 = vunpack.c.h.b16 %v2271
        %v2805 = vunpack.c.l.b16 %v2272
        %v2806 = vunpack.c.h.b16 %v2272
        %v2807 = vunpack.c.l.b16 %v2273
        %v2808 = vunpack.c.h.b16 %v2273
        %v2809 = vunpack.c.l.b16 %v2274
        %v2810 = vunpack.c.h.b16 %v2274
        %v2811 = vunpack.c.l.b16 %v2275
        %v2812 = vunpack.c.h.b16 %v2275
        %v2813 = vunpack.c.l.b16 %v2276
        %v2814 = vunpack.c.h.b16 %v2276
        %v2815 = vunpack.c.l.b16 %v2277
        %v2816 = vunpack.c.h.b16 %v2277
        %v2817 = vunpack.c.l.b16 %v2278
        %v2818 = vunpack.c.h.b16 %v2278
        %v2819 = vunpack.c.l.b16 %v2279
        %v2820 = vunpack.c.h.b16 %v2279
        %v2821 = vunpack.c.l.b16 %v2280
        %v2822 = vunpack.c.h.b16 %v2280
        %v2823 = vunpack.c.l.b16 %v2281
        %v2824 = vunpack.c.h.b16 %v2281
        %v2825 = vunpack.c.l.b16 %v2282
        %v2826 = vunpack.c.h.b16 %v2282
        %v2827 = vunpack.c.l.b16 %v2283
        %v2828 = vunpack.c.h.b16 %v2283
        %v2829 = vunpack.c.l.b16 %v2284
        %v2830 = vunpack.c.h.b16 %v2284
        %v2831 = vunpack.c.l.b16 %v2285
        %v2832 = vunpack.c.h.b16 %v2285
        %v2833 = vunpack.c.l.b16 %v2286
        %v2834 = vunpack.c.h.b16 %v2286
        %v2835 = vunpack.c.l.b16 %v2287
        %v2836 = vunpack.c.h.b16 %v2287
        %v2837 = vunpack.c.l.b16 %v2288
        %v2838 = vunpack.c.h.b16 %v2288
        %v2839 = vunpack.c.l.b16 %v2289
        %v2840 = vunpack.c.h.b16 %v2289
        %v2841 = vunpack.c.l.b16 %v2290
        %v2842 = vunpack.c.h.b16 %v2290
        %v2843 = vunpack.c.l.b16 %v2291
        %v2844 = vunpack.c.h.b16 %v2291
        %v2845 = vunpack.c.l.b16 %v2292
        %v2846 = vunpack.c.h.b16 %v2292
        %v2847 = vunpack.c.l.b16 %v2293
        %v2848 = vunpack.c.h.b16 %v2293
        %v2849 = vunpack.c.l.b16 %v2294
        %v2850 = vunpack.c.h.b16 %v2294
        %v2851 = vunpack.c.l.b16 %v2295
        %v2852 = vunpack.c.h.b16 %v2295
        %v2853 = vunpack.c.l.b16 %v2296
        %v2854 = vunpack.c.h.b16 %v2296
        %v2855 = vunpack.c.l.b16 %v2297
        %v2856 = vunpack.c.h.b16 %v2297
        %v2857 = vunpack.c.l.b16 %v2298
        %v2858 = vunpack.c.h.b16 %v2298
        %v2859 = vunpack.c.l.b16 %v2299
        %v2860 = vunpack.c.h.b16 %v2299
        %v2861 = vunpack.c.l.b16 %v2300
        %v2862 = vunpack.c.h.b16 %v2300
        %v2863 = vunpack.c.l.b16 %v2301
        %v2864 = vunpack.c.h.b16 %v2301
        %v2865 = vunpack.c.l.b16 %v2302
        %v2866 = vunpack.c.h.b16 %v2302
        %v2867 = vunpack.c.l.b16 %v2303
        %v2868 = vunpack.c.h.b16 %v2303
        %v2869 = vunpack.c.l.b16 %v2304
        %v2870 = vunpack.c.h.b16 %v2304
        %v2871 = vunpack.c.l.b16 %v2305
        %v2872 = vunpack.c.h.b16 %v2305
        %v2873 = vunpack.c.l.b16 %v2306
        %v2874 = vunpack.c.h.b16 %v2306
        %v2875 = vunpack.c.l.b16 %v2307
        %v2876 = vunpack.c.h.b16 %v2307
        %v2877 = vunpack.c.l.b16 %v2308
        %v2878 = vunpack.c.h.b16 %v2308
        %v2879 = vunpack.c.l.b16 %v2309
        %v2880 = vunpack.c.h.b16 %v2309
        %v2881 = vunpack.c.l.b16 %v2310
        %v2882 = vunpack.c.h.b16 %v2310
        %v2883 = vunpack.c.l.b16 %v2311
        %v2884 = vunpack.c.h.b16 %v2311
        %v2885 = vunpack.c.l.b16 %v2312
        %v2886 = vunpack.c.h.b16 %v2312
        %v2887 = vunpack.c.l.b16 %v2313
        %v2888 = vunpack.c.h.b16 %v2313
        %v2889 = vunpack.c.l.b16 %v2314
        %v2890 = vunpack.c.h.b16 %v2314
        %v2891 = vunpack.c.l.b16 %v2315
        %v2892 = vunpack.c.h.b16 %v2315
        %v2893 = vunpack.c.l.b16 %v2316
        %v2894 = vunpack.c.h.b16 %v2316
        %v2895 = vunpack.c.l.b16 %v2317
        %v2896 = vunpack.c.h.b16 %v2317
        %v2897 = vunpack.c.l.b16 %v2318
        %v2898 = vunpack.c.h.b16 %v2318
        %v2899 = vunpack.c.l.b16 %v2319
        %v2900 = vunpack.c.h.b16 %v2319
        %v2901 = vunpack.c.l.b16 %v2320
        %v2902 = vunpack.c.h.b16 %v2320
        %v2903 = vunpack.c.l.b16 %v2321
        %v2904 = vunpack.c.h.b16 %v2321
        %v2905 = vunpack.c.l.b16 %v2322
        %v2906 = vunpack.c.h.b16 %v2322
        %v2907 = vunpack.c.l.b16 %v2323
        %v2908 = vunpack.c.h.b16 %v2323
        %v2909 = vunpack.c.l.b16 %v2324
        %v2910 = vunpack.c.h.b16 %v2324
        %v2911 = vunpack.c.l.b16 %v2325
        %v2912 = vunpack.c.h.b16 %v2325
        %v2913 = vunpack.c.l.b16 %v2326
        %v2914 = vunpack.c.h.b16 %v2326
        %v2915 = vunpack.c.l.b16 %v2327
        %v2916 = vunpack.c.h.b16 %v2327
        %v2917 = vunpack.c.l.b16 %v2328
        %v2918 = vunpack.c.h.b16 %v2328
        %v2919 = vunpack.c.l.b16 %v2329
        %v2920 = vunpack.c.h.b16 %v2329
        %v2921 = vunpack.c.l.b16 %v2330
        %v2922 = vunpack.c.h.b16 %v2330
        %v2923 = vunpack.c.l.b16 %v2331
        %v2924 = vunpack.c.h.b16 %v2331
        %v2925 = vunpack.c.l.b16 %v2332
        %v2926 = vunpack.c.h.b16 %v2332
        %v2927 = vunpack.c.l.b16 %v2333
        %v2928 = vunpack.c.h.b16 %v2333
        %v2929 = vunpack.c.l.b16 %v2334
        %v2930 = vunpack.c.h.b16 %v2334
        %v2931 = vunpack.c.l.b16 %v2335
        %v2932 = vunpack.c.h.b16 %v2335
        %v2933 = vunpack.c.l.b16 %v2336
        %v2934 = vunpack.c.h.b16 %v2336
        %v2935 = vunpack.c.l.b16 %v2337
        %v2936 = vunpack.c.h.b16 %v2337
        %v2937 = vunpack.c.l.b16 %v2338
        %v2938 = vunpack.c.h.b16 %v2338
        %v2939 = vunpack.c.l.b16 %v2339
        %v2940 = vunpack.c.h.b16 %v2339
        %v2941 = vunpack.c.l.b16 %v2340
        %v2942 = vunpack.c.h.b16 %v2340
        %v2943 = vunpack.c.l.b16 %v2341
        %v2944 = vunpack.c.h.b16 %v2341
        %v2945 = vunpack.c.l.b16 %v2342
        %v2946 = vunpack.c.h.b16 %v2342
        %v2947 = vunpack.c.l.b16 %v2343
        %v2948 = vunpack.c.h.b16 %v2343
        %v2949 = vunpack.c.l.b16 %v2344
        %v2950 = vunpack.c.h.b16 %v2344
        %v2951 = vunpack.c.l.b16 %v2345
        %v2952 = vunpack.c.h.b16 %v2345
        %v2953 = vunpack.c.l.b16 %v2346
        %v2954 = vunpack.c.h.b16 %v2346
        %v2955 = vunpack.c.l.b16 %v2347
        %v2956 = vunpack.c.h.b16 %v2347
        %v2957 = vunpack.c.l.b16 %v2348
        %v2958 = vunpack.c.h.b16 %v2348
        %v2959 = vunpack.c.l.b16 %v2349
        %v2960 = vunpack.c.h.b16 %v2349
        %v2961 = vunpack.c.l.b16 %v2350
        %v2962 = vunpack.c.h.b16 %v2350
        %v2963 = vunpack.c.l.b16 %v2351
        %v2964 = vunpack.c.h.b16 %v2351
        %v2965 = vunpack.c.l.b16 %v2352
        %v2966 = vunpack.c.h.b16 %v2352
        %v2967 = vunpack.c.l.b16 %v2353
        %v2968 = vunpack.c.h.b16 %v2353
        %v2969 = vunpack.c.l.b16 %v2354
        %v2970 = vunpack.c.h.b16 %v2354
        %v2971 = vunpack.c.l.b16 %v2355
        %v2972 = vunpack.c.h.b16 %v2355
        %v2973 = vunpack.c.l.b16 %v2356
        %v2974 = vunpack.c.h.b16 %v2356
        %v2975 = vunpack.c.l.b16 %v2357
        %v2976 = vunpack.c.h.b16 %v2357
        %v2977 = vunpack.c.l.b16 %v2358
        %v2978 = vunpack.c.h.b16 %v2358
        %v2979 = vunpack.c.l.b16 %v2359
        %v2980 = vunpack.c.h.b16 %v2359
        %v2981 = vunpack.c.l.b16 %v2360
        %v2982 = vunpack.c.h.b16 %v2360
        %v2983 = vunpack.c.l.b16 %v2361
        %v2984 = vunpack.c.h.b16 %v2361
        %v2985 = vunpack.c.l.b16 %v2362
        %v2986 = vunpack.c.h.b16 %v2362
        %v2987 = vunpack.c.l.b16 %v2363
        %v2988 = vunpack.c.h.b16 %v2363
        %v2989 = vunpack.c.l.b16 %v2364
        %v2990 = vunpack.c.h.b16 %v2364
        %v2991 = vunpack.c.l.b16 %v2365
        %v2992 = vunpack.c.h.b16 %v2365
        %v2993 = vunpack.c.l.b16 %v2366
        %v2994 = vunpack.c.h.b16 %v2366
        %v2995 = vunpack.c.l.b16 %v2367
        %v2996 = vunpack.c.h.b16 %v2367
        %v2997 = vunpack.c.l.b16 %v2368
        %v2998 = vunpack.c.h.b16 %v2368
        %v2999 = vunpack.c.l.b16 %v2369
        %v3000 = vunpack.c.h.b16 %v2369
        %v3001 = vunpack.c.l.b16 %v2370
        %v3002 = vunpack.c.h.b16 %v2370
        %v3003 = vunpack.c.l.b16 %v2371
        %v3004 = vunpack.c.h.b16 %v2371
        %v3005 = vunpack.c.l.b16 %v2372
        %v3006 = vunpack.c.h.b16 %v2372
        %v3007 = vunpack.c.l.b16 %v2373
        %v3008 = vunpack.c.h.b16 %v2373
        %v3009 = vunpack.c.l.b16 %v2374
        %v3010 = vunpack.c.h.b16 %v2374
        %v3011 = vunpack.c.l.b16 %v2375
        %v3012 = vunpack.c.h.b16 %v2375
        %v3013 = vunpack.c.l.b16 %v2376
        %v3014 = vunpack.c.h.b16 %v2376
        %v3015 = vunpack.c.l.b16 %v2377
        %v3016 = vunpack.c.h.b16 %v2377
        %v3017 = vunpack.c.l.b16 %v2378
        %v3018 = vunpack.c.h.b16 %v2378
        %v3019 = vunpack.c.l.b16 %v2379
        %v3020 = vunpack.c.h.b16 %v2379
        %v3021 = vunpack.c.l.b16 %v2380
        %v3022 = vunpack.c.h.b16 %v2380
        %v3023 = vunpack.c.l.b16 %v2381
        %v3024 = vunpack.c.h.b16 %v2381
        %v3025 = vunpack.c.l.b16 %v2382
        %v3026 = vunpack.c.h.b16 %v2382
        %v3027 = vunpack.c.l.b16 %v2383
        %v3028 = vunpack.c.h.b16 %v2383
        %v3029 = vunpack.c.l.b16 %v2384
        %v3030 = vunpack.c.h.b16 %v2384
        %v3031 = vunpack.c.l.b16 %v2385
        %v3032 = vunpack.c.h.b16 %v2385
        %v3033 = vunpack.c.l.b16 %v2386
        %v3034 = vunpack.c.h.b16 %v2386
        %v3035 = vunpack.c.l.b16 %v2387
        %v3036 = vunpack.c.h.b16 %v2387
        %v3037 = vunpack.c.l.b16 %v2388
        %v3038 = vunpack.c.h.b16 %v2388
        %v3039 = vunpack.c.l.b16 %v2389
        %v3040 = vunpack.c.h.b16 %v2389
        %v3041 = vunpack.c.l.b16 %v2390
        %v3042 = vunpack.c.h.b16 %v2390
        %v3043 = vunpack.c.l.b16 %v2391
        %v3044 = vunpack.c.h.b16 %v2391
        %v3045 = vunpack.c.l.b16 %v2392
        %v3046 = vunpack.c.h.b16 %v2392
        %v3047 = vunpack.c.l.b16 %v2393
        %v3048 = vunpack.c.h.b16 %v2393
        %v3049 = vunpack.c.l.b16 %v2394
        %v3050 = vunpack.c.h.b16 %v2394
        %v3051 = vunpack.c.l.b16 %v2395
        %v3052 = vunpack.c.h.b16 %v2395
        %v3053 = vunpack.c.l.b16 %v2396
        %v3054 = vunpack.c.h.b16 %v2396
        %v3055 = vunpack.c.l.b16 %v2397
        %v3056 = vunpack.c.h.b16 %v2397
        %v3057 = vunpack.c.l.b16 %v2398
        %v3058 = vunpack.c.h.b16 %v2398
        %v3059 = vunpack.c.l.b16 %v2399
        %v3060 = vunpack.c.h.b16 %v2399
        %v3061 = vunpack.c.l.b16 %v2400
        %v3062 = vunpack.c.h.b16 %v2400
        %v3063 = vunpack.c.l.b16 %v2401
        %v3064 = vunpack.c.h.b16 %v2401
        %v3065 = vunpack.c.l.b16 %v2402
        %v3066 = vunpack.c.h.b16 %v2402
        %v3067 = vunpack.c.l.b16 %v2403
        %v3068 = vunpack.c.h.b16 %v2403
        %v3069 = vunpack.c.l.b16 %v2404
        %v3070 = vunpack.c.h.b16 %v2404
        %v3071 = vunpack.c.l.b16 %v2405
        %v3072 = vunpack.c.h.b16 %v2405
        %v3073 = vunpack.c.l.b16 %v2406
        %v3074 = vunpack.c.h.b16 %v2406
        %v3075 = vunpack.c.l.b16 %v2407
        %v3076 = vunpack.c.h.b16 %v2407
        %v3077 = vunpack.c.l.b16 %v2408
        %v3078 = vunpack.c.h.b16 %v2408
        %v3079 = vunpack.c.l.b16 %v2409
        %v3080 = vunpack.c.h.b16 %v2409
        %v3081 = vunpack.c.l.b16 %v2410
        %v3082 = vunpack.c.h.b16 %v2410
        %v3083 = vunpack.c.l.b16 %v2411
        %v3084 = vunpack.c.h.b16 %v2411
        %v3085 = vunpack.c.l.b16 %v2412
        %v3086 = vunpack.c.h.b16 %v2412
        %v3087 = vunpack.c.l.b16 %v2413
        %v3088 = vunpack.c.h.b16 %v2413
        %v3089 = vunpack.c.l.b16 %v2414
        %v3090 = vunpack.c.h.b16 %v2414
        %v3091 = vunpack.c.l.b16 %v2415
        %v3092 = vunpack.c.h.b16 %v2415
        %v3093 = vunpack.c.l.b16 %v2416
        %v3094 = vunpack.c.h.b16 %v2416
        %v3095 = vunpack.c.l.b16 %v2417
        %v3096 = vunpack.c.h.b16 %v2417
        %v3097 = vunpack.c.l.b16 %v2418
        %v3098 = vunpack.c.h.b16 %v2418
        %v3099 = vunpack.c.l.b16 %v2419
        %v3100 = vunpack.c.h.b16 %v2419
        %v3101 = vunpack.c.l.b16 %v2420
        %v3102 = vunpack.c.h.b16 %v2420
        %v3103 = vunpack.c.l.b16 %v2421
        %v3104 = vunpack.c.h.b16 %v2421
        %v3105 = vunpack.c.l.b16 %v2422
        %v3106 = vunpack.c.h.b16 %v2422
        %v3107 = vunpack.c.l.b16 %v2423
        %v3108 = vunpack.c.h.b16 %v2423
        %v3109 = vunpack.c.l.b16 %v2424
        %v3110 = vunpack.c.h.b16 %v2424
        %v3111 = vunpack.c.l.b16 %v2425
        %v3112 = vunpack.c.h.b16 %v2425
        %v3113 = vunpack.c.l.b16 %v2426
        %v3114 = vunpack.c.h.b16 %v2426
        %v3115 = vunpack.c.l.b16 %v2427
        %v3116 = vunpack.c.h.b16 %v2427
        %v3117 = vunpack.c.l.b16 %v2428
        %v3118 = vunpack.c.h.b16 %v2428
        %v3119 = vunpack.c.l.b16 %v2429
        %v3120 = vunpack.c.h.b16 %v2429
        %v3121 = vunpack.c.l.b16 %v2430
        %v3122 = vunpack.c.h.b16 %v2430
        %v3123 = vunpack.c.l.b16 %v2431
        %v3124 = vunpack.c.h.b16 %v2431
        %v3125 = vunpack.c.l.b16 %v2432
        %v3126 = vunpack.c.h.b16 %v2432
        %v3127 = vunpack.c.l.b16 %v2433
        %v3128 = vunpack.c.h.b16 %v2433
        %v3129 = vunpack.c.l.b16 %v2434
        %v3130 = vunpack.c.h.b16 %v2434
        %v3131 = vunpack.c.l.b16 %v2435
        %v3132 = vunpack.c.h.b16 %v2435
        %v3133 = vunpack.c.l.b16 %v2436
        %v3134 = vunpack.c.h.b16 %v2436
        %v3135 = vunpack.c.l.b16 %v2437
        %v3136 = vunpack.c.h.b16 %v2437
        %v3137 = vunpack.c.l.b16 %v2438
        %v3138 = vunpack.c.h.b16 %v2438
        %v3139 = vunpack.c.l.b16 %v2439
        %v3140 = vunpack.c.h.b16 %v2439
        %v3141 = vunpack.c.l.b16 %v2440
        %v3142 = vunpack.c.h.b16 %v2440
        %v3143 = vunpack.c.l.b16 %v2441
        %v3144 = vunpack.c.h.b16 %v2441
        %v3145 = vunpack.c.l.b16 %v2442
        %v3146 = vunpack.c.h.b16 %v2442
        %v3147 = vunpack.c.l.b16 %v2443
        %v3148 = vunpack.c.h.b16 %v2443
        %v3149 = vunpack.c.l.b16 %v2444
        %v3150 = vunpack.c.h.b16 %v2444
        %v3151 = vunpack.c.l.b16 %v2445
        %v3152 = vunpack.c.h.b16 %v2445
        %v3153 = vunpack.c.l.b16 %v2446
        %v3154 = vunpack.c.h.b16 %v2446
        %v3155 = vunpack.c.l.b16 %v2447
        %v3156 = vunpack.c.h.b16 %v2447
        %v3157 = vunpack.c.l.b16 %v2448
        %v3158 = vunpack.c.h.b16 %v2448
        %v3159 = vunpack.c.l.b16 %v2449
        %v3160 = vunpack.c.h.b16 %v2449
        %v3161 = vunpack.c.l.b16 %v2450
        %v3162 = vunpack.c.h.b16 %v2450
        %v3163 = vunpack.c.l.b16 %v2451
        %v3164 = vunpack.c.h.b16 %v2451
        %v3165 = vunpack.c.l.b16 %v2452
        %v3166 = vunpack.c.h.b16 %v2452
        %v3167 = vunpack.c.l.b16 %v2453
        %v3168 = vunpack.c.h.b16 %v2453
        %v3169 = vunpack.c.l.b16 %v2454
        %v3170 = vunpack.c.h.b16 %v2454
        %v3171 = vunpack.c.l.b16 %v2455
        %v3172 = vunpack.c.h.b16 %v2455
        %v3173 = vunpack.c.l.b16 %v2456
        %v3174 = vunpack.c.h.b16 %v2456
        %v3175 = vunpack.c.l.b16 %v2457
        %v3176 = vunpack.c.h.b16 %v2457
        %v3177 = vunpack.c.l.b16 %v2458
        %v3178 = vunpack.c.h.b16 %v2458
        %v3179 = vunpack.c.l.b16 %v2459
        %v3180 = vunpack.c.h.b16 %v2459
        %v3181 = vunpack.c.l.b16 %v2460
        %v3182 = vunpack.c.h.b16 %v2460
        %v3183 = vunpack.c.l.b16 %v2461
        %v3184 = vunpack.c.h.b16 %v2461
        %v3185 = vunpack.c.l.b16 %v2462
        %v3186 = vunpack.c.h.b16 %v2462
        %v3187 = vunpack.c.l.b16 %v2463
        %v3188 = vunpack.c.h.b16 %v2463
        %v3189 = vunpack.c.l.b16 %v2464
        %v3190 = vunpack.c.h.b16 %v2464
        %v3191 = vunpack.c.l.b16 %v2465
        %v3192 = vunpack.c.h.b16 %v2465
        %v3193 = vunpack.c.l.b16 %v2466
        %v3194 = vunpack.c.h.b16 %v2466
        %v3195 = vunpack.c.l.b16 %v2467
        %v3196 = vunpack.c.h.b16 %v2467
        %v3197 = vunpack.c.l.b16 %v2468
        %v3198 = vunpack.c.h.b16 %v2468
        %v3199 = vunpack.c.l.b16 %v2469
        %v3200 = vunpack.c.h.b16 %v2469
        %v3201 = vunpack.c.l.b16 %v2470
        %v3202 = vunpack.c.h.b16 %v2470
        %v3203 = vunpack.c.l.b16 %v2471
        %v3204 = vunpack.c.h.b16 %v2471
        %v3205 = vunpack.c.l.b16 %v2472
        %v3206 = vunpack.c.h.b16 %v2472
        %v3207 = vunpack.c.l.b16 %v2473
        %v3208 = vunpack.c.h.b16 %v2473
        %v3209 = vunpack.c.l.b16 %v2474
        %v3210 = vunpack.c.h.b16 %v2474
        %v3211 = vunpack.c.l.b16 %v2475
        %v3212 = vunpack.c.h.b16 %v2475
        %v3213 = vunpack.c.l.b16 %v2476
        %v3214 = vunpack.c.h.b16 %v2476
        %v3215 = vunpack.c.l.b16 %v2477
        %v3216 = vunpack.c.h.b16 %v2477
        %v3217 = vunpack.c.l.b16 %v2478
        %v3218 = vunpack.c.h.b16 %v2478
        %v3219 = vunpack.c.l.b16 %v2479
        %v3220 = vunpack.c.h.b16 %v2479
        %v3221 = vunpack.c.l.b16 %v2480
        %v3222 = vunpack.c.h.b16 %v2480
        %v3223 = vunpack.c.l.b16 %v2481
        %v3224 = vunpack.c.h.b16 %v2481
        %v3225 = vunpack.c.l.b16 %v2482
        %v3226 = vunpack.c.h.b16 %v2482
        %v3227 = vunpack.c.l.b16 %v2483
        %v3228 = vunpack.c.h.b16 %v2483
        %v3229 = vunpack.c.l.b16 %v2484
        %v3230 = vunpack.c.h.b16 %v2484
        %v3231 = vunpack.c.l.b16 %v2485
        %v3232 = vunpack.c.h.b16 %v2485
        %v3233 = vunpack.c.l.b16 %v2486
        %v3234 = vunpack.c.h.b16 %v2486
        %v3235 = vunpack.c.l.b16 %v2487
        %v3236 = vunpack.c.h.b16 %v2487
        %v3237 = vunpack.c.l.b16 %v2488
        %v3238 = vunpack.c.h.b16 %v2488
        %v3239 = vunpack.c.l.b16 %v2489
        %v3240 = vunpack.c.h.b16 %v2489
        %v3241 = vunpack.c.l.b16 %v2490
        %v3242 = vunpack.c.h.b16 %v2490
        %v3243 = vunpack.c.l.b16 %v2491
        %v3244 = vunpack.c.h.b16 %v2491
        %v3245 = vunpack.c.l.b16 %v2492
        %v3246 = vunpack.c.h.b16 %v2492
        %v3247 = vunpack.c.l.b16 %v2493
        %v3248 = vunpack.c.h.b16 %v2493
        %v3249 = vunpack.c.l.b16 %v2494
        %v3250 = vunpack.c.h.b16 %v2494
        %v3251 = vunpack.c.l.b16 %v2495
        %v3252 = vunpack.c.h.b16 %v2495
        %v3253 = vunpack.c.l.b16 %v2496
        %v3254 = vunpack.c.h.b16 %v2496
        %v3255 = vunpack.c.l.b16 %v2497
        %v3256 = vunpack.c.h.b16 %v2497
        %v3257 = vunpack.c.l.b16 %v2498
        %v3258 = vunpack.c.h.b16 %v2498
        %v3259 = vunpack.c.l.b16 %v2499
        %v3260 = vunpack.c.h.b16 %v2499
        %v3261 = vunpack.c.l.b16 %v2500
        %v3262 = vunpack.c.h.b16 %v2500
        %v3263 = vunpack.c.l.b16 %v2501
        %v3264 = vunpack.c.h.b16 %v2501
        %v3265 = vunpack.c.l.b16 %v2502
        %v3266 = vunpack.c.h.b16 %v2502
        %v3267 = vunpack.c.l.b16 %v2503
        %v3268 = vunpack.c.h.b16 %v2503
        %v3269 = vunpack.c.l.b16 %v2504
        %v3270 = vunpack.c.h.b16 %v2504
        %v3271 = vunpack.c.l.b16 %v2505
        %v3272 = vunpack.c.h.b16 %v2505
        %v3273 = vunpack.c.l.b16 %v2506
        %v3274 = vunpack.c.h.b16 %v2506
        %v3275 = vunpack.c.l.b16 %v2507
        %v3276 = vunpack.c.h.b16 %v2507
        %v3277 = vunpack.c.l.b16 %v2508
        %v3278 = vunpack.c.h.b16 %v2508
        %v3279 = vunpack.c.l.b16 %v2509
        %v3280 = vunpack.c.h.b16 %v2509
        %v3281 = vunpack.c.l.b16 %v2510
        %v3282 = vunpack.c.h.b16 %v2510
        %v3283 = vunpack.c.l.b16 %v2511
        %v3284 = vunpack.c.h.b16 %v2511
        %v3285 = vunpack.c.l.b16 %v2512
        %v3286 = vunpack.c.h.b16 %v2512
        %v3287 = vunpack.c.l.b16 %v2513
        %v3288 = vunpack.c.h.b16 %v2513
        %v3289 = vunpack.c.l.b16 %v2514
        %v3290 = vunpack.c.h.b16 %v2514
        %v3291 = vunpack.c.l.b16 %v2515
        %v3292 = vunpack.c.h.b16 %v2515
        %v3293 = vunpack.c.l.b16 %v2516
        %v3294 = vunpack.c.h.b16 %v2516
        %v3295 = vunpack.c.l.b16 %v2517
        %v3296 = vunpack.c.h.b16 %v2517
        %v3297 = vunpack.c.l.b16 %v2518
        %v3298 = vunpack.c.h.b16 %v2518
        %v3299 = vunpack.c.l.b16 %v2519
        %v3300 = vunpack.c.h.b16 %v2519
        %v3301 = vunpack.c.l.b16 %v2520
        %v3302 = vunpack.c.h.b16 %v2520
        %v3303 = vunpack.c.l.b16 %v2521
        %v3304 = vunpack.c.h.b16 %v2521
        %v3305 = vunpack.c.l.b16 %v2522
        %v3306 = vunpack.c.h.b16 %v2522
        %v3307 = vunpack.c.l.b16 %v2523
        %v3308 = vunpack.c.h.b16 %v2523
        %v3309 = vunpack.c.l.b16 %v2524
        %v3310 = vunpack.c.h.b16 %v2524
        %v3311 = vpack.c.b16 %v2803, %v2799
        %v3312 = vpack.c.b16 %v2804, %v2800
        %v3313 = vpack.c.b16 %v2805, %v2801
        %v3314 = vpack.c.b16 %v2806, %v2802
        %v3315 = vpack.c.b16 %v2811, %v2807
        %v3316 = vpack.c.b16 %v2812, %v2808
        %v3317 = vpack.c.b16 %v2813, %v2809
        %v3318 = vpack.c.b16 %v2814, %v2810
        %v3319 = vpack.c.b16 %v2819, %v2815
        %v3320 = vpack.c.b16 %v2820, %v2816
        %v3321 = vpack.c.b16 %v2821, %v2817
        %v3322 = vpack.c.b16 %v2822, %v2818
        %v3323 = vpack.c.b16 %v2827, %v2823
        %v3324 = vpack.c.b16 %v2828, %v2824
        %v3325 = vpack.c.b16 %v2829, %v2825
        %v3326 = vpack.c.b16 %v2830, %v2826
        %v3327 = vpack.c.b16 %v2835, %v2831
        %v3328 = vpack.c.b16 %v2836, %v2832
        %v3329 = vpack.c.b16 %v2837, %v2833
        %v3330 = vpack.c.b16 %v2838, %v2834
        %v3331 = vpack.c.b16 %v2843, %v2839
        %v3332 = vpack.c.b16 %v2844, %v2840
        %v3333 = vpack.c.b16 %v2845, %v2841
        %v3334 = vpack.c.b16 %v2846, %v2842
        %v3335 = vpack.c.b16 %v2851, %v2847
        %v3336 = vpack.c.b16 %v2852, %v2848
        %v3337 = vpack.c.b16 %v2853, %v2849
        %v3338 = vpack.c.b16 %v2854, %v2850
        %v3339 = vpack.c.b16 %v2859, %v2855
        %v3340 = vpack.c.b16 %v2860, %v2856
        %v3341 = vpack.c.b16 %v2861, %v2857
        %v3342 = vpack.c.b16 %v2862, %v2858
        %v3343 = vpack.c.b16 %v2867, %v2863
        %v3344 = vpack.c.b16 %v2868, %v2864
        %v3345 = vpack.c.b16 %v2869, %v2865
        %v3346 = vpack.c.b16 %v2870, %v2866
        %v3347 = vpack.c.b16 %v2875, %v2871
        %v3348 = vpack.c.b16 %v2876, %v2872
        %v3349 = vpack.c.b16 %v2877, %v2873
        %v3350 = vpack.c.b16 %v2878, %v2874
        %v3351 = vpack.c.b16 %v2883, %v2879
        %v3352 = vpack.c.b16 %v2884, %v2880
        %v3353 = vpack.c.b16 %v2885, %v2881
        %v3354 = vpack.c.b16 %v2886, %v2882
        %v3355 = vpack.c.b16 %v2891, %v2887
        %v3356 = vpack.c.b16 %v2892, %v2888
        %v3357 = vpack.c.b16 %v2893, %v2889
        %v3358 = vpack.c.b16 %v2894, %v2890
        %v3359 = vpack.c.b16 %v2899, %v2895
        %v3360 = vpack.c.b16 %v2900, %v2896
        %v3361 = vpack.c.b16 %v2901, %v2897
        %v3362 = vpack.c.b16 %v2902, %v2898
        %v3363 = vpack.c.b16 %v2907, %v2903
        %v3364 = vpack.c.b16 %v2908, %v2904
        %v3365 = vpack.c.b16 %v2909, %v2905
        %v3366 = vpack.c.b16 %v2910, %v2906
        %v3367 = vpack.c.b16 %v2915, %v2911
        %v3368 = vpack.c.b16 %v2916, %v2912
        %v3369 = vpack.c.b16 %v2917, %v2913
        %v3370 = vpack.c.b16 %v2918, %v2914
        %v3371 = vpack.c.b16 %v2923, %v2919
        %v3372 = vpack.c.b16 %v2924, %v2920
        %v3373 = vpack.c.b16 %v2925, %v2921
        %v3374 = vpack.c.b16 %v2926, %v2922
        %v3375 = vpack.c.b16 %v2931, %v2927
        %v3376 = vpack.c.b16 %v2932, %v2928
        %v3377 = vpack.c.b16 %v2933, %v2929
        %v3378 = vpack.c.b16 %v2934, %v2930
        %v3379 = vpack.c.b16 %v2939, %v2935
        %v3380 = vpack.c.b16 %v2940, %v2936
        %v3381 = vpack.c.b16 %v2941, %v2937
        %v3382 = vpack.c.b16 %v2942, %v2938
        %v3383 = vpack.c.b16 %v2947, %v2943
        %v3384 = vpack.c.b16 %v2948, %v2944
        %v3385 = vpack.c.b16 %v2949, %v2945
        %v3386 = vpack.c.b16 %v2950, %v2946
        %v3387 = vpack.c.b16 %v2955, %v2951
        %v3388 = vpack.c.b16 %v2956, %v2952
        %v3389 = vpack.c.b16 %v2957, %v2953
        %v3390 = vpack.c.b16 %v2958, %v2954
        %v3391 = vpack.c.b16 %v2963, %v2959
        %v3392 = vpack.c.b16 %v2964, %v2960
        %v3393 = vpack.c.b16 %v2965, %v2961
        %v3394 = vpack.c.b16 %v2966, %v2962
        %v3395 = vpack.c.b16 %v2971, %v2967
        %v3396 = vpack.c.b16 %v2972, %v2968
        %v3397 = vpack.c.b16 %v2973, %v2969
        %v3398 = vpack.c.b16 %v2974, %v2970
        %v3399 = vpack.c.b16 %v2979, %v2975
        %v3400 = vpack.c.b16 %v2980, %v2976
        %v3401 = vpack.c.b16 %v2981, %v2977
        %v3402 = vpack.c.b16 %v2982, %v2978
        %v3403 = vpack.c.b16 %v2987, %v2983
        %v3404 = vpack.c.b16 %v2988, %v2984
        %v3405 = vpack.c.b16 %v2989, %v2985
        %v3406 = vpack.c.b16 %v2990, %v2986
        %v3407 = vpack.c.b16 %v2995, %v2991
        %v3408 = vpack.c.b16 %v2996, %v2992
        %v3409 = vpack.c.b16 %v2997, %v2993
        %v3410 = vpack.c.b16 %v2998, %v2994
        %v3411 = vpack.c.b16 %v3003, %v2999
        %v3412 = vpack.c.b16 %v3004, %v3000
        %v3413 = vpack.c.b16 %v3005, %v3001
        %v3414 = vpack.c.b16 %v3006, %v3002
        %v3415 = vpack.c.b16 %v3011, %v3007
        %v3416 = vpack.c.b16 %v3012, %v3008
        %v3417 = vpack.c.b16 %v3013, %v3009
        %v3418 = vpack.c.b16 %v3014, %v3010
        %v3419 = vpack.c.b16 %v3019, %v3015
        %v3420 = vpack.c.b16 %v3020, %v3016
        %v3421 = vpack.c.b16 %v3021, %v3017
        %v3422 = vpack.c.b16 %v3022, %v3018
        %v3423 = vpack.c.b16 %v3027, %v3023
        %v3424 = vpack.c.b16 %v3028, %v3024
        %v3425 = vpack.c.b16 %v3029, %v3025
        %v3426 = vpack.c.b16 %v3030, %v3026
        %v3427 = vpack.c.b16 %v3035, %v3031
        %v3428 = vpack.c.b16 %v3036, %v3032
        %v3429 = vpack.c.b16 %v3037, %v3033
        %v3430 = vpack.c.b16 %v3038, %v3034
        %v3431 = vpack.c.b16 %v3043, %v3039
        %v3432 = vpack.c.b16 %v3044, %v3040
        %v3433 = vpack.c.b16 %v3045, %v3041
        %v3434 = vpack.c.b16 %v3046, %v3042
        %v3435 = vpack.c.b16 %v3051, %v3047
        %v3436 = vpack.c.b16 %v3052, %v3048
        %v3437 = vpack.c.b16 %v3053, %v3049
        %v3438 = vpack.c.b16 %v3054, %v3050
        %v3439 = vpack.c.b16 %v3059, %v3055
        %v3440 = vpack.c.b16 %v3060, %v3056
        %v3441 = vpack.c.b16 %v3061, %v3057
        %v3442 = vpack.c.b16 %v3062, %v3058
        %v3443 = vpack.c.b16 %v3067, %v3063
        %v3444 = vpack.c.b16 %v3068, %v3064
        %v3445 = vpack.c.b16 %v3069, %v3065
        %v3446 = vpack.c.b16 %v3070, %v3066
        %v3447 = vpack.c.b16 %v3075, %v3071
        %v3448 = vpack.c.b16 %v3076, %v3072
        %v3449 = vpack.c.b16 %v3077, %v3073
        %v3450 = vpack.c.b16 %v3078, %v3074
        %v3451 = vpack.c.b16 %v3083, %v3079
        %v3452 = vpack.c.b16 %v3084, %v3080
        %v3453 = vpack.c.b16 %v3085, %v3081
        %v3454 = vpack.c.b16 %v3086, %v3082
        %v3455 = vpack.c.b16 %v3091, %v3087
        %v3456 = vpack.c.b16 %v3092, %v3088
        %v3457 = vpack.c.b16 %v3093, %v3089
        %v3458 = vpack.c.b16 %v3094, %v3090
        %v3459 = vpack.c.b16 %v3099, %v3095
        %v3460 = vpack.c.b16 %v3100, %v3096
        %v3461 = vpack.c.b16 %v3101, %v3097
        %v3462 = vpack.c.b16 %v3102, %v3098
        %v3463 = vpack.c.b16 %v3107, %v3103
        %v3464 = vpack.c.b16 %v3108, %v3104
        %v3465 = vpack.c.b16 %v3109, %v3105
        %v3466 = vpack.c.b16 %v3110, %v3106
        %v3467 = vpack.c.b16 %v3115, %v3111
        %v3468 = vpack.c.b16 %v3116, %v3112
        %v3469 = vpack.c.b16 %v3117, %v3113
        %v3470 = vpack.c.b16 %v3118, %v3114
        %v3471 = vpack.c.b16 %v3123, %v3119
        %v3472 = vpack.c.b16 %v3124, %v3120
        %v3473 = vpack.c.b16 %v3125, %v3121
        %v3474 = vpack.c.b16 %v3126, %v3122
        %v3475 = vpack.c.b16 %v3131, %v3127
        %v3476 = vpack.c.b16 %v3132, %v3128
        %v3477 = vpack.c.b16 %v3133, %v3129
        %v3478 = vpack.c.b16 %v3134, %v3130
        %v3479 = vpack.c.b16 %v3139, %v3135
        %v3480 = vpack.c.b16 %v3140, %v3136
        %v3481 = vpack.c.b16 %v3141, %v3137
        %v3482 = vpack.c.b16 %v3142, %v3138
        %v3483 = vpack.c.b16 %v3147, %v3143
        %v3484 = vpack.c.b16 %v3148, %v3144
        %v3485 = vpack.c.b16 %v3149, %v3145
        %v3486 = vpack.c.b16 %v3150, %v3146
        %v3487 = vpack.c.b16 %v3155, %v3151
        %v3488 = vpack.c.b16 %v3156, %v3152
        %v3489 = vpack.c.b16 %v3157, %v3153
        %v3490 = vpack.c.b16 %v3158, %v3154
        %v3491 = vpack.c.b16 %v3163, %v3159
        %v3492 = vpack.c.b16 %v3164, %v3160
        %v3493 = vpack.c.b16 %v3165, %v3161
        %v3494 = vpack.c.b16 %v3166, %v3162
        %v3495 = vpack.c.b16 %v3171, %v3167
        %v3496 = vpack.c.b16 %v3172, %v3168
        %v3497 = vpack.c.b16 %v3173, %v3169
        %v3498 = vpack.c.b16 %v3174, %v3170
        %v3499 = vpack.c.b16 %v3179, %v3175
        %v3500 = vpack.c.b16 %v3180, %v3176
        %v3501 = vpack.c.b16 %v3181, %v3177
        %v3502 = vpack.c.b16 %v3182, %v3178
        %v3503 = vpack.c.b16 %v3187, %v3183
        %v3504 = vpack.c.b16 %v3188, %v3184
        %v3505 = vpack.c.b16 %v3189, %v3185
        %v3506 = vpack.c.b16 %v3190, %v3186
        %v3507 = vpack.c.b16 %v3195, %v3191
        %v3508 = vpack.c.b16 %v3196, %v3192
        %v3509 = vpack.c.b16 %v3197, %v3193
        %v3510 = vpack.c.b16 %v3198, %v3194
        %v3511 = vpack.c.b16 %v3203, %v3199
        %v3512 = vpack.c.b16 %v3204, %v3200
        %v3513 = vpack.c.b16 %v3205, %v3201
        %v3514 = vpack.c.b16 %v3206, %v3202
        %v3515 = vpack.c.b16 %v3211, %v3207
        %v3516 = vpack.c.b16 %v3212, %v3208
        %v3517 = vpack.c.b16 %v3213, %v3209
        %v3518 = vpack.c.b16 %v3214, %v3210
        %v3519 = vpack.c.b16 %v3219, %v3215
        %v3520 = vpack.c.b16 %v3220, %v3216
        %v3521 = vpack.c.b16 %v3221, %v3217
        %v3522 = vpack.c.b16 %v3222, %v3218
        %v3523 = vpack.c.b16 %v3227, %v3223
        %v3524 = vpack.c.b16 %v3228, %v3224
        %v3525 = vpack.c.b16 %v3229, %v3225
        %v3526 = vpack.c.b16 %v3230, %v3226
        %v3527 = vpack.c.b16 %v3235, %v3231
        %v3528 = vpack.c.b16 %v3236, %v3232
        %v3529 = vpack.c.b16 %v3237, %v3233
        %v3530 = vpack.c.b16 %v3238, %v3234
        %v3531 = vpack.c.b16 %v3243, %v3239
        %v3532 = vpack.c.b16 %v3244, %v3240
        %v3533 = vpack.c.b16 %v3245, %v3241
        %v3534 = vpack.c.b16 %v3246, %v3242
        %v3535 = vpack.c.b16 %v3251, %v3247
        %v3536 = vpack.c.b16 %v3252, %v3248
        %v3537 = vpack.c.b16 %v3253, %v3249
        %v3538 = vpack.c.b16 %v3254, %v3250
        %v3539 = vpack.c.b16 %v3259, %v3255
        %v3540 = vpack.c.b16 %v3260, %v3256
        %v3541 = vpack.c.b16 %v3261, %v3257
        %v3542 = vpack.c.b16 %v3262, %v3258
        %v3543 = vpack.c.b16 %v3267, %v3263
        %v3544 = vpack.c.b16 %v3268, %v3264
        %v3545 = vpack.c.b16 %v3269, %v3265
        %v3546 = vpack.c.b16 %v3270, %v3266
        %v3547 = vpack.c.b16 %v3275, %v3271
        %v3548 = vpack.c.b16 %v3276, %v3272
        %v3549 = vpack.c.b16 %v3277, %v3273
        %v3550 = vpack.c.b16 %v3278, %v3274
        %v3551 = vpack.c.b16 %v3283, %v3279
        %v3552 = vpack.c.b16 %v3284, %v3280
        %v3553 = vpack.c.b16 %v3285, %v3281
        %v3554 = vpack.c.b16 %v3286, %v3282
        %v3555 = vpack.c.b16 %v3291, %v3287
        %v3556 = vpack.c.b16 %v3292, %v3288
        %v3557 = vpack.c.b16 %v3293, %v3289
        %v3558 = vpack.c.b16 %v3294, %v3290
        %v3559 = vpack.c.b16 %v3299, %v3295
        %v3560 = vpack.c.b16 %v3300, %v3296
        %v3561 = vpack.c.b16 %v3301, %v3297
        %v3562 = vpack.c.b16 %v3302, %v3298
        %v3563 = vpack.c.b16 %v3307, %v3303
        %v3564 = vpack.c.b16 %v3308, %v3304
        %v3565 = vpack.c.b16 %v3309, %v3305
        %v3566 = vpack.c.b16 %v3310, %v3306
        %3823 = vmatpush.bf16.msra.mxu0 %v3339
        %3824 = vmatpush.bf16.msra.mxu0 %v3335
        %3825 = vmatpush.bf16.msra.mxu0 %v3331
        %3826 = vmatpush.bf16.msra.mxu0 %v3327
        %3827 = vmatpush.bf16.msra.mxu0 %v3323
        %3828 = vmatpush.bf16.msra.mxu0 %v3319
        %3829 = vmatpush.bf16.msra.mxu0 %v3315
        %3830 = vmatpush.bf16.msra.mxu0 %v3311
        %3831 = vmatmul.bf16.gmra.mxu0 %v2527
        %v3832 = vpop.f32.mrf.mxu0
        %v3833 = vadd.f32 0.0, %v3832
        %v3834 = vpop.f32.mrf.mxu0
        %3835 = vdwg.mxu0
        %3836 = vmatpush.bf16.msra.mxu0 %v3371
        %3837 = vmatpush.bf16.msra.mxu0 %v3367
        %3838 = vmatpush.bf16.msra.mxu0 %v3363
        %3839 = vmatpush.bf16.msra.mxu0 %v3359
        %3840 = vmatpush.bf16.msra.mxu0 %v3355
        %3841 = vmatpush.bf16.msra.mxu0 %v3351
        %3842 = vmatpush.bf16.msra.mxu0 %v3347
        %3843 = vmatpush.bf16.msra.mxu0 %v3343
        %3844 = vmatmul.bf16.gmra.mxu0 %v2528
        %v3845 = vpop.f32.mrf.mxu0
        %v3846 = vadd.f32 %v3833, %v3845
        %v3847 = vpop.f32.mrf.mxu0
        %3848 = vdwg.mxu0
        %3849 = vmatpush.bf16.msra.mxu0 %v3403
        %3850 = vmatpush.bf16.msra.mxu0 %v3399
        %3851 = vmatpush.bf16.msra.mxu0 %v3395
        %3852 = vmatpush.bf16.msra.mxu0 %v3391
        %3853 = vmatpush.bf16.msra.mxu0 %v3387
        %3854 = vmatpush.bf16.msra.mxu0 %v3383
        %3855 = vmatpush.bf16.msra.mxu0 %v3379
        %3856 = vmatpush.bf16.msra.mxu0 %v3375
        %3857 = vmatmul.bf16.gmra.mxu0 %v2529
        %v3858 = vpop.f32.mrf.mxu0
        %v3859 = vadd.f32 %v3846, %v3858
        %v3860 = vpop.f32.mrf.mxu0
        %3861 = vdwg.mxu0
        %3862 = vmatpush.bf16.msra.mxu0 %v3435
        %3863 = vmatpush.bf16.msra.mxu0 %v3431
        %3864 = vmatpush.bf16.msra.mxu0 %v3427
        %3865 = vmatpush.bf16.msra.mxu0 %v3423
        %3866 = vmatpush.bf16.msra.mxu0 %v3419
        %3867 = vmatpush.bf16.msra.mxu0 %v3415
        %3868 = vmatpush.bf16.msra.mxu0 %v3411
        %3869 = vmatpush.bf16.msra.mxu0 %v3407
        %3870 = vmatmul.bf16.gmra.mxu0 %v2530
        %v3871 = vpop.f32.mrf.mxu0
        %v3872 = vadd.f32 %v3859, %v3871
        %v3873 = vpop.f32.mrf.mxu0
        %3874 = vdwg.mxu0
        %3875 = vmatpush.bf16.msra.mxu0 %v3467
        %3876 = vmatpush.bf16.msra.mxu0 %v3463
        %3877 = vmatpush.bf16.msra.mxu0 %v3459
        %3878 = vmatpush.bf16.msra.mxu0 %v3455
        %3879 = vmatpush.bf16.msra.mxu0 %v3451
        %3880 = vmatpush.bf16.msra.mxu0 %v3447
        %3881 = vmatpush.bf16.msra.mxu0 %v3443
        %3882 = vmatpush.bf16.msra.mxu0 %v3439
        %3883 = vmatmul.bf16.gmra.mxu0 %v2531
        %v3884 = vpop.f32.mrf.mxu0
        %v3885 = vadd.f32 %v3872, %v3884
        %v3886 = vpop.f32.mrf.mxu0
        %3887 = vdwg.mxu0
        %3888 = vmatpush.bf16.msra.mxu0 %v3499
        %3889 = vmatpush.bf16.msra.mxu0 %v3495
        %3890 = vmatpush.bf16.msra.mxu0 %v3491
        %3891 = vmatpush.bf16.msra.mxu0 %v3487
        %3892 = vmatpush.bf16.msra.mxu0 %v3483
        %3893 = vmatpush.bf16.msra.mxu0 %v3479
        %3894 = vmatpush.bf16.msra.mxu0 %v3475
        %3895 = vmatpush.bf16.msra.mxu0 %v3471
        %3896 = vmatmul.bf16.gmra.mxu0 %v2532
        %v3897 = vpop.f32.mrf.mxu0
        %v3898 = vadd.f32 %v3885, %v3897
        %v3899 = vpop.f32.mrf.mxu0
        %3900 = vdwg.mxu0
        %3901 = vmatpush.bf16.msra.mxu0 %v3531
        %3902 = vmatpush.bf16.msra.mxu0 %v3527
        %3903 = vmatpush.bf16.msra.mxu0 %v3523
        %3904 = vmatpush.bf16.msra.mxu0 %v3519
        %3905 = vmatpush.bf16.msra.mxu0 %v3515
        %3906 = vmatpush.bf16.msra.mxu0 %v3511
        %3907 = vmatpush.bf16.msra.mxu0 %v3507
        %3908 = vmatpush.bf16.msra.mxu0 %v3503
        %3909 = vmatmul.bf16.gmra.mxu0 %v2533
        %v3910 = vpop.f32.mrf.mxu0
        %v3911 = vadd.f32 %v3898, %v3910
        %v3912 = vpop.f32.mrf.mxu0
        %3913 = vdwg.mxu0
        %3914 = vmatpush.bf16.msra.mxu0 %v3563
        %3915 = vmatpush.bf16.msra.mxu0 %v3559
        %3916 = vmatpush.bf16.msra.mxu0 %v3555
        %3917 = vmatpush.bf16.msra.mxu0 %v3551
        %3918 = vmatpush.bf16.msra.mxu0 %v3547
        %3919 = vmatpush.bf16.msra.mxu0 %v3543
        %3920 = vmatpush.bf16.msra.mxu0 %v3539
        %3921 = vmatpush.bf16.msra.mxu0 %v3535
        %3922 = vmatmul.bf16.gmra.mxu0 %v2534
        %v3923 = vpop.f32.mrf.mxu0
        %v3924 = vadd.f32 %v3911, %v3923
        %v3925 = vpop.f32.mrf.mxu0
        %3926 = vdwg.mxu0
        %3927 = vmatpush.bf16.msra.mxu0 %v3340
        %3928 = vmatpush.bf16.msra.mxu0 %v3336
        %3929 = vmatpush.bf16.msra.mxu0 %v3332
        %3930 = vmatpush.bf16.msra.mxu0 %v3328
        %3931 = vmatpush.bf16.msra.mxu0 %v3324
        %3932 = vmatpush.bf16.msra.mxu0 %v3320
        %3933 = vmatpush.bf16.msra.mxu0 %v3316
        %3934 = vmatpush.bf16.msra.mxu0 %v3312
        %3935 = vmatmul.bf16.gmra.mxu0 %v2527
        %v3936 = vpop.f32.mrf.mxu0
        %v3937 = vadd.f32 0.0, %v3936
        %v3938 = vpop.f32.mrf.mxu0
        %3939 = vdwg.mxu0
        %3940 = vmatpush.bf16.msra.mxu0 %v3372
        %3941 = vmatpush.bf16.msra.mxu0 %v3368
        %3942 = vmatpush.bf16.msra.mxu0 %v3364
        %3943 = vmatpush.bf16.msra.mxu0 %v3360
        %3944 = vmatpush.bf16.msra.mxu0 %v3356
        %3945 = vmatpush.bf16.msra.mxu0 %v3352
        %3946 = vmatpush.bf16.msra.mxu0 %v3348
        %3947 = vmatpush.bf16.msra.mxu0 %v3344
        %3948 = vmatmul.bf16.gmra.mxu0 %v2528
        %v3949 = vpop.f32.mrf.mxu0
        %v3950 = vadd.f32 %v3937, %v3949
        %v3951 = vpop.f32.mrf.mxu0
        %3952 = vdwg.mxu0
        %3953 = vmatpush.bf16.msra.mxu0 %v3404
        %3954 = vmatpush.bf16.msra.mxu0 %v3400
        %3955 = vmatpush.bf16.msra.mxu0 %v3396
        %3956 = vmatpush.bf16.msra.mxu0 %v3392
        %3957 = vmatpush.bf16.msra.mxu0 %v3388
        %3958 = vmatpush.bf16.msra.mxu0 %v3384
        %3959 = vmatpush.bf16.msra.mxu0 %v3380
        %3960 = vmatpush.bf16.msra.mxu0 %v3376
        %3961 = vmatmul.bf16.gmra.mxu0 %v2529
        %v3962 = vpop.f32.mrf.mxu0
        %v3963 = vadd.f32 %v3950, %v3962
        %v3964 = vpop.f32.mrf.mxu0
        %3965 = vdwg.mxu0
        %3966 = vmatpush.bf16.msra.mxu0 %v3436
        %3967 = vmatpush.bf16.msra.mxu0 %v3432
        %3968 = vmatpush.bf16.msra.mxu0 %v3428
        %3969 = vmatpush.bf16.msra.mxu0 %v3424
        %3970 = vmatpush.bf16.msra.mxu0 %v3420
        %3971 = vmatpush.bf16.msra.mxu0 %v3416
        %3972 = vmatpush.bf16.msra.mxu0 %v3412
        %3973 = vmatpush.bf16.msra.mxu0 %v3408
        %3974 = vmatmul.bf16.gmra.mxu0 %v2530
        %v3975 = vpop.f32.mrf.mxu0
        %v3976 = vadd.f32 %v3963, %v3975
        %v3977 = vpop.f32.mrf.mxu0
        %3978 = vdwg.mxu0
        %3979 = vmatpush.bf16.msra.mxu0 %v3468
        %3980 = vmatpush.bf16.msra.mxu0 %v3464
        %3981 = vmatpush.bf16.msra.mxu0 %v3460
        %3982 = vmatpush.bf16.msra.mxu0 %v3456
        %3983 = vmatpush.bf16.msra.mxu0 %v3452
        %3984 = vmatpush.bf16.msra.mxu0 %v3448
        %3985 = vmatpush.bf16.msra.mxu0 %v3444
        %3986 = vmatpush.bf16.msra.mxu0 %v3440
        %3987 = vmatmul.bf16.gmra.mxu0 %v2531
        %v3988 = vpop.f32.mrf.mxu0
        %v3989 = vadd.f32 %v3976, %v3988
        %v3990 = vpop.f32.mrf.mxu0
        %3991 = vdwg.mxu0
        %3992 = vmatpush.bf16.msra.mxu0 %v3500
        %3993 = vmatpush.bf16.msra.mxu0 %v3496
        %3994 = vmatpush.bf16.msra.mxu0 %v3492
        %3995 = vmatpush.bf16.msra.mxu0 %v3488
        %3996 = vmatpush.bf16.msra.mxu0 %v3484
        %3997 = vmatpush.bf16.msra.mxu0 %v3480
        %3998 = vmatpush.bf16.msra.mxu0 %v3476
        %3999 = vmatpush.bf16.msra.mxu0 %v3472
        %4000 = vmatmul.bf16.gmra.mxu0 %v2532
        %v4001 = vpop.f32.mrf.mxu0
        %v4002 = vadd.f32 %v3989, %v4001
        %v4003 = vpop.f32.mrf.mxu0
        %4004 = vdwg.mxu0
        %4005 = vmatpush.bf16.msra.mxu0 %v3532
        %4006 = vmatpush.bf16.msra.mxu0 %v3528
        %4007 = vmatpush.bf16.msra.mxu0 %v3524
        %4008 = vmatpush.bf16.msra.mxu0 %v3520
        %4009 = vmatpush.bf16.msra.mxu0 %v3516
        %4010 = vmatpush.bf16.msra.mxu0 %v3512
        %4011 = vmatpush.bf16.msra.mxu0 %v3508
        %4012 = vmatpush.bf16.msra.mxu0 %v3504
        %4013 = vmatmul.bf16.gmra.mxu0 %v2533
        %v4014 = vpop.f32.mrf.mxu0
        %v4015 = vadd.f32 %v4002, %v4014
        %v4016 = vpop.f32.mrf.mxu0
        %4017 = vdwg.mxu0
        %4018 = vmatpush.bf16.msra.mxu0 %v3564
        %4019 = vmatpush.bf16.msra.mxu0 %v3560
        %4020 = vmatpush.bf16.msra.mxu0 %v3556
        %4021 = vmatpush.bf16.msra.mxu0 %v3552
        %4022 = vmatpush.bf16.msra.mxu0 %v3548
        %4023 = vmatpush.bf16.msra.mxu0 %v3544
        %4024 = vmatpush.bf16.msra.mxu0 %v3540
        %4025 = vmatpush.bf16.msra.mxu0 %v3536
        %4026 = vmatmul.bf16.gmra.mxu0 %v2534
        %v4027 = vpop.f32.mrf.mxu0
        %v4028 = vadd.f32 %v4015, %v4027
        %v4029 = vpop.f32.mrf.mxu0
        %4030 = vdwg.mxu0
        %4031 = vmatpush.bf16.msra.mxu0 %v3341
        %4032 = vmatpush.bf16.msra.mxu0 %v3337
        %4033 = vmatpush.bf16.msra.mxu0 %v3333
        %4034 = vmatpush.bf16.msra.mxu0 %v3329
        %4035 = vmatpush.bf16.msra.mxu0 %v3325
        %4036 = vmatpush.bf16.msra.mxu0 %v3321
        %4037 = vmatpush.bf16.msra.mxu0 %v3317
        %4038 = vmatpush.bf16.msra.mxu0 %v3313
        %4039 = vmatmul.bf16.gmra.mxu0 %v2527
        %v4040 = vpop.f32.mrf.mxu0
        %v4041 = vadd.f32 0.0, %v4040
        %v4042 = vpop.f32.mrf.mxu0
        %4043 = vdwg.mxu0
        %4044 = vmatpush.bf16.msra.mxu0 %v3373
        %4045 = vmatpush.bf16.msra.mxu0 %v3369
        %4046 = vmatpush.bf16.msra.mxu0 %v3365
        %4047 = vmatpush.bf16.msra.mxu0 %v3361
        %4048 = vmatpush.bf16.msra.mxu0 %v3357
        %4049 = vmatpush.bf16.msra.mxu0 %v3353
        %4050 = vmatpush.bf16.msra.mxu0 %v3349
        %4051 = vmatpush.bf16.msra.mxu0 %v3345
        %4052 = vmatmul.bf16.gmra.mxu0 %v2528
        %v4053 = vpop.f32.mrf.mxu0
        %v4054 = vadd.f32 %v4041, %v4053
        %v4055 = vpop.f32.mrf.mxu0
        %4056 = vdwg.mxu0
        %4057 = vmatpush.bf16.msra.mxu0 %v3405
        %4058 = vmatpush.bf16.msra.mxu0 %v3401
        %4059 = vmatpush.bf16.msra.mxu0 %v3397
        %4060 = vmatpush.bf16.msra.mxu0 %v3393
        %4061 = vmatpush.bf16.msra.mxu0 %v3389
        %4062 = vmatpush.bf16.msra.mxu0 %v3385
        %4063 = vmatpush.bf16.msra.mxu0 %v3381
        %4064 = vmatpush.bf16.msra.mxu0 %v3377
        %4065 = vmatmul.bf16.gmra.mxu0 %v2529
        %v4066 = vpop.f32.mrf.mxu0
        %v4067 = vadd.f32 %v4054, %v4066
        %v4068 = vpop.f32.mrf.mxu0
        %4069 = vdwg.mxu0
        %4070 = vmatpush.bf16.msra.mxu0 %v3437
        %4071 = vmatpush.bf16.msra.mxu0 %v3433
        %4072 = vmatpush.bf16.msra.mxu0 %v3429
        %4073 = vmatpush.bf16.msra.mxu0 %v3425
        %4074 = vmatpush.bf16.msra.mxu0 %v3421
        %4075 = vmatpush.bf16.msra.mxu0 %v3417
        %4076 = vmatpush.bf16.msra.mxu0 %v3413
        %4077 = vmatpush.bf16.msra.mxu0 %v3409
        %4078 = vmatmul.bf16.gmra.mxu0 %v2530
        %v4079 = vpop.f32.mrf.mxu0
        %v4080 = vadd.f32 %v4067, %v4079
        %v4081 = vpop.f32.mrf.mxu0
        %4082 = vdwg.mxu0
        %4083 = vmatpush.bf16.msra.mxu0 %v3469
        %4084 = vmatpush.bf16.msra.mxu0 %v3465
        %4085 = vmatpush.bf16.msra.mxu0 %v3461
        %4086 = vmatpush.bf16.msra.mxu0 %v3457
        %4087 = vmatpush.bf16.msra.mxu0 %v3453
        %4088 = vmatpush.bf16.msra.mxu0 %v3449
        %4089 = vmatpush.bf16.msra.mxu0 %v3445
        %4090 = vmatpush.bf16.msra.mxu0 %v3441
        %4091 = vmatmul.bf16.gmra.mxu0 %v2531
        %v4092 = vpop.f32.mrf.mxu0
        %v4093 = vadd.f32 %v4080, %v4092
        %v4094 = vpop.f32.mrf.mxu0
        %4095 = vdwg.mxu0
        %4096 = vmatpush.bf16.msra.mxu0 %v3501
        %4097 = vmatpush.bf16.msra.mxu0 %v3497
        %4098 = vmatpush.bf16.msra.mxu0 %v3493
        %4099 = vmatpush.bf16.msra.mxu0 %v3489
        %4100 = vmatpush.bf16.msra.mxu0 %v3485
        %4101 = vmatpush.bf16.msra.mxu0 %v3481
        %4102 = vmatpush.bf16.msra.mxu0 %v3477
        %4103 = vmatpush.bf16.msra.mxu0 %v3473
        %4104 = vmatmul.bf16.gmra.mxu0 %v2532
        %v4105 = vpop.f32.mrf.mxu0
        %v4106 = vadd.f32 %v4093, %v4105
        %v4107 = vpop.f32.mrf.mxu0
        %4108 = vdwg.mxu0
        %4109 = vmatpush.bf16.msra.mxu0 %v3533
        %4110 = vmatpush.bf16.msra.mxu0 %v3529
        %4111 = vmatpush.bf16.msra.mxu0 %v3525
        %4112 = vmatpush.bf16.msra.mxu0 %v3521
        %4113 = vmatpush.bf16.msra.mxu0 %v3517
        %4114 = vmatpush.bf16.msra.mxu0 %v3513
        %4115 = vmatpush.bf16.msra.mxu0 %v3509
        %4116 = vmatpush.bf16.msra.mxu0 %v3505
        %4117 = vmatmul.bf16.gmra.mxu0 %v2533
        %v4118 = vpop.f32.mrf.mxu0
        %v4119 = vadd.f32 %v4106, %v4118
        %v4120 = vpop.f32.mrf.mxu0
        %4121 = vdwg.mxu0
        %4122 = vmatpush.bf16.msra.mxu0 %v3565
        %4123 = vmatpush.bf16.msra.mxu0 %v3561
        %4124 = vmatpush.bf16.msra.mxu0 %v3557
        %4125 = vmatpush.bf16.msra.mxu0 %v3553
        %4126 = vmatpush.bf16.msra.mxu0 %v3549
        %4127 = vmatpush.bf16.msra.mxu0 %v3545
        %4128 = vmatpush.bf16.msra.mxu0 %v3541
        %4129 = vmatpush.bf16.msra.mxu0 %v3537
        %4130 = vmatmul.bf16.gmra.mxu0 %v2534
        %v4131 = vpop.f32.mrf.mxu0
        %v4132 = vadd.f32 %v4119, %v4131
        %v4133 = vpop.f32.mrf.mxu0
        %4134 = vdwg.mxu0
        %4135 = vmatpush.bf16.msra.mxu0 %v3342
        %4136 = vmatpush.bf16.msra.mxu0 %v3338
        %4137 = vmatpush.bf16.msra.mxu0 %v3334
        %4138 = vmatpush.bf16.msra.mxu0 %v3330
        %4139 = vmatpush.bf16.msra.mxu0 %v3326
        %4140 = vmatpush.bf16.msra.mxu0 %v3322
        %4141 = vmatpush.bf16.msra.mxu0 %v3318
        %4142 = vmatpush.bf16.msra.mxu0 %v3314
        %4143 = vmatmul.bf16.gmra.mxu0 %v2527
        %v4144 = vpop.f32.mrf.mxu0
        %v4145 = vadd.f32 0.0, %v4144
        %v4146 = vpop.f32.mrf.mxu0
        %4147 = vdwg.mxu0
        %4148 = vmatpush.bf16.msra.mxu0 %v3374
        %4149 = vmatpush.bf16.msra.mxu0 %v3370
        %4150 = vmatpush.bf16.msra.mxu0 %v3366
        %4151 = vmatpush.bf16.msra.mxu0 %v3362
        %4152 = vmatpush.bf16.msra.mxu0 %v3358
        %4153 = vmatpush.bf16.msra.mxu0 %v3354
        %4154 = vmatpush.bf16.msra.mxu0 %v3350
        %4155 = vmatpush.bf16.msra.mxu0 %v3346
        %4156 = vmatmul.bf16.gmra.mxu0 %v2528
        %v4157 = vpop.f32.mrf.mxu0
        %v4158 = vadd.f32 %v4145, %v4157
        %v4159 = vpop.f32.mrf.mxu0
        %4160 = vdwg.mxu0
        %4161 = vmatpush.bf16.msra.mxu0 %v3406
        %4162 = vmatpush.bf16.msra.mxu0 %v3402
        %4163 = vmatpush.bf16.msra.mxu0 %v3398
        %4164 = vmatpush.bf16.msra.mxu0 %v3394
        %4165 = vmatpush.bf16.msra.mxu0 %v3390
        %4166 = vmatpush.bf16.msra.mxu0 %v3386
        %4167 = vmatpush.bf16.msra.mxu0 %v3382
        %4168 = vmatpush.bf16.msra.mxu0 %v3378
        %4169 = vmatmul.bf16.gmra.mxu0 %v2529
        %v4170 = vpop.f32.mrf.mxu0
        %v4171 = vadd.f32 %v4158, %v4170
        %v4172 = vpop.f32.mrf.mxu0
        %4173 = vdwg.mxu0
        %4174 = vmatpush.bf16.msra.mxu0 %v3438
        %4175 = vmatpush.bf16.msra.mxu0 %v3434
        %4176 = vmatpush.bf16.msra.mxu0 %v3430
        %4177 = vmatpush.bf16.msra.mxu0 %v3426
        %4178 = vmatpush.bf16.msra.mxu0 %v3422
        %4179 = vmatpush.bf16.msra.mxu0 %v3418
        %4180 = vmatpush.bf16.msra.mxu0 %v3414
        %4181 = vmatpush.bf16.msra.mxu0 %v3410
        %4182 = vmatmul.bf16.gmra.mxu0 %v2530
        %v4183 = vpop.f32.mrf.mxu0
        %v4184 = vadd.f32 %v4171, %v4183
        %v4185 = vpop.f32.mrf.mxu0
        %4186 = vdwg.mxu0
        %4187 = vmatpush.bf16.msra.mxu0 %v3470
        %4188 = vmatpush.bf16.msra.mxu0 %v3466
        %4189 = vmatpush.bf16.msra.mxu0 %v3462
        %4190 = vmatpush.bf16.msra.mxu0 %v3458
        %4191 = vmatpush.bf16.msra.mxu0 %v3454
        %4192 = vmatpush.bf16.msra.mxu0 %v3450
        %4193 = vmatpush.bf16.msra.mxu0 %v3446
        %4194 = vmatpush.bf16.msra.mxu0 %v3442
        %4195 = vmatmul.bf16.gmra.mxu0 %v2531
        %v4196 = vpop.f32.mrf.mxu0
        %v4197 = vadd.f32 %v4184, %v4196
        %v4198 = vpop.f32.mrf.mxu0
        %4199 = vdwg.mxu0
        %4200 = vmatpush.bf16.msra.mxu0 %v3502
        %4201 = vmatpush.bf16.msra.mxu0 %v3498
        %4202 = vmatpush.bf16.msra.mxu0 %v3494
        %4203 = vmatpush.bf16.msra.mxu0 %v3490
        %4204 = vmatpush.bf16.msra.mxu0 %v3486
        %4205 = vmatpush.bf16.msra.mxu0 %v3482
        %4206 = vmatpush.bf16.msra.mxu0 %v3478
        %4207 = vmatpush.bf16.msra.mxu0 %v3474
        %4208 = vmatmul.bf16.gmra.mxu0 %v2532
        %v4209 = vpop.f32.mrf.mxu0
        %v4210 = vadd.f32 %v4197, %v4209
        %v4211 = vpop.f32.mrf.mxu0
        %4212 = vdwg.mxu0
        %4213 = vmatpush.bf16.msra.mxu0 %v3534
        %4214 = vmatpush.bf16.msra.mxu0 %v3530
        %4215 = vmatpush.bf16.msra.mxu0 %v3526
        %4216 = vmatpush.bf16.msra.mxu0 %v3522
        %4217 = vmatpush.bf16.msra.mxu0 %v3518
        %4218 = vmatpush.bf16.msra.mxu0 %v3514
        %4219 = vmatpush.bf16.msra.mxu0 %v3510
        %4220 = vmatpush.bf16.msra.mxu0 %v3506
        %4221 = vmatmul.bf16.gmra.mxu0 %v2533
        %v4222 = vpop.f32.mrf.mxu0
        %v4223 = vadd.f32 %v4210, %v4222
        %v4224 = vpop.f32.mrf.mxu0
        %4225 = vdwg.mxu0
        %4226 = vmatpush.bf16.msra.mxu0 %v3566
        %4227 = vmatpush.bf16.msra.mxu0 %v3562
        %4228 = vmatpush.bf16.msra.mxu0 %v3558
        %4229 = vmatpush.bf16.msra.mxu0 %v3554
        %4230 = vmatpush.bf16.msra.mxu0 %v3550
        %4231 = vmatpush.bf16.msra.mxu0 %v3546
        %4232 = vmatpush.bf16.msra.mxu0 %v3542
        %4233 = vmatpush.bf16.msra.mxu0 %v3538
        %4234 = vmatmul.bf16.gmra.mxu0 %v2534
        %v4235 = vpop.f32.mrf.mxu0
        %v4236 = vadd.f32 %v4223, %v4235
        %v4237 = vpop.f32.mrf.mxu0
        %4238 = vdwg.mxu0
        %v4243 = vrot.slane %v4028, 6
        %v4244 = vrot.slane %v4132, 4
        %v4245 = vrot.slane %v4236, 2
        %vm4246 = vcmask 1041408
        %v4247 = vsel %vm4246, %v3924, %v4243
        %vm4248 = vcmask 1045508
        %v4249 = vsel %vm4248, %v4244, %v4245
        %vm4250 = vcmask 1043456
        %v4251 = vsel %vm4250, %v4247, %v4249
        %v4253 = vadd.f32 %v2265, %v4251
        %4254 = vst [vmem:[#allocation6] sm:$0xff] %v4253
        %p4255 = scmp.eq.s32.totalorder %s35, 3
        // Predicated region
        $region133: #{deep_wifi_cnn_forward.1} parent=75 // pred_check
          %p4256 = pneg %p4255
        $region134: #{deep_wifi_cnn_forward.1} parent=75 // pred_check_branch
          %4258 = sbr.rel (%p4256) target = $region136
        $region135: #{deep_wifi_cnn_forward.1} parent=75 // pred_region
          %v4259 = vld [vmem:[#allocation6] sm:$0xff]
          %v4260 = vld [vmem:[#allocation24] sm:$0xf]
          %v4262 = vperm.slane %v4260, 0
          %v4263 = vperm.slane %v4260, 1
          %v4264 = vperm.slane %v4260, 2
          %v4265 = vperm.slane %v4260, 3
          %v4266 = vrot.slane %v4263, 6
          %v4267 = vrot.slane %v4264, 4
          %v4268 = vrot.slane %v4265, 2
          %v4269 = vsel %vm4246, %v4262, %v4266
          %v4270 = vsel %vm4248, %v4267, %v4268
          %v4271 = vsel %vm4250, %v4269, %v4270
          %v4273 = vadd.f32 %v4259, %v4271
          %v4274 = vmax.f32 %v4273, 0.0
          %4276 = vst [vmem:[#allocation1] ss:$4 sm:$0xff] %v4274
          %v4277 = vld.sshfl [vmem:[#allocation1] sm:$0xff pattern:$0x73625140]
          %v4278 = vld.sshfl [vmem:[#allocation1 + $0x8] sm:$0xff pattern:$0x73625140]
          %v4279 = vld.sshfl [vmem:[#allocation1 + $0x10] sm:$0xff pattern:$0x73625140]
          %v4280 = vld.sshfl [vmem:[#allocation1 + $0x18] sm:$0xff pattern:$0x73625140]
          %v4285 = vpack.c.bf16 %v4277, %v4277
          %v4286 = vpack.c.bf16 %v4278, %v4278
          %v4287 = vpack.c.bf16 %v4279, %v4279
          %v4288 = vpack.c.bf16 %v4280, %v4280
          %v4289 = vld [vmem:[#allocation25] sm:$0xf]
          %v4290 = vld [vmem:[#allocation25 + $0x4] sm:$0xf]
          %v4291 = vld [vmem:[#allocation25 + $0x8] sm:$0xf]
          %v4292 = vld [vmem:[#allocation25 + $0xc] sm:$0xf]
          %v4293 = vld [vmem:[#allocation25 + $0x10] sm:$0xf]
          %v4294 = vld [vmem:[#allocation25 + $0x14] sm:$0xf]
          %v4295 = vld [vmem:[#allocation25 + $0x18] sm:$0xf]
          %v4296 = vld [vmem:[#allocation25 + $0x1c] sm:$0xf]
          %v4297 = vld [vmem:[#allocation25 + $0x20] sm:$0xf]
          %v4298 = vld [vmem:[#allocation25 + $0x24] sm:$0xf]
          %v4299 = vld [vmem:[#allocation25 + $0x28] sm:$0xf]
          %v4300 = vld [vmem:[#allocation25 + $0x2c] sm:$0xf]
          %v4301 = vld [vmem:[#allocation25 + $0x30] sm:$0xf]
          %v4302 = vld [vmem:[#allocation25 + $0x34] sm:$0xf]
          %v4303 = vld [vmem:[#allocation25 + $0x38] sm:$0xf]
          %v4304 = vld [vmem:[#allocation25 + $0x3c] sm:$0xf]
          %v4305 = vld [vmem:[#allocation25 + $0x40] sm:$0xf]
          %v4306 = vld [vmem:[#allocation25 + $0x44] sm:$0xf]
          %v4307 = vld [vmem:[#allocation25 + $0x48] sm:$0xf]
          %v4308 = vld [vmem:[#allocation25 + $0x4c] sm:$0xf]
          %v4309 = vld [vmem:[#allocation25 + $0x50] sm:$0xf]
          %v4310 = vld [vmem:[#allocation25 + $0x54] sm:$0xf]
          %v4311 = vld [vmem:[#allocation25 + $0x58] sm:$0xf]
          %v4312 = vld [vmem:[#allocation25 + $0x5c] sm:$0xf]
          %v4313 = vld [vmem:[#allocation25 + $0x60] sm:$0xf]
          %v4314 = vld [vmem:[#allocation25 + $0x64] sm:$0xf]
          %v4315 = vld [vmem:[#allocation25 + $0x68] sm:$0xf]
          %v4316 = vld [vmem:[#allocation25 + $0x6c] sm:$0xf]
          %v4317 = vld [vmem:[#allocation25 + $0x70] sm:$0xf]
          %v4318 = vld [vmem:[#allocation25 + $0x74] sm:$0xf]
          %v4319 = vld [vmem:[#allocation25 + $0x78] sm:$0xf]
          %v4320 = vld [vmem:[#allocation25 + $0x7c] sm:$0xf]
          %v4321 = vld [vmem:[#allocation25 + $0x80] sm:$0xf]
          %v4322 = vld [vmem:[#allocation25 + $0x84] sm:$0xf]
          %v4323 = vld [vmem:[#allocation25 + $0x88] sm:$0xf]
          %v4324 = vld [vmem:[#allocation25 + $0x8c] sm:$0xf]
          %v4325 = vld [vmem:[#allocation25 + $0x90] sm:$0xf]
          %v4326 = vld [vmem:[#allocation25 + $0x94] sm:$0xf]
          %v4327 = vld [vmem:[#allocation25 + $0x98] sm:$0xf]
          %v4328 = vld [vmem:[#allocation25 + $0x9c] sm:$0xf]
          %v4329 = vld [vmem:[#allocation25 + $0xa0] sm:$0xf]
          %v4330 = vld [vmem:[#allocation25 + $0xa4] sm:$0xf]
          %v4331 = vld [vmem:[#allocation25 + $0xa8] sm:$0xf]
          %v4332 = vld [vmem:[#allocation25 + $0xac] sm:$0xf]
          %v4333 = vld [vmem:[#allocation25 + $0xb0] sm:$0xf]
          %v4334 = vld [vmem:[#allocation25 + $0xb4] sm:$0xf]
          %v4335 = vld [vmem:[#allocation25 + $0xb8] sm:$0xf]
          %v4336 = vld [vmem:[#allocation25 + $0xbc] sm:$0xf]
          %v4337 = vld [vmem:[#allocation25 + $0xc0] sm:$0xf]
          %v4338 = vld [vmem:[#allocation25 + $0xc4] sm:$0xf]
          %v4339 = vld [vmem:[#allocation25 + $0xc8] sm:$0xf]
          %v4340 = vld [vmem:[#allocation25 + $0xcc] sm:$0xf]
          %v4341 = vld [vmem:[#allocation25 + $0xd0] sm:$0xf]
          %v4342 = vld [vmem:[#allocation25 + $0xd4] sm:$0xf]
          %v4343 = vld [vmem:[#allocation25 + $0xd8] sm:$0xf]
          %v4344 = vld [vmem:[#allocation25 + $0xdc] sm:$0xf]
          %v4345 = vld [vmem:[#allocation25 + $0xe0] sm:$0xf]
          %v4346 = vld [vmem:[#allocation25 + $0xe4] sm:$0xf]
          %v4347 = vld [vmem:[#allocation25 + $0xe8] sm:$0xf]
          %v4348 = vld [vmem:[#allocation25 + $0xec] sm:$0xf]
          %v4349 = vld [vmem:[#allocation25 + $0xf0] sm:$0xf]
          %v4350 = vld [vmem:[#allocation25 + $0xf4] sm:$0xf]
          %v4351 = vld [vmem:[#allocation25 + $0xf8] sm:$0xf]
          %v4352 = vld [vmem:[#allocation25 + $0xfc] sm:$0xf]
          %v4353 = vld [vmem:[#allocation27] sm:$0x1]
          %v4355 = vperm.slane %v4353, 0
          %v4421 = vunpack.c.l.b16 %v4289
          %v4422 = vunpack.c.l.b16 %v4290
          %v4423 = vunpack.c.l.b16 %v4291
          %v4424 = vunpack.c.l.b16 %v4292
          %v4425 = vunpack.c.l.b16 %v4293
          %v4426 = vunpack.c.l.b16 %v4294
          %v4427 = vunpack.c.l.b16 %v4295
          %v4428 = vunpack.c.l.b16 %v4296
          %v4429 = vunpack.c.l.b16 %v4297
          %v4430 = vunpack.c.l.b16 %v4298
          %v4431 = vunpack.c.l.b16 %v4299
          %v4432 = vunpack.c.l.b16 %v4300
          %v4433 = vunpack.c.l.b16 %v4301
          %v4434 = vunpack.c.l.b16 %v4302
          %v4435 = vunpack.c.l.b16 %v4303
          %v4436 = vunpack.c.l.b16 %v4304
          %v4437 = vunpack.c.l.b16 %v4305
          %v4438 = vunpack.c.l.b16 %v4306
          %v4439 = vunpack.c.l.b16 %v4307
          %v4440 = vunpack.c.l.b16 %v4308
          %v4441 = vunpack.c.l.b16 %v4309
          %v4442 = vunpack.c.l.b16 %v4310
          %v4443 = vunpack.c.l.b16 %v4311
          %v4444 = vunpack.c.l.b16 %v4312
          %v4445 = vunpack.c.l.b16 %v4313
          %v4446 = vunpack.c.l.b16 %v4314
          %v4447 = vunpack.c.l.b16 %v4315
          %v4448 = vunpack.c.l.b16 %v4316
          %v4449 = vunpack.c.l.b16 %v4317
          %v4450 = vunpack.c.l.b16 %v4318
          %v4451 = vunpack.c.l.b16 %v4319
          %v4452 = vunpack.c.l.b16 %v4320
          %v4453 = vunpack.c.l.b16 %v4321
          %v4454 = vunpack.c.l.b16 %v4322
          %v4455 = vunpack.c.l.b16 %v4323
          %v4456 = vunpack.c.l.b16 %v4324
          %v4457 = vunpack.c.l.b16 %v4325
          %v4458 = vunpack.c.l.b16 %v4326
          %v4459 = vunpack.c.l.b16 %v4327
          %v4460 = vunpack.c.l.b16 %v4328
          %v4461 = vunpack.c.l.b16 %v4329
          %v4462 = vunpack.c.l.b16 %v4330
          %v4463 = vunpack.c.l.b16 %v4331
          %v4464 = vunpack.c.l.b16 %v4332
          %v4465 = vunpack.c.l.b16 %v4333
          %v4466 = vunpack.c.l.b16 %v4334
          %v4467 = vunpack.c.l.b16 %v4335
          %v4468 = vunpack.c.l.b16 %v4336
          %v4469 = vunpack.c.l.b16 %v4337
          %v4470 = vunpack.c.l.b16 %v4338
          %v4471 = vunpack.c.l.b16 %v4339
          %v4472 = vunpack.c.l.b16 %v4340
          %v4473 = vunpack.c.l.b16 %v4341
          %v4474 = vunpack.c.l.b16 %v4342
          %v4475 = vunpack.c.l.b16 %v4343
          %v4476 = vunpack.c.l.b16 %v4344
          %v4477 = vunpack.c.l.b16 %v4345
          %v4478 = vunpack.c.l.b16 %v4346
          %v4479 = vunpack.c.l.b16 %v4347
          %v4480 = vunpack.c.l.b16 %v4348
          %v4481 = vunpack.c.l.b16 %v4349
          %v4482 = vunpack.c.l.b16 %v4350
          %v4483 = vunpack.c.l.b16 %v4351
          %v4484 = vunpack.c.l.b16 %v4352
          %v4485 = vpack.c.b16 %v4422, %v4421
          %v4486 = vpack.c.b16 %v4424, %v4423
          %v4487 = vpack.c.b16 %v4426, %v4425
          %v4488 = vpack.c.b16 %v4428, %v4427
          %v4489 = vpack.c.b16 %v4430, %v4429
          %v4490 = vpack.c.b16 %v4432, %v4431
          %v4491 = vpack.c.b16 %v4434, %v4433
          %v4492 = vpack.c.b16 %v4436, %v4435
          %v4493 = vpack.c.b16 %v4438, %v4437
          %v4494 = vpack.c.b16 %v4440, %v4439
          %v4495 = vpack.c.b16 %v4442, %v4441
          %v4496 = vpack.c.b16 %v4444, %v4443
          %v4497 = vpack.c.b16 %v4446, %v4445
          %v4498 = vpack.c.b16 %v4448, %v4447
          %v4499 = vpack.c.b16 %v4450, %v4449
          %v4500 = vpack.c.b16 %v4452, %v4451
          %v4501 = vpack.c.b16 %v4454, %v4453
          %v4502 = vpack.c.b16 %v4456, %v4455
          %v4503 = vpack.c.b16 %v4458, %v4457
          %v4504 = vpack.c.b16 %v4460, %v4459
          %v4505 = vpack.c.b16 %v4462, %v4461
          %v4506 = vpack.c.b16 %v4464, %v4463
          %v4507 = vpack.c.b16 %v4466, %v4465
          %v4508 = vpack.c.b16 %v4468, %v4467
          %v4509 = vpack.c.b16 %v4470, %v4469
          %v4510 = vpack.c.b16 %v4472, %v4471
          %v4511 = vpack.c.b16 %v4474, %v4473
          %v4512 = vpack.c.b16 %v4476, %v4475
          %v4513 = vpack.c.b16 %v4478, %v4477
          %v4514 = vpack.c.b16 %v4480, %v4479
          %v4515 = vpack.c.b16 %v4482, %v4481
          %v4516 = vpack.c.b16 %v4484, %v4483
          %4549 = vmatpush.bf16.msra.mxu0 %v4492
          %4550 = vmatpush.bf16.msra.mxu0 %v4491
          %4551 = vmatpush.bf16.msra.mxu0 %v4490
          %4552 = vmatpush.bf16.msra.mxu0 %v4489
          %4553 = vmatpush.bf16.msra.mxu0 %v4488
          %4554 = vmatpush.bf16.msra.mxu0 %v4487
          %4555 = vmatpush.bf16.msra.mxu0 %v4486
          %4556 = vmatpush.bf16.msra.mxu0 %v4485
          %4557 = vmatmul.bf16.gmra.mxu0 %v4285
          %v4558 = vpop.f32.mrf.mxu0
          %v4559 = vadd.f32 %v4355, %v4558
          %v4560 = vpop.f32.mrf.mxu0
          %4561 = vdwg.mxu0
          %4562 = vmatpush.bf16.msra.mxu0 %v4500
          %4563 = vmatpush.bf16.msra.mxu0 %v4499
          %4564 = vmatpush.bf16.msra.mxu0 %v4498
          %4565 = vmatpush.bf16.msra.mxu0 %v4497
          %4566 = vmatpush.bf16.msra.mxu0 %v4496
          %4567 = vmatpush.bf16.msra.mxu0 %v4495
          %4568 = vmatpush.bf16.msra.mxu0 %v4494
          %4569 = vmatpush.bf16.msra.mxu0 %v4493
          %4570 = vmatmul.bf16.gmra.mxu0 %v4286
          %v4571 = vpop.f32.mrf.mxu0
          %v4572 = vadd.f32 %v4559, %v4571
          %v4573 = vpop.f32.mrf.mxu0
          %4574 = vdwg.mxu0
          %4575 = vmatpush.bf16.msra.mxu0 %v4508
          %4576 = vmatpush.bf16.msra.mxu0 %v4507
          %4577 = vmatpush.bf16.msra.mxu0 %v4506
          %4578 = vmatpush.bf16.msra.mxu0 %v4505
          %4579 = vmatpush.bf16.msra.mxu0 %v4504
          %4580 = vmatpush.bf16.msra.mxu0 %v4503
          %4581 = vmatpush.bf16.msra.mxu0 %v4502
          %4582 = vmatpush.bf16.msra.mxu0 %v4501
          %4583 = vmatmul.bf16.gmra.mxu0 %v4287
          %v4584 = vpop.f32.mrf.mxu0
          %v4585 = vadd.f32 %v4572, %v4584
          %v4586 = vpop.f32.mrf.mxu0
          %4587 = vdwg.mxu0
          %4588 = vmatpush.bf16.msra.mxu0 %v4516
          %4589 = vmatpush.bf16.msra.mxu0 %v4515
          %4590 = vmatpush.bf16.msra.mxu0 %v4514
          %4591 = vmatpush.bf16.msra.mxu0 %v4513
          %4592 = vmatpush.bf16.msra.mxu0 %v4512
          %4593 = vmatpush.bf16.msra.mxu0 %v4511
          %4594 = vmatpush.bf16.msra.mxu0 %v4510
          %4595 = vmatpush.bf16.msra.mxu0 %v4509
          %4596 = vmatmul.bf16.gmra.mxu0 %v4288
          %v4597 = vpop.f32.mrf.mxu0
          %v4598 = vadd.f32 %v4585, %v4597
          %v4599 = vpop.f32.mrf.mxu0
          %4600 = vdwg.mxu0
          %4601 = vst [vmem:[#allocation28] sm:$0x3] %v4598
        $region136: #{deep_wifi_cnn_forward.1} parent=75 // pred_fallthru
          _
        // Predicated region
        $region137: #{deep_wifi_cnn_forward.1} parent=75 // pred_check
          %p4602 = pneg %p347
        $region138: #{deep_wifi_cnn_forward.1} parent=75 // pred_check_branch
          %4604 = sbr.rel (%p4602) target = $region140
        $region139: #{deep_wifi_cnn_forward.1} parent=75 // pred_region
          %4606 = vsyncadd [#allocation9], 0
          %s4608 = sshll.u32 [#allocation28], 4
          %s4609 = int_to_ptr.vmem [resolvable:$true] %s4608
          %s4610 = sshll.u32 %s14, 4
          %s4611 = int_to_ptr.hbm [resolvable:$true] %s4610
          %4613 = dma.vmem_to_hbm [thread:$0]  %s4609, 32, %s4611, [#allocation9]
        $region140: #{deep_wifi_cnn_forward.1} parent=75 // pred_fallthru
          _
        // Predicated region
        $region141: #{deep_wifi_cnn_forward.1} parent=75 // pred_check
          %p4614 = pneg %p347
        $region142: #{deep_wifi_cnn_forward.1} parent=75 // pred_check_branch
          %4616 = sbr.rel (%p4614) target = $region144
        $region143: #{deep_wifi_cnn_forward.1} parent=75 // pred_region
          %4618 = dma.done [#allocation9], 32
        $region144: #{deep_wifi_cnn_forward.1} parent=75 // pred_fallthru
          _
      $region76: #{deep_wifi_cnn_forward.1} parent=5 // pred_fallthru
        _
      %p4619 = scmp.le.s32.totalorder 2, %s30
      // Predicated region
      $region145: #{deep_wifi_cnn_forward.1} parent=5 // pred_check
        %p4620 = pneg %p4619
      $region146: #{deep_wifi_cnn_forward.1} parent=5 // pred_check_branch
        %4622 = sbr.rel (%p4620) target = $region148
      $region147: #{deep_wifi_cnn_forward.1} parent=5 // pred_region
        %s4623 = ssub.s32 %s30, 2
      $region148: #{deep_wifi_cnn_forward.1} parent=5 // pred_fallthru
        _
    $region6: #{deep_wifi_cnn_forward.1} parent=1 // loop_footer
      %s34 = sadd.s32 1, %s30
    $region7: #{deep_wifi_cnn_forward.1} parent=1 // loop_footer_branch
      %29 = sbr.rel target = $region3
    $region8: #{deep_wifi_cnn_forward.1} parent=1 // loop_exit
      _
    %4624 = vsyncpa [#allocation8], 1
    %s4625 = scalar_lea.sflag [#allocation8], 1
    %4626 = vsyncpa %s4625, 1
    %4627 = vsyncpa [#allocation11], 1
    %4628 = vsyncpa [#allocation14], 1
    %4629 = vsyncpa [#allocation17], 1
    %4630 = vsyncpa [#allocation20], 1
    %4631 = vsyncpa [#allocation23], 1
    %s4632 = scalar_lea.sflag [#allocation23], 1
    %4633 = vsyncpa %s4632, 1
    %4634 = vsyncpa [#allocation26], 1
    %4635 = vsyncpa [#allocation9], 1
    %s4636 = scalar_lea.sflag [#allocation9], 1
    %4637 = vsyncpa %s4636, 1

</llo_original>
